<compile_context>
chip_gen: v5e
topology: v5e:2x2
jax: 0.10.0
libtpu: 0.0.40
codegen_flags: <defaults>
</compile_context>

<pallas_src>
import functools
import math

import jax
import jax.numpy as jnp
from jax.experimental import pallas as pl
from jax.experimental.pallas import tpu as pltpu


def _clip_layer_kernel(x_ref,
                       ln1_w_ref, ln1_b_ref,
                       w_qkv_ref, b_qkv_ref,
                       w_o_ref, b_o_ref,
                       ln2_w_ref, ln2_b_ref,
                       w_fc1_ref, b_fc1_ref, w_fc2_ref, b_fc2_ref,
                       o_ref,
                       attn_scr,
                       *, n_head: int, eps: float, compute_dtype):
    Bblk, T, E = x_ref.shape
    M = Bblk * T
    Dh = E // n_head
    scale = 1.0 / math.sqrt(Dh)
    approx = compute_dtype != jnp.float32

    x = x_ref[...].astype(jnp.float32).reshape(M, E)          # (M, E)

    # ---- LayerNorm 1 (f32) ----
    mu = jnp.mean(x, axis=-1, keepdims=True)
    var = jnp.mean(jnp.square(x - mu), axis=-1, keepdims=True)
    h = (x - mu) * jax.lax.rsqrt(var + eps)
    h = h * ln1_w_ref[...] + ln1_b_ref[...]                   # (1, E) broadcasts

    # ---- fused QKV projection: one (M,E)@(E,3E) MXU pass ----
    qkv = jnp.dot(h.astype(compute_dtype), w_qkv_ref[...],
                  preferred_element_type=jnp.float32) + b_qkv_ref[...]
    qkv = qkv.astype(compute_dtype)                           # matmul operands

    # Causal mask for one (padded) sequence.  Padded key columns live at
    # indices >= the last valid row, so `col <= row` already excludes them for
    # every valid query row; padded query rows are discarded in the wrapper.
    row = jax.lax.broadcasted_iota(jnp.int32, (T, T), 0)
    col = jax.lax.broadcasted_iota(jnp.int32, (T, T), 1)
    causal = col <= row

    # ---- attention core: per (sequence, head) softmax(QK^T)V ----
    # Head outputs go lane-contiguously into a (M,E) scratch so the output
    # projection below is a single full-depth matmul.
    # TODO(synk): for n_head >= 12 switch to lax.fori_loop(unroll=2) over heads
    # to bound vreg live ranges (static unroll is fine at small head counts).
    for bb in range(Bblk):
        r0 = bb * T
        for hh in range(n_head):
            c0 = hh * Dh
            q = qkv[r0:r0 + T, c0:c0 + Dh]
            k = qkv[r0:r0 + T, E + c0:E + c0 + Dh]
            v = qkv[r0:r0 + T, 2 * E + c0:2 * E + c0 + Dh]
            s = jax.lax.dot_general(q, k, (((1,), (1,)), ((), ())),
                                    preferred_element_type=jnp.float32) * scale
            s = jnp.where(causal, s, jnp.float32(-1e30))
            m = jnp.max(s, axis=-1, keepdims=True)
            e = jnp.exp(s - m)
            denom = jnp.sum(e, axis=-1, keepdims=True)
            if approx:
                p = e * pl.reciprocal(denom, approx=True)     # EUP slot
            else:
                p = e / denom
            o_h = jnp.dot(p.astype(compute_dtype), v,
                          preferred_element_type=jnp.float32)  # (T, Dh)
            attn_scr[r0:r0 + T, c0:c0 + Dh] = o_h.astype(attn_scr.dtype)

    # ---- single full-depth output projection ----
    attn = jnp.dot(attn_scr[...], w_o_ref[...],
                   preferred_element_type=jnp.float32) + b_o_ref[...]

    x = x + attn                                              # residual 1

    # ---- LayerNorm 2 ----
    mu2 = jnp.mean(x, axis=-1, keepdims=True)
    var2 = jnp.mean(jnp.square(x - mu2), axis=-1, keepdims=True)
    h2 = (x - mu2) * jax.lax.rsqrt(var2 + eps)
    h2 = h2 * ln2_w_ref[...] + ln2_b_ref[...]

    # ---- MLP with QuickGELU ----
    y = jnp.dot(h2.astype(compute_dtype), w_fc1_ref[...],
                preferred_element_type=jnp.float32) + b_fc1_ref[...]
    sig_den = 1.0 + jnp.exp(-1.702 * y)
    if approx:
        y = y * pl.reciprocal(sig_den, approx=True)           # y * sigmoid(1.702 y)
    else:
        y = y / sig_den
    y = jnp.dot(y.astype(compute_dtype), w_fc2_ref[...],
                preferred_element_type=jnp.float32) + b_fc2_ref[...]

    o_ref[...] = (x + y).reshape(Bblk, T, E).astype(o_ref.dtype)   # residual 2


def _resident_spec(a):
    """Full-array block, constant index map, single-buffered (nothing to pipeline)."""
    n = a.ndim
    return pl.BlockSpec(a.shape, lambda *_: (0,) * n,
                        pipeline_mode=pl.Buffered(1))


def clip_layer(x, params, n_head, *, block_b=None, compute_dtype=jnp.bfloat16):
    """x: (B, T, E); params follow the PyTorch module (x @ W + b convention)."""
    B, T, E = x.shape
    (ln1_w, ln1_b, w_qkv, b_qkv, w_out, b_out,
     ln2_w, ln2_b, w_fc1, b_fc1, w_fc2, b_fc2) = params
    assert E % n_head == 0

    # Batch blocking: a few sequences per grid step (amortizes the ~0.35us step
    # overhead and raises matmul M) while keeping >= 2 grid steps so v7x's two
    # TensorCores both get work.
    if block_b is None:
        block_b = B
        for cand in (4, 2, 1):
            if B % cand == 0 and B // cand >= 2:
                block_b = cand
                break
    assert B % block_b == 0

    # Pad T to the sublane multiple of the compute dtype (8 f32 / 16 bf16).
    sub = 16 if jnp.dtype(compute_dtype).itemsize == 2 else 8
    T_pad = -(-T // sub) * sub
    x_p = x if T_pad == T else jnp.pad(x, ((0, 0), (0, T_pad - T), (0, 0)))

    row = lambda p: p.reshape(1, -1).astype(jnp.float32)
    cast_w = lambda w: w.astype(compute_dtype)     # bf16 MXU operands

    operands = (x_p,
                row(ln1_w), row(ln1_b),
                cast_w(w_qkv), row(b_qkv),
                cast_w(w_out), row(b_out),
                row(ln2_w), row(ln2_b),
                cast_w(w_fc1), row(b_fc1),
                cast_w(w_fc2), row(b_fc2))

    in_specs = [pl.BlockSpec((block_b, T_pad, E), lambda b: (b, 0, 0))]
    in_specs += [_resident_spec(a) for a in operands[1:]]

    M = block_b * T_pad
    kernel = functools.partial(_clip_layer_kernel, n_head=n_head, eps=1e-5,
                               compute_dtype=compute_dtype)

    # Explicit scoped-VMEM budget: single-buffered bf16 weights + double-buffered
    # activation blocks + scratch + intermediates, with headroom.  At real CLIP
    # sizes (E=768) the bf16 weights are ~15 MB, so no MLP slab-tiling is needed
    # even on v7x's 64 MiB VMEM.
    wbytes = sum(int(a.size) * a.dtype.itemsize for a in operands[1:])
    abytes = 2 * 2 * M * E * 4                      # x + out blocks, 2-deep
    sbytes = M * E * jnp.dtype(compute_dtype).itemsize
    ibytes = 2 * M * (3 * E + 4 * E) * 4            # qkv + MLP hidden headroom
    vmem_limit = int(max(32 << 20,
                         min(wbytes + abytes + sbytes + ibytes + (16 << 20),
                             112 << 20)))

    out = pl.pallas_call(
        kernel,
        out_shape=jax.ShapeDtypeStruct((B, T_pad, E), x.dtype),
        grid_spec=pltpu.PrefetchScalarGridSpec(
            num_scalar_prefetch=0,
            grid=(B // block_b,),
            in_specs=in_specs,
            out_specs=pl.BlockSpec((block_b, T_pad, E), lambda b: (b, 0, 0)),
            scratch_shapes=[pltpu.VMEM((M, E), compute_dtype)],
        ),
        compiler_params=pltpu.CompilerParams(
            dimension_semantics=("parallel",),      # v7x: split batch across TCs
            vmem_limit_bytes=vmem_limit),
    )(*operands)

    return out if T_pad == T else out[:, :T, :]


def _reference(x, params, n_head, eps=1e-5):
    """Pure-JAX f32 reference matching the PyTorch CLIPLayer forward."""
    (ln1_w, ln1_b, w_qkv, b_qkv, w_out, b_out,
     ln2_w, ln2_b, w_fc1, b_fc1, w_fc2, b_fc2) = params
    B, T, E = x.shape
    Dh = E // n_head

    def ln(z, w, b):
        mu = jnp.mean(z, -1, keepdims=True)
        var = jnp.mean((z - mu) ** 2, -1, keepdims=True)
        return (z - mu) / jnp.sqrt(var + eps) * w + b

    residue = x
    h = ln(x, ln1_w, ln1_b)
    qkv = h @ w_qkv + b_qkv
    q, k, v = jnp.split(qkv, 3, axis=-1)
    q = q.reshape(B, T, n_head, Dh).transpose(0, 2, 1, 3)
    k = k.reshape(B, T, n_head, Dh).transpose(0, 2, 1, 3)
    v = v.reshape(B, T, n_head, Dh).transpose(0, 2, 1, 3)
    s = jnp.einsum("bhqd,bhkd->bhqk", q, k) / jnp.sqrt(Dh)
    mask = jnp.tril(jnp.ones((T, T), dtype=bool))
    s = jnp.where(mask, s, -jnp.inf)
    p = jax.nn.softmax(s, axis=-1)
    a = jnp.einsum("bhqk,bhkd->bhqd", p, v).transpose(0, 2, 1, 3).reshape(B, T, E)
    a = a @ w_out + b_out
    x = residue + a

    residue = x
    h = ln(x, ln2_w, ln2_b)
    y = h @ w_fc1 + b_fc1
    y = y * jax.nn.sigmoid(1.702 * y)
    y = y @ w_fc2 + b_fc2
    return residue + y


if __name__ == "__main__":
    # Keep reference matmuls in full f32 so the tolerance checks are meaningful.
    jax.config.update("jax_default_matmul_precision", "highest")

    # Small shapes consistent with the module: CLIPLayer(n_head, n_embed) on (B, T, E).
    B, T, n_head, n_embed = 2, 8, 4, 32
    hidden = 4 * n_embed

    key = jax.random.PRNGKey(0)
    ks = jax.random.split(key, 13)

    x = jax.random.normal(ks[0], (B, T, n_embed), dtype=jnp.float32)

    ln1_w = 1.0 + 0.05 * jax.random.normal(ks[1], (n_embed,), dtype=jnp.float32)
    ln1_b = 0.05 * jax.random.normal(ks[2], (n_embed,), dtype=jnp.float32)
    w_qkv = jax.random.normal(ks[3], (n_embed, 3 * n_embed), dtype=jnp.float32) / jnp.sqrt(n_embed)
    b_qkv = 0.05 * jax.random.normal(ks[4], (3 * n_embed,), dtype=jnp.float32)
    w_out = jax.random.normal(ks[5], (n_embed, n_embed), dtype=jnp.float32) / jnp.sqrt(n_embed)
    b_out = 0.05 * jax.random.normal(ks[6], (n_embed,), dtype=jnp.float32)
    ln2_w = 1.0 + 0.05 * jax.random.normal(ks[7], (n_embed,), dtype=jnp.float32)
    ln2_b = 0.05 * jax.random.normal(ks[8], (n_embed,), dtype=jnp.float32)
    w_fc1 = jax.random.normal(ks[9], (n_embed, hidden), dtype=jnp.float32) / jnp.sqrt(n_embed)
    b_fc1 = 0.05 * jax.random.normal(ks[10], (hidden,), dtype=jnp.float32)
    w_fc2 = jax.random.normal(ks[11], (hidden, n_embed), dtype=jnp.float32) / jnp.sqrt(hidden)
    b_fc2 = 0.05 * jax.random.normal(ks[12], (n_embed,), dtype=jnp.float32)

    params = (ln1_w, ln1_b, w_qkv, b_qkv, w_out, b_out,
              ln2_w, ln2_b, w_fc1, b_fc1, w_fc2, b_fc2)

    ref = _reference(x, params, n_head)

    # 1) f32-compute path: tight semantic check against the pure-JAX reference.
    out_f32 = jax.block_until_ready(
        clip_layer(x, params, n_head, compute_dtype=jnp.float32))
    assert out_f32.shape == (B, T, n_embed)
    assert out_f32.dtype == jnp.float32
    assert jnp.allclose(out_f32, ref, atol=2e-3, rtol=2e-3), \
        f"f32 max abs diff {jnp.max(jnp.abs(out_f32 - ref))}"

    # 2) bf16-MXU path (default / fast): bf16 operands, f32 accumulation.
    out_bf16 = jax.block_until_ready(clip_layer(x, params, n_head))
    assert out_bf16.shape == (B, T, n_embed)
    assert out_bf16.dtype == jnp.float32
    assert jnp.allclose(out_bf16, ref, atol=1e-1, rtol=1e-1), \
        f"bf16 max abs diff {jnp.max(jnp.abs(out_bf16 - ref))}"

    print("KERNEL_OK")
</pallas_src>

<mosaic_0001>
module attributes {stable_mosaic.version = 11 : i64} {
  func.func @_clip_layer_kernel(%arg0: i32, %arg1: memref<1x8x32xf32, #tpu.memory_space<vmem>>, %arg2: memref<1x32xf32, #tpu.memory_space<vmem>>, %arg3: memref<1x32xf32, #tpu.memory_space<vmem>>, %arg4: memref<32x96xf32, #tpu.memory_space<vmem>>, %arg5: memref<1x96xf32, #tpu.memory_space<vmem>>, %arg6: memref<32x32xf32, #tpu.memory_space<vmem>>, %arg7: memref<1x32xf32, #tpu.memory_space<vmem>>, %arg8: memref<1x32xf32, #tpu.memory_space<vmem>>, %arg9: memref<1x32xf32, #tpu.memory_space<vmem>>, %arg10: memref<32x128xf32, #tpu.memory_space<vmem>>, %arg11: memref<1x128xf32, #tpu.memory_space<vmem>>, %arg12: memref<128x32xf32, #tpu.memory_space<vmem>>, %arg13: memref<1x32xf32, #tpu.memory_space<vmem>>, %arg14: memref<1x8x32xf32, #tpu.memory_space<vmem>>, %arg15: memref<8x32xf32, #tpu.memory_space<vmem>>) attributes {dimension_semantics = [#tpu.dimension_semantics<parallel>], iteration_bounds = array<i64: 2>, scalar_prefetch = 0 : i64, scratch_operands = 1 : i64, tpu.core_type = #tpu.core_type<tc>, window_params = [{transform_indices = @transform_0, window_bounds = array<i64: 1, 8, 32>}, {pipeline_mode = #tpu.pipeline_mode<synchronous>, transform_indices = @transform_1, window_bounds = array<i64: 1, 32>}, {pipeline_mode = #tpu.pipeline_mode<synchronous>, transform_indices = @transform_2, window_bounds = array<i64: 1, 32>}, {pipeline_mode = #tpu.pipeline_mode<synchronous>, transform_indices = @transform_3, window_bounds = array<i64: 32, 96>}, {pipeline_mode = #tpu.pipeline_mode<synchronous>, transform_indices = @transform_4, window_bounds = array<i64: 1, 96>}, {pipeline_mode = #tpu.pipeline_mode<synchronous>, transform_indices = @transform_5, window_bounds = array<i64: 32, 32>}, {pipeline_mode = #tpu.pipeline_mode<synchronous>, transform_indices = @transform_6, window_bounds = array<i64: 1, 32>}, {pipeline_mode = #tpu.pipeline_mode<synchronous>, transform_indices = @transform_7, window_bounds = array<i64: 1, 32>}, {pipeline_mode = #tpu.pipeline_mode<synchronous>, transform_indices = @transform_8, window_bounds = array<i64: 1, 32>}, {pipeline_mode = #tpu.pipeline_mode<synchronous>, transform_indices = @transform_9, window_bounds = array<i64: 32, 128>}, {pipeline_mode = #tpu.pipeline_mode<synchronous>, transform_indices = @transform_10, window_bounds = array<i64: 1, 128>}, {pipeline_mode = #tpu.pipeline_mode<synchronous>, transform_indices = @transform_11, window_bounds = array<i64: 128, 32>}, {pipeline_mode = #tpu.pipeline_mode<synchronous>, transform_indices = @transform_12, window_bounds = array<i64: 1, 32>}, {transform_indices = @transform_13, window_bounds = array<i64: 1, 8, 32>}]} {
    %c0 = arith.constant 0 : index
    %c0_0 = arith.constant 0 : index
    %c0_1 = arith.constant 0 : index
    %0 = vector.load %arg1[%c0, %c0_0, %c0_1] : memref<1x8x32xf32, #tpu.memory_space<vmem>>, vector<1x8x32xf32>
    %1 = vector.shape_cast %0 : vector<1x8x32xf32> to vector<8x32xf32>
    %cst = arith.constant dense<0.000000e+00> : vector<8xf32>
    %2 = vector.multi_reduction <add>, %1, %cst [1] : vector<8x32xf32> to vector<8xf32>
    %3 = vector.shape_cast %2 : vector<8xf32> to vector<8x1xf32>
    %cst_2 = arith.constant 3.200000e+01 : f32
    %4 = vector.broadcast %cst_2 : f32 to vector<8x1xf32>
    %5 = arith.divf %3, %4 : vector<8x1xf32>
    %6 = vector.broadcast %5 : vector<8x1xf32> to vector<8x32xf32>
    %7 = arith.subf %1, %6 : vector<8x32xf32>
    %8 = arith.mulf %7, %7 : vector<8x32xf32>
    %cst_3 = arith.constant dense<0.000000e+00> : vector<8xf32>
    %9 = vector.multi_reduction <add>, %8, %cst_3 [1] : vector<8x32xf32> to vector<8xf32>
    %10 = vector.shape_cast %9 : vector<8xf32> to vector<8x1xf32>
    %cst_4 = arith.constant 3.200000e+01 : f32
    %11 = vector.broadcast %cst_4 : f32 to vector<8x1xf32>
    %12 = arith.divf %10, %11 : vector<8x1xf32>
    %13 = vector.broadcast %5 : vector<8x1xf32> to vector<8x32xf32>
    %14 = arith.subf %1, %13 : vector<8x32xf32>
    %cst_5 = arith.constant 9.99999974E-6 : f32
    %15 = vector.broadcast %cst_5 : f32 to vector<8x1xf32>
    %16 = arith.addf %12, %15 : vector<8x1xf32>
    %17 = math.rsqrt %16 : vector<8x1xf32>
    %18 = vector.broadcast %17 : vector<8x1xf32> to vector<8x32xf32>
    %19 = arith.mulf %14, %18 : vector<8x32xf32>
    %c0_6 = arith.constant 0 : index
    %c0_7 = arith.constant 0 : index
    %20 = vector.load %arg2[%c0_6, %c0_7] : memref<1x32xf32, #tpu.memory_space<vmem>>, vector<1x32xf32>
    %21 = vector.broadcast %20 : vector<1x32xf32> to vector<8x32xf32>
    %22 = arith.mulf %19, %21 : vector<8x32xf32>
    %c0_8 = arith.constant 0 : index
    %c0_9 = arith.constant 0 : index
    %23 = vector.load %arg3[%c0_8, %c0_9] : memref<1x32xf32, #tpu.memory_space<vmem>>, vector<1x32xf32>
    %24 = vector.broadcast %23 : vector<1x32xf32> to vector<8x32xf32>
    %25 = arith.addf %22, %24 : vector<8x32xf32>
    %c0_10 = arith.constant 0 : index
    %c0_11 = arith.constant 0 : index
    %26 = vector.load %arg4[%c0_10, %c0_11] : memref<32x96xf32, #tpu.memory_space<vmem>>, vector<32x96xf32>
    %cst_12 = arith.constant dense<0.000000e+00> : vector<8x96xf32>
    %27 = tpu.matmul %25, %26, %cst_12 {dimension_numbers = #tpu.dot_dimension_numbers<[1], [0], [0], [1], [0, 0, 1, 1], [], []>, precision = #tpu.contract_precision<fp32>} : vector<8x32xf32>, vector<32x96xf32>, vector<8x96xf32> -> vector<8x96xf32>
    %c0_13 = arith.constant 0 : index
    %c0_14 = arith.constant 0 : index
    %28 = vector.load %arg5[%c0_13, %c0_14] : memref<1x96xf32, #tpu.memory_space<vmem>>, vector<1x96xf32>
    %29 = vector.broadcast %28 : vector<1x96xf32> to vector<8x96xf32>
    %30 = arith.addf %27, %29 : vector<8x96xf32>
    %31 = tpu.iota {dimensions = array<i32: 0>} : vector<8x8xi32>
    %32 = tpu.iota {dimensions = array<i32: 1>} : vector<8x8xi32>
    %33 = arith.cmpi sle, %32, %31 : vector<8x8xi32>
    %34 = vector.extract_strided_slice %30 {offsets = [0, 0], sizes = [8, 8], strides = [1, 1]} : vector<8x96xf32> to vector<8x8xf32>
    %35 = vector.extract_strided_slice %30 {offsets = [0, 32], sizes = [8, 8], strides = [1, 1]} : vector<8x96xf32> to vector<8x8xf32>
    %36 = vector.extract_strided_slice %30 {offsets = [0, 64], sizes = [8, 8], strides = [1, 1]} : vector<8x96xf32> to vector<8x8xf32>
    %cst_15 = arith.constant dense<0.000000e+00> : vector<8x8xf32>
    %37 = tpu.matmul %34, %35, %cst_15 {dimension_numbers = #tpu.dot_dimension_numbers<[1], [1], [0], [0], [0, 0, 1, 0], [], []>, precision = #tpu.contract_precision<fp32>} : vector<8x8xf32>, vector<8x8xf32>, vector<8x8xf32> -> vector<8x8xf32>
    %cst_16 = arith.constant 0.353553385 : f32
    %38 = vector.broadcast %cst_16 : f32 to vector<8x8xf32>
    %39 = arith.mulf %37, %38 : vector<8x8xf32>
    %cst_17 = arith.constant -1.000000e+30 : f32
    %40 = vector.broadcast %cst_17 : f32 to vector<8x8xf32>
    %41 = arith.select %33, %39, %40 : vector<8x8xi1>, vector<8x8xf32>
    %cst_18 = arith.constant dense<0xFF800000> : vector<8xf32>
    %42 = vector.multi_reduction <maximumf>, %41, %cst_18 [1] : vector<8x8xf32> to vector<8xf32>
    %43 = vector.shape_cast %42 : vector<8xf32> to vector<8x1xf32>
    %44 = vector.broadcast %43 : vector<8x1xf32> to vector<8x8xf32>
    %45 = arith.subf %41, %44 : vector<8x8xf32>
    %46 = math.exp %45 : vector<8x8xf32>
    %cst_19 = arith.constant dense<0.000000e+00> : vector<8xf32>
    %47 = vector.multi_reduction <add>, %46, %cst_19 [1] : vector<8x8xf32> to vector<8xf32>
    %48 = vector.shape_cast %47 : vector<8xf32> to vector<8x1xf32>
    %49 = vector.broadcast %48 : vector<8x1xf32> to vector<8x8xf32>
    %50 = arith.divf %46, %49 : vector<8x8xf32>
    %cst_20 = arith.constant dense<0.000000e+00> : vector<8x8xf32>
    %51 = tpu.matmul %50, %36, %cst_20 {dimension_numbers = #tpu.dot_dimension_numbers<[1], [0], [0], [1], [0, 0, 1, 1], [], []>, precision = #tpu.contract_precision<fp32>} : vector<8x8xf32>, vector<8x8xf32>, vector<8x8xf32> -> vector<8x8xf32>
    %c0_21 = arith.constant 0 : index
    %c0_22 = arith.constant 0 : index
    %52 = vector.load %arg15[%c0_21, %c0_22] : memref<8x32xf32, #tpu.memory_space<vmem>>, vector<8x8xf32>
    tpu.vector_store %arg15[%c0_21, %c0_22], %51 {strides = array<i32>} : memref<8x32xf32, #tpu.memory_space<vmem>>, vector<8x8xf32>,
    %53 = vector.extract_strided_slice %30 {offsets = [0, 8], sizes = [8, 8], strides = [1, 1]} : vector<8x96xf32> to vector<8x8xf32>
    %54 = vector.extract_strided_slice %30 {offsets = [0, 40], sizes = [8, 8], strides = [1, 1]} : vector<8x96xf32> to vector<8x8xf32>
    %55 = vector.extract_strided_slice %30 {offsets = [0, 72], sizes = [8, 8], strides = [1, 1]} : vector<8x96xf32> to vector<8x8xf32>
    %cst_23 = arith.constant dense<0.000000e+00> : vector<8x8xf32>
    %56 = tpu.matmul %53, %54, %cst_23 {dimension_numbers = #tpu.dot_dimension_numbers<[1], [1], [0], [0], [0, 0, 1, 0], [], []>, precision = #tpu.contract_precision<fp32>} : vector<8x8xf32>, vector<8x8xf32>, vector<8x8xf32> -> vector<8x8xf32>
    %cst_24 = arith.constant 0.353553385 : f32
    %57 = vector.broadcast %cst_24 : f32 to vector<8x8xf32>
    %58 = arith.mulf %56, %57 : vector<8x8xf32>
    %cst_25 = arith.constant -1.000000e+30 : f32
    %59 = vector.broadcast %cst_25 : f32 to vector<8x8xf32>
    %60 = arith.select %33, %58, %59 : vector<8x8xi1>, vector<8x8xf32>
    %cst_26 = arith.constant dense<0xFF800000> : vector<8xf32>
    %61 = vector.multi_reduction <maximumf>, %60, %cst_26 [1] : vector<8x8xf32> to vector<8xf32>
    %62 = vector.shape_cast %61 : vector<8xf32> to vector<8x1xf32>
    %63 = vector.broadcast %62 : vector<8x1xf32> to vector<8x8xf32>
    %64 = arith.subf %60, %63 : vector<8x8xf32>
    %65 = math.exp %64 : vector<8x8xf32>
    %cst_27 = arith.constant dense<0.000000e+00> : vector<8xf32>
    %66 = vector.multi_reduction <add>, %65, %cst_27 [1] : vector<8x8xf32> to vector<8xf32>
    %67 = vector.shape_cast %66 : vector<8xf32> to vector<8x1xf32>
    %68 = vector.broadcast %67 : vector<8x1xf32> to vector<8x8xf32>
    %69 = arith.divf %65, %68 : vector<8x8xf32>
    %cst_28 = arith.constant dense<0.000000e+00> : vector<8x8xf32>
    %70 = tpu.matmul %69, %55, %cst_28 {dimension_numbers = #tpu.dot_dimension_numbers<[1], [0], [0], [1], [0, 0, 1, 1], [], []>, precision = #tpu.contract_precision<fp32>} : vector<8x8xf32>, vector<8x8xf32>, vector<8x8xf32> -> vector<8x8xf32>
    %c0_29 = arith.constant 0 : index
    %c8 = arith.constant 8 : index
    %71 = vector.load %arg15[%c0_29, %c8] : memref<8x32xf32, #tpu.memory_space<vmem>>, vector<8x8xf32>
    tpu.vector_store %arg15[%c0_29, %c8], %70 {strides = array<i32>} : memref<8x32xf32, #tpu.memory_space<vmem>>, vector<8x8xf32>,
    %72 = vector.extract_strided_slice %30 {offsets = [0, 16], sizes = [8, 8], strides = [1, 1]} : vector<8x96xf32> to vector<8x8xf32>
    %73 = vector.extract_strided_slice %30 {offsets = [0, 48], sizes = [8, 8], strides = [1, 1]} : vector<8x96xf32> to vector<8x8xf32>
    %74 = vector.extract_strided_slice %30 {offsets = [0, 80], sizes = [8, 8], strides = [1, 1]} : vector<8x96xf32> to vector<8x8xf32>
    %cst_30 = arith.constant dense<0.000000e+00> : vector<8x8xf32>
    %75 = tpu.matmul %72, %73, %cst_30 {dimension_numbers = #tpu.dot_dimension_numbers<[1], [1], [0], [0], [0, 0, 1, 0], [], []>, precision = #tpu.contract_precision<fp32>} : vector<8x8xf32>, vector<8x8xf32>, vector<8x8xf32> -> vector<8x8xf32>
    %cst_31 = arith.constant 0.353553385 : f32
    %76 = vector.broadcast %cst_31 : f32 to vector<8x8xf32>
    %77 = arith.mulf %75, %76 : vector<8x8xf32>
    %cst_32 = arith.constant -1.000000e+30 : f32
    %78 = vector.broadcast %cst_32 : f32 to vector<8x8xf32>
    %79 = arith.select %33, %77, %78 : vector<8x8xi1>, vector<8x8xf32>
    %cst_33 = arith.constant dense<0xFF800000> : vector<8xf32>
    %80 = vector.multi_reduction <maximumf>, %79, %cst_33 [1] : vector<8x8xf32> to vector<8xf32>
    %81 = vector.shape_cast %80 : vector<8xf32> to vector<8x1xf32>
    %82 = vector.broadcast %81 : vector<8x1xf32> to vector<8x8xf32>
    %83 = arith.subf %79, %82 : vector<8x8xf32>
    %84 = math.exp %83 : vector<8x8xf32>
    %cst_34 = arith.constant dense<0.000000e+00> : vector<8xf32>
    %85 = vector.multi_reduction <add>, %84, %cst_34 [1] : vector<8x8xf32> to vector<8xf32>
    %86 = vector.shape_cast %85 : vector<8xf32> to vector<8x1xf32>
    %87 = vector.broadcast %86 : vector<8x1xf32> to vector<8x8xf32>
    %88 = arith.divf %84, %87 : vector<8x8xf32>
    %cst_35 = arith.constant dense<0.000000e+00> : vector<8x8xf32>
    %89 = tpu.matmul %88, %74, %cst_35 {dimension_numbers = #tpu.dot_dimension_numbers<[1], [0], [0], [1], [0, 0, 1, 1], [], []>, precision = #tpu.contract_precision<fp32>} : vector<8x8xf32>, vector<8x8xf32>, vector<8x8xf32> -> vector<8x8xf32>
    %c0_36 = arith.constant 0 : index
    %c16 = arith.constant 16 : index
    %90 = vector.load %arg15[%c0_36, %c16] : memref<8x32xf32, #tpu.memory_space<vmem>>, vector<8x8xf32>
    tpu.vector_store %arg15[%c0_36, %c16], %89 {strides = array<i32>} : memref<8x32xf32, #tpu.memory_space<vmem>>, vector<8x8xf32>,
    %91 = vector.extract_strided_slice %30 {offsets = [0, 24], sizes = [8, 8], strides = [1, 1]} : vector<8x96xf32> to vector<8x8xf32>
    %92 = vector.extract_strided_slice %30 {offsets = [0, 56], sizes = [8, 8], strides = [1, 1]} : vector<8x96xf32> to vector<8x8xf32>
    %93 = vector.extract_strided_slice %30 {offsets = [0, 88], sizes = [8, 8], strides = [1, 1]} : vector<8x96xf32> to vector<8x8xf32>
    %cst_37 = arith.constant dense<0.000000e+00> : vector<8x8xf32>
    %94 = tpu.matmul %91, %92, %cst_37 {dimension_numbers = #tpu.dot_dimension_numbers<[1], [1], [0], [0], [0, 0, 1, 0], [], []>, precision = #tpu.contract_precision<fp32>} : vector<8x8xf32>, vector<8x8xf32>, vector<8x8xf32> -> vector<8x8xf32>
    %cst_38 = arith.constant 0.353553385 : f32
    %95 = vector.broadcast %cst_38 : f32 to vector<8x8xf32>
    %96 = arith.mulf %94, %95 : vector<8x8xf32>
    %cst_39 = arith.constant -1.000000e+30 : f32
    %97 = vector.broadcast %cst_39 : f32 to vector<8x8xf32>
    %98 = arith.select %33, %96, %97 : vector<8x8xi1>, vector<8x8xf32>
    %cst_40 = arith.constant dense<0xFF800000> : vector<8xf32>
    %99 = vector.multi_reduction <maximumf>, %98, %cst_40 [1] : vector<8x8xf32> to vector<8xf32>
    %100 = vector.shape_cast %99 : vector<8xf32> to vector<8x1xf32>
    %101 = vector.broadcast %100 : vector<8x1xf32> to vector<8x8xf32>
    %102 = arith.subf %98, %101 : vector<8x8xf32>
    %103 = math.exp %102 : vector<8x8xf32>
    %cst_41 = arith.constant dense<0.000000e+00> : vector<8xf32>
    %104 = vector.multi_reduction <add>, %103, %cst_41 [1] : vector<8x8xf32> to vector<8xf32>
    %105 = vector.shape_cast %104 : vector<8xf32> to vector<8x1xf32>
    %106 = vector.broadcast %105 : vector<8x1xf32> to vector<8x8xf32>
    %107 = arith.divf %103, %106 : vector<8x8xf32>
    %cst_42 = arith.constant dense<0.000000e+00> : vector<8x8xf32>
    %108 = tpu.matmul %107, %93, %cst_42 {dimension_numbers = #tpu.dot_dimension_numbers<[1], [0], [0], [1], [0, 0, 1, 1], [], []>, precision = #tpu.contract_precision<fp32>} : vector<8x8xf32>, vector<8x8xf32>, vector<8x8xf32> -> vector<8x8xf32>
    %c0_43 = arith.constant 0 : index
    %c24 = arith.constant 24 : index
    %109 = vector.load %arg15[%c0_43, %c24] : memref<8x32xf32, #tpu.memory_space<vmem>>, vector<8x8xf32>
    tpu.vector_store %arg15[%c0_43, %c24], %108 {strides = array<i32>} : memref<8x32xf32, #tpu.memory_space<vmem>>, vector<8x8xf32>,
    %c0_44 = arith.constant 0 : index
    %c0_45 = arith.constant 0 : index
    %110 = vector.load %arg15[%c0_44, %c0_45] : memref<8x32xf32, #tpu.memory_space<vmem>>, vector<8x32xf32>
    %c0_46 = arith.constant 0 : index
    %c0_47 = arith.constant 0 : index
    %111 = vector.load %arg6[%c0_46, %c0_47] : memref<32x32xf32, #tpu.memory_space<vmem>>, vector<32x32xf32>
    %cst_48 = arith.constant dense<0.000000e+00> : vector<8x32xf32>
    %112 = tpu.matmul %110, %111, %cst_48 {dimension_numbers = #tpu.dot_dimension_numbers<[1], [0], [0], [1], [0, 0, 1, 1], [], []>, precision = #tpu.contract_precision<fp32>} : vector<8x32xf32>, vector<32x32xf32>, vector<8x32xf32> -> vector<8x32xf32>
    %c0_49 = arith.constant 0 : index
    %c0_50 = arith.constant 0 : index
    %113 = vector.load %arg7[%c0_49, %c0_50] : memref<1x32xf32, #tpu.memory_space<vmem>>, vector<1x32xf32>
    %114 = vector.broadcast %113 : vector<1x32xf32> to vector<8x32xf32>
    %115 = arith.addf %112, %114 : vector<8x32xf32>
    %116 = arith.addf %1, %115 : vector<8x32xf32>
    %cst_51 = arith.constant dense<0.000000e+00> : vector<8xf32>
    %117 = vector.multi_reduction <add>, %116, %cst_51 [1] : vector<8x32xf32> to vector<8xf32>
    %118 = vector.shape_cast %117 : vector<8xf32> to vector<8x1xf32>
    %cst_52 = arith.constant 3.200000e+01 : f32
    %119 = vector.broadcast %cst_52 : f32 to vector<8x1xf32>
    %120 = arith.divf %118, %119 : vector<8x1xf32>
    %121 = vector.broadcast %120 : vector<8x1xf32> to vector<8x32xf32>
    %122 = arith.subf %116, %121 : vector<8x32xf32>
    %123 = arith.mulf %122, %122 : vector<8x32xf32>
    %cst_53 = arith.constant dense<0.000000e+00> : vector<8xf32>
    %124 = vector.multi_reduction <add>, %123, %cst_53 [1] : vector<8x32xf32> to vector<8xf32>
    %125 = vector.shape_cast %124 : vector<8xf32> to vector<8x1xf32>
    %cst_54 = arith.constant 3.200000e+01 : f32
    %126 = vector.broadcast %cst_54 : f32 to vector<8x1xf32>
    %127 = arith.divf %125, %126 : vector<8x1xf32>
    %128 = vector.broadcast %120 : vector<8x1xf32> to vector<8x32xf32>
    %129 = arith.subf %116, %128 : vector<8x32xf32>
    %cst_55 = arith.constant 9.99999974E-6 : f32
    %130 = vector.broadcast %cst_55 : f32 to vector<8x1xf32>
    %131 = arith.addf %127, %130 : vector<8x1xf32>
    %132 = math.rsqrt %131 : vector<8x1xf32>
    %133 = vector.broadcast %132 : vector<8x1xf32> to vector<8x32xf32>
    %134 = arith.mulf %129, %133 : vector<8x32xf32>
    %c0_56 = arith.constant 0 : index
    %c0_57 = arith.constant 0 : index
    %135 = vector.load %arg8[%c0_56, %c0_57] : memref<1x32xf32, #tpu.memory_space<vmem>>, vector<1x32xf32>
    %136 = vector.broadcast %135 : vector<1x32xf32> to vector<8x32xf32>
    %137 = arith.mulf %134, %136 : vector<8x32xf32>
    %c0_58 = arith.constant 0 : index
    %c0_59 = arith.constant 0 : index
    %138 = vector.load %arg9[%c0_58, %c0_59] : memref<1x32xf32, #tpu.memory_space<vmem>>, vector<1x32xf32>
    %139 = vector.broadcast %138 : vector<1x32xf32> to vector<8x32xf32>
    %140 = arith.addf %137, %139 : vector<8x32xf32>
    %c0_60 = arith.constant 0 : index
    %c0_61 = arith.constant 0 : index
    %141 = vector.load %arg10[%c0_60, %c0_61] : memref<32x128xf32, #tpu.memory_space<vmem>>, vector<32x128xf32>
    %cst_62 = arith.constant dense<0.000000e+00> : vector<8x128xf32>
    %142 = tpu.matmul %140, %141, %cst_62 {dimension_numbers = #tpu.dot_dimension_numbers<[1], [0], [0], [1], [0, 0, 1, 1], [], []>, precision = #tpu.contract_precision<fp32>} : vector<8x32xf32>, vector<32x128xf32>, vector<8x128xf32> -> vector<8x128xf32>
    %c0_63 = arith.constant 0 : index
    %c0_64 = arith.constant 0 : index
    %143 = vector.load %arg11[%c0_63, %c0_64] : memref<1x128xf32, #tpu.memory_space<vmem>>, vector<1x128xf32>
    %144 = vector.broadcast %143 : vector<1x128xf32> to vector<8x128xf32>
    %145 = arith.addf %142, %144 : vector<8x128xf32>
    %cst_65 = arith.constant -1.702000e+00 : f32
    %146 = vector.broadcast %cst_65 : f32 to vector<8x128xf32>
    %147 = arith.mulf %146, %145 : vector<8x128xf32>
    %148 = math.exp %147 : vector<8x128xf32>
    %cst_66 = arith.constant 1.000000e+00 : f32
    %149 = vector.broadcast %cst_66 : f32 to vector<8x128xf32>
    %150 = arith.addf %149, %148 : vector<8x128xf32>
    %151 = arith.divf %145, %150 : vector<8x128xf32>
    %c0_67 = arith.constant 0 : index
    %c0_68 = arith.constant 0 : index
    %152 = vector.load %arg12[%c0_67, %c0_68] : memref<128x32xf32, #tpu.memory_space<vmem>>, vector<128x32xf32>
    %cst_69 = arith.constant dense<0.000000e+00> : vector<8x32xf32>
    %153 = tpu.matmul %151, %152, %cst_69 {dimension_numbers = #tpu.dot_dimension_numbers<[1], [0], [0], [1], [0, 0, 1, 1], [], []>, precision = #tpu.contract_precision<fp32>} : vector<8x128xf32>, vector<128x32xf32>, vector<8x32xf32> -> vector<8x32xf32>
    %c0_70 = arith.constant 0 : index
    %c0_71 = arith.constant 0 : index
    %154 = vector.load %arg13[%c0_70, %c0_71] : memref<1x32xf32, #tpu.memory_space<vmem>>, vector<1x32xf32>
    %155 = vector.broadcast %154 : vector<1x32xf32> to vector<8x32xf32>
    %156 = arith.addf %153, %155 : vector<8x32xf32>
    %157 = arith.addf %116, %156 : vector<8x32xf32>
    %158 = vector.shape_cast %157 : vector<8x32xf32> to vector<1x8x32xf32>
    %c0_72 = arith.constant 0 : index
    %c0_73 = arith.constant 0 : index
    %c0_74 = arith.constant 0 : index
    %159 = vector.load %arg14[%c0_72, %c0_73, %c0_74] : memref<1x8x32xf32, #tpu.memory_space<vmem>>, vector<1x8x32xf32>
    tpu.vector_store %arg14[%c0_72, %c0_73, %c0_74], %158 {strides = array<i32>} : memref<1x8x32xf32, #tpu.memory_space<vmem>>, vector<1x8x32xf32>,
    return
  }
  func.func @transform_0(%arg0: i32) -> (i32, i32, i32) {
    %c0_i32 = arith.constant 0 : i32
    %c0_i32_0 = arith.constant 0 : i32
    %c0_i32_1 = arith.constant 0 : i32
    return %arg0, %c0_i32, %c0_i32_0 : i32, i32, i32
  }
  func.func @transform_1(%arg0: i32) -> (i32, i32) {
    %c0_i32 = arith.constant 0 : i32
    %c0_i32_0 = arith.constant 0 : i32
    %c0_i32_1 = arith.constant 0 : i32
    return %c0_i32, %c0_i32_0 : i32, i32
  }
  func.func @transform_2(%arg0: i32) -> (i32, i32) {
    %c0_i32 = arith.constant 0 : i32
    %c0_i32_0 = arith.constant 0 : i32
    %c0_i32_1 = arith.constant 0 : i32
    return %c0_i32, %c0_i32_0 : i32, i32
  }
  func.func @transform_3(%arg0: i32) -> (i32, i32) {
    %c0_i32 = arith.constant 0 : i32
    %c0_i32_0 = arith.constant 0 : i32
    %c0_i32_1 = arith.constant 0 : i32
    return %c0_i32, %c0_i32_0 : i32, i32
  }
  func.func @transform_4(%arg0: i32) -> (i32, i32) {
    %c0_i32 = arith.constant 0 : i32
    %c0_i32_0 = arith.constant 0 : i32
    %c0_i32_1 = arith.constant 0 : i32
    return %c0_i32, %c0_i32_0 : i32, i32
  }
  func.func @transform_5(%arg0: i32) -> (i32, i32) {
    %c0_i32 = arith.constant 0 : i32
    %c0_i32_0 = arith.constant 0 : i32
    %c0_i32_1 = arith.constant 0 : i32
    return %c0_i32, %c0_i32_0 : i32, i32
  }
  func.func @transform_6(%arg0: i32) -> (i32, i32) {
    %c0_i32 = arith.constant 0 : i32
    %c0_i32_0 = arith.constant 0 : i32
    %c0_i32_1 = arith.constant 0 : i32
    return %c0_i32, %c0_i32_0 : i32, i32
  }
  func.func @transform_7(%arg0: i32) -> (i32, i32) {
    %c0_i32 = arith.constant 0 : i32
    %c0_i32_0 = arith.constant 0 : i32
    %c0_i32_1 = arith.constant 0 : i32
    return %c0_i32, %c0_i32_0 : i32, i32
  }
  func.func @transform_8(%arg0: i32) -> (i32, i32) {
    %c0_i32 = arith.constant 0 : i32
    %c0_i32_0 = arith.constant 0 : i32
    %c0_i32_1 = arith.constant 0 : i32
    return %c0_i32, %c0_i32_0 : i32, i32
  }
  func.func @transform_9(%arg0: i32) -> (i32, i32) {
    %c0_i32 = arith.constant 0 : i32
    %c0_i32_0 = arith.constant 0 : i32
    %c0_i32_1 = arith.constant 0 : i32
    return %c0_i32, %c0_i32_0 : i32, i32
  }
  func.func @transform_10(%arg0: i32) -> (i32, i32) {
    %c0_i32 = arith.constant 0 : i32
    %c0_i32_0 = arith.constant 0 : i32
    %c0_i32_1 = arith.constant 0 : i32
    return %c0_i32, %c0_i32_0 : i32, i32
  }
  func.func @transform_11(%arg0: i32) -> (i32, i32) {
    %c0_i32 = arith.constant 0 : i32
    %c0_i32_0 = arith.constant 0 : i32
    %c0_i32_1 = arith.constant 0 : i32
    return %c0_i32, %c0_i32_0 : i32, i32
  }
  func.func @transform_12(%arg0: i32) -> (i32, i32) {
    %c0_i32 = arith.constant 0 : i32
    %c0_i32_0 = arith.constant 0 : i32
    %c0_i32_1 = arith.constant 0 : i32
    return %c0_i32, %c0_i32_0 : i32, i32
  }
  func.func @transform_13(%arg0: i32) -> (i32, i32, i32) {
    %c0_i32 = arith.constant 0 : i32
    %c0_i32_0 = arith.constant 0 : i32
    %c0_i32_1 = arith.constant 0 : i32
    return %arg0, %c0_i32, %c0_i32_0 : i32, i32, i32
  }
}

</mosaic_0001>

<llo_original>
// kernel: tpu_custom_call.1
$region0: #{tpu_custom_call.1}
  #allocation0 [shape = 'u32[]', space=smem, size = 0x4, offset = 0x4, fixed_abs, tag = 'smem constant byte address 0x4 - core index']
  #allocation1 [shape = 'u32[72,128]{1,0:T(1,128)}', space=vmem, size = 0x9000, scoped, tag = 'internal scratch']
  #allocation2 [shape = 'f32[8,32]{1,0:T(8,128)}', space=vmem, size = 0x1000, scoped, tag = 'scratch operand']
  %s0 = inlined_call_operand.vmem [shape: f32[2,8,32], index: 0, kind: input, shape index: {}]
  %s1 = inlined_call_operand.vmem [shape: f32[1,32], index: 1, kind: input, shape index: {}]
  %s2 = inlined_call_operand.vmem [shape: f32[1,32], index: 2, kind: input, shape index: {}]
  %s3 = inlined_call_operand.vmem [shape: f32[32,96], index: 3, kind: input, shape index: {}]
  %s4 = inlined_call_operand.vmem [shape: f32[1,96], index: 4, kind: input, shape index: {}]
  %s5 = inlined_call_operand.vmem [shape: f32[32,32], index: 5, kind: input, shape index: {}]
  %s6 = inlined_call_operand.vmem [shape: f32[1,32], index: 6, kind: input, shape index: {}]
  %s7 = inlined_call_operand.vmem [shape: f32[1,32], index: 7, kind: input, shape index: {}]
  %s8 = inlined_call_operand.vmem [shape: f32[1,32], index: 8, kind: input, shape index: {}]
  %s9 = inlined_call_operand.vmem [shape: f32[32,128], index: 9, kind: input, shape index: {}]
  %s10 = inlined_call_operand.vmem [shape: f32[1,128], index: 10, kind: input, shape index: {}]
  %s11 = inlined_call_operand.vmem [shape: f32[128,32], index: 11, kind: input, shape index: {}]
  %s12 = inlined_call_operand.vmem [shape: f32[1,32], index: 12, kind: input, shape index: {}]
  %s13 = inlined_call_operand.hbm [shape: f32[2,8,32], index: 13, kind: output, shape index: {}]
  %s14 = sld [smem:[#allocation0]]
  $region85: #{tpu_custom_call.1} parent=0
    _
  %s16 = ssub.s32 1, %s14
  %s17 = scalar_select 0, %s16, %s14
  $region1: #{tpu_custom_call.1} parent=0
    #allocation3 [shape = 'u8[8192]{0}', space=vmem, size = 0x2000, scoped, tag = 'output window, operand 0']
    #allocation4 [shape = 's32[2]{0}', space=sflag, size = 0x8, scoped, tag = 'scoped memory for tpu_custom_call.1']
    %18 = vsyncpa [#allocation4], 0
    %s19 = scalar_lea.sflag [#allocation4], 1
    %20 = vsyncpa %s19, 0
    loop: start=0, step=1, limit=4
    $region2: #{tpu_custom_call.1} parent=1 // loop_pre_header
      _
    $region3: #{tpu_custom_call.1} parent=1 // loop_header
      %s22 = sphi 0, %s26
      %p23 = scmp.ge.s32.totalorder %s22, 4
      %s32 = sphi 0, %s34
      %s35 = sphi 0, %s32
      %s36 = sphi 0, %s35
      %s52 = sphi 0, %s36
      %s56 = sphi 0, %s56
      %s58 = sphi 0, %s56
      %s59 = sphi 0, %s58
      %s73 = sphi 0, %s59
      %s77 = sphi 0, %s77
      %s79 = sphi 0, %s77
      %s80 = sphi 0, %s79
      %s94 = sphi 0, %s80
      %s98 = sphi 0, %s98
      %s100 = sphi 0, %s98
      %s101 = sphi 0, %s100
      %s115 = sphi 0, %s101
      %s119 = sphi 0, %s119
      %s121 = sphi 0, %s119
      %s122 = sphi 0, %s121
      %s136 = sphi 0, %s122
      %s140 = sphi 0, %s140
      %s142 = sphi 0, %s140
      %s143 = sphi 0, %s142
      %s157 = sphi 0, %s143
      %s161 = sphi 0, %s161
      %s163 = sphi 0, %s161
      %s164 = sphi 0, %s163
      %s178 = sphi 0, %s164
      %s182 = sphi 0, %s182
      %s184 = sphi 0, %s182
      %s185 = sphi 0, %s184
      %s199 = sphi 0, %s185
      %s203 = sphi 0, %s203
      %s205 = sphi 0, %s203
      %s206 = sphi 0, %s205
      %s220 = sphi 0, %s206
      %s224 = sphi 0, %s224
      %s226 = sphi 0, %s224
      %s227 = sphi 0, %s226
      %s241 = sphi 0, %s227
      %s245 = sphi 0, %s245
      %s247 = sphi 0, %s245
      %s248 = sphi 0, %s247
      %s262 = sphi 0, %s248
      %s266 = sphi 0, %s266
      %s268 = sphi 0, %s266
      %s269 = sphi 0, %s268
      %s283 = sphi 0, %s269
      %s287 = sphi 0, %s287
      %s289 = sphi 0, %s287
      %s290 = sphi 0, %s289
      %s304 = sphi 0, %s290
      %s310 = sphi 0, %s312
      %s313 = sphi 0, %s310
      %s314 = sphi 0, %s313
      %s330 = sphi 0, %s314
    $region4: #{tpu_custom_call.1} parent=1 // loop_header_branch
      %25 = sbr.rel (%p23) target = $region8
    $region5: #{tpu_custom_call.1} parent=1 // loop_body
      %s27 = ssub.s32 %s22, 1
      %s28 = ssub.s32 %s22, 2
      %s29 = sadd.s32 %s22, 1
      %s30 = ssub.s32 %s22, %s29
      %p31 = scmp.eq.s32.totalorder %s30, 0
      %s33 = sadd.s32 %s32, 1
      %s34 = scalar_select %p31, %s32, %s33
      %p37 = pneg %p31
      %p38 = scmp.eq.s32.totalorder %s22, 1
      %p39 = por %p37, %p38
      %p40 = scmp.ne.s32.totalorder %s32, %s35
      %p41 = scmp.eq.s32.totalorder %s22, 0
      %p42 = por %p40, %p41
      %p43 = scmp.ne.s32.totalorder %s32, %s35
      %p44 = scmp.eq.s32.totalorder %s27, 1
      %p45 = por %p43, %p44
      %p46 = scmp.ne.s32.totalorder %s35, %s36
      %p47 = scmp.eq.s32.totalorder %s27, 0
      %p48 = por %p46, %p47
      %p49 = scmp.ne.s32.totalorder %s35, %s36
      %p50 = scmp.eq.s32.totalorder %s28, 1
      %p51 = por %p49, %p50
      %p53 = scmp.ne.s32.totalorder %s36, %s52
      %p54 = scmp.eq.s32.totalorder %s28, 0
      %p55 = por %p53, %p54
      %s57 = sadd.s32 %s56, 1
      %p60 = scmp.eq.s32.totalorder %s22, 1
      %p61 = scmp.ne.s32.totalorder %s56, %s58
      %p62 = scmp.eq.s32.totalorder %s22, 0
      %p63 = por %p61, %p62
      %p64 = scmp.ne.s32.totalorder %s56, %s58
      %p65 = scmp.eq.s32.totalorder %s27, 1
      %p66 = por %p64, %p65
      %p67 = scmp.ne.s32.totalorder %s58, %s59
      %p68 = scmp.eq.s32.totalorder %s27, 0
      %p69 = por %p67, %p68
      %p70 = scmp.ne.s32.totalorder %s58, %s59
      %p71 = scmp.eq.s32.totalorder %s28, 1
      %p72 = por %p70, %p71
      %p74 = scmp.ne.s32.totalorder %s59, %s73
      %p75 = scmp.eq.s32.totalorder %s28, 0
      %p76 = por %p74, %p75
      %s78 = sadd.s32 %s77, 1
      %p81 = scmp.eq.s32.totalorder %s22, 1
      %p82 = scmp.ne.s32.totalorder %s77, %s79
      %p83 = scmp.eq.s32.totalorder %s22, 0
      %p84 = por %p82, %p83
      %p85 = scmp.ne.s32.totalorder %s77, %s79
      %p86 = scmp.eq.s32.totalorder %s27, 1
      %p87 = por %p85, %p86
      %p88 = scmp.ne.s32.totalorder %s79, %s80
      %p89 = scmp.eq.s32.totalorder %s27, 0
      %p90 = por %p88, %p89
      %p91 = scmp.ne.s32.totalorder %s79, %s80
      %p92 = scmp.eq.s32.totalorder %s28, 1
      %p93 = por %p91, %p92
      %p95 = scmp.ne.s32.totalorder %s80, %s94
      %p96 = scmp.eq.s32.totalorder %s28, 0
      %p97 = por %p95, %p96
      %s99 = sadd.s32 %s98, 1
      %p102 = scmp.eq.s32.totalorder %s22, 1
      %p103 = scmp.ne.s32.totalorder %s98, %s100
      %p104 = scmp.eq.s32.totalorder %s22, 0
      %p105 = por %p103, %p104
      %p106 = scmp.ne.s32.totalorder %s98, %s100
      %p107 = scmp.eq.s32.totalorder %s27, 1
      %p108 = por %p106, %p107
      %p109 = scmp.ne.s32.totalorder %s100, %s101
      %p110 = scmp.eq.s32.totalorder %s27, 0
      %p111 = por %p109, %p110
      %p112 = scmp.ne.s32.totalorder %s100, %s101
      %p113 = scmp.eq.s32.totalorder %s28, 1
      %p114 = por %p112, %p113
      %p116 = scmp.ne.s32.totalorder %s101, %s115
      %p117 = scmp.eq.s32.totalorder %s28, 0
      %p118 = por %p116, %p117
      %s120 = sadd.s32 %s119, 1
      %p123 = scmp.eq.s32.totalorder %s22, 1
      %p124 = scmp.ne.s32.totalorder %s119, %s121
      %p125 = scmp.eq.s32.totalorder %s22, 0
      %p126 = por %p124, %p125
      %p127 = scmp.ne.s32.totalorder %s119, %s121
      %p128 = scmp.eq.s32.totalorder %s27, 1
      %p129 = por %p127, %p128
      %p130 = scmp.ne.s32.totalorder %s121, %s122
      %p131 = scmp.eq.s32.totalorder %s27, 0
      %p132 = por %p130, %p131
      %p133 = scmp.ne.s32.totalorder %s121, %s122
      %p134 = scmp.eq.s32.totalorder %s28, 1
      %p135 = por %p133, %p134
      %p137 = scmp.ne.s32.totalorder %s122, %s136
      %p138 = scmp.eq.s32.totalorder %s28, 0
      %p139 = por %p137, %p138
      %s141 = sadd.s32 %s140, 1
      %p144 = scmp.eq.s32.totalorder %s22, 1
      %p145 = scmp.ne.s32.totalorder %s140, %s142
      %p146 = scmp.eq.s32.totalorder %s22, 0
      %p147 = por %p145, %p146
      %p148 = scmp.ne.s32.totalorder %s140, %s142
      %p149 = scmp.eq.s32.totalorder %s27, 1
      %p150 = por %p148, %p149
      %p151 = scmp.ne.s32.totalorder %s142, %s143
      %p152 = scmp.eq.s32.totalorder %s27, 0
      %p153 = por %p151, %p152
      %p154 = scmp.ne.s32.totalorder %s142, %s143
      %p155 = scmp.eq.s32.totalorder %s28, 1
      %p156 = por %p154, %p155
      %p158 = scmp.ne.s32.totalorder %s143, %s157
      %p159 = scmp.eq.s32.totalorder %s28, 0
      %p160 = por %p158, %p159
      %s162 = sadd.s32 %s161, 1
      %p165 = scmp.eq.s32.totalorder %s22, 1
      %p166 = scmp.ne.s32.totalorder %s161, %s163
      %p167 = scmp.eq.s32.totalorder %s22, 0
      %p168 = por %p166, %p167
      %p169 = scmp.ne.s32.totalorder %s161, %s163
      %p170 = scmp.eq.s32.totalorder %s27, 1
      %p171 = por %p169, %p170
      %p172 = scmp.ne.s32.totalorder %s163, %s164
      %p173 = scmp.eq.s32.totalorder %s27, 0
      %p174 = por %p172, %p173
      %p175 = scmp.ne.s32.totalorder %s163, %s164
      %p176 = scmp.eq.s32.totalorder %s28, 1
      %p177 = por %p175, %p176
      %p179 = scmp.ne.s32.totalorder %s164, %s178
      %p180 = scmp.eq.s32.totalorder %s28, 0
      %p181 = por %p179, %p180
      %s183 = sadd.s32 %s182, 1
      %p186 = scmp.eq.s32.totalorder %s22, 1
      %p187 = scmp.ne.s32.totalorder %s182, %s184
      %p188 = scmp.eq.s32.totalorder %s22, 0
      %p189 = por %p187, %p188
      %p190 = scmp.ne.s32.totalorder %s182, %s184
      %p191 = scmp.eq.s32.totalorder %s27, 1
      %p192 = por %p190, %p191
      %p193 = scmp.ne.s32.totalorder %s184, %s185
      %p194 = scmp.eq.s32.totalorder %s27, 0
      %p195 = por %p193, %p194
      %p196 = scmp.ne.s32.totalorder %s184, %s185
      %p197 = scmp.eq.s32.totalorder %s28, 1
      %p198 = por %p196, %p197
      %p200 = scmp.ne.s32.totalorder %s185, %s199
      %p201 = scmp.eq.s32.totalorder %s28, 0
      %p202 = por %p200, %p201
      %s204 = sadd.s32 %s203, 1
      %p207 = scmp.eq.s32.totalorder %s22, 1
      %p208 = scmp.ne.s32.totalorder %s203, %s205
      %p209 = scmp.eq.s32.totalorder %s22, 0
      %p210 = por %p208, %p209
      %p211 = scmp.ne.s32.totalorder %s203, %s205
      %p212 = scmp.eq.s32.totalorder %s27, 1
      %p213 = por %p211, %p212
      %p214 = scmp.ne.s32.totalorder %s205, %s206
      %p215 = scmp.eq.s32.totalorder %s27, 0
      %p216 = por %p214, %p215
      %p217 = scmp.ne.s32.totalorder %s205, %s206
      %p218 = scmp.eq.s32.totalorder %s28, 1
      %p219 = por %p217, %p218
      %p221 = scmp.ne.s32.totalorder %s206, %s220
      %p222 = scmp.eq.s32.totalorder %s28, 0
      %p223 = por %p221, %p222
      %s225 = sadd.s32 %s224, 1
      %p228 = scmp.eq.s32.totalorder %s22, 1
      %p229 = scmp.ne.s32.totalorder %s224, %s226
      %p230 = scmp.eq.s32.totalorder %s22, 0
      %p231 = por %p229, %p230
      %p232 = scmp.ne.s32.totalorder %s224, %s226
      %p233 = scmp.eq.s32.totalorder %s27, 1
      %p234 = por %p232, %p233
      %p235 = scmp.ne.s32.totalorder %s226, %s227
      %p236 = scmp.eq.s32.totalorder %s27, 0
      %p237 = por %p235, %p236
      %p238 = scmp.ne.s32.totalorder %s226, %s227
      %p239 = scmp.eq.s32.totalorder %s28, 1
      %p240 = por %p238, %p239
      %p242 = scmp.ne.s32.totalorder %s227, %s241
      %p243 = scmp.eq.s32.totalorder %s28, 0
      %p244 = por %p242, %p243
      %s246 = sadd.s32 %s245, 1
      %p249 = scmp.eq.s32.totalorder %s22, 1
      %p250 = scmp.ne.s32.totalorder %s245, %s247
      %p251 = scmp.eq.s32.totalorder %s22, 0
      %p252 = por %p250, %p251
      %p253 = scmp.ne.s32.totalorder %s245, %s247
      %p254 = scmp.eq.s32.totalorder %s27, 1
      %p255 = por %p253, %p254
      %p256 = scmp.ne.s32.totalorder %s247, %s248
      %p257 = scmp.eq.s32.totalorder %s27, 0
      %p258 = por %p256, %p257
      %p259 = scmp.ne.s32.totalorder %s247, %s248
      %p260 = scmp.eq.s32.totalorder %s28, 1
      %p261 = por %p259, %p260
      %p263 = scmp.ne.s32.totalorder %s248, %s262
      %p264 = scmp.eq.s32.totalorder %s28, 0
      %p265 = por %p263, %p264
      %s267 = sadd.s32 %s266, 1
      %p270 = scmp.eq.s32.totalorder %s22, 1
      %p271 = scmp.ne.s32.totalorder %s266, %s268
      %p272 = scmp.eq.s32.totalorder %s22, 0
      %p273 = por %p271, %p272
      %p274 = scmp.ne.s32.totalorder %s266, %s268
      %p275 = scmp.eq.s32.totalorder %s27, 1
      %p276 = por %p274, %p275
      %p277 = scmp.ne.s32.totalorder %s268, %s269
      %p278 = scmp.eq.s32.totalorder %s27, 0
      %p279 = por %p277, %p278
      %p280 = scmp.ne.s32.totalorder %s268, %s269
      %p281 = scmp.eq.s32.totalorder %s28, 1
      %p282 = por %p280, %p281
      %p284 = scmp.ne.s32.totalorder %s269, %s283
      %p285 = scmp.eq.s32.totalorder %s28, 0
      %p286 = por %p284, %p285
      %s288 = sadd.s32 %s287, 1
      %p291 = scmp.eq.s32.totalorder %s22, 1
      %p292 = scmp.ne.s32.totalorder %s287, %s289
      %p293 = scmp.eq.s32.totalorder %s22, 0
      %p294 = por %p292, %p293
      %p295 = scmp.ne.s32.totalorder %s287, %s289
      %p296 = scmp.eq.s32.totalorder %s27, 1
      %p297 = por %p295, %p296
      %p298 = scmp.ne.s32.totalorder %s289, %s290
      %p299 = scmp.eq.s32.totalorder %s27, 0
      %p300 = por %p298, %p299
      %p301 = scmp.ne.s32.totalorder %s289, %s290
      %p302 = scmp.eq.s32.totalorder %s28, 1
      %p303 = por %p301, %p302
      %p305 = scmp.ne.s32.totalorder %s290, %s304
      %p306 = scmp.eq.s32.totalorder %s28, 0
      %p307 = por %p305, %p306
      %s308 = ssub.s32 %s22, %s29
      %p309 = scmp.eq.s32.totalorder %s308, 0
      %s311 = sadd.s32 %s310, 1
      %s312 = scalar_select %p309, %s310, %s311
      %p315 = pneg %p309
      %p316 = scmp.eq.s32.totalorder %s22, 1
      %p317 = por %p315, %p316
      %p318 = scmp.ne.s32.totalorder %s310, %s313
      %p319 = scmp.eq.s32.totalorder %s22, 0
      %p320 = por %p318, %p319
      %p321 = scmp.ne.s32.totalorder %s310, %s313
      %p322 = scmp.eq.s32.totalorder %s27, 1
      %p323 = por %p321, %p322
      %p324 = scmp.ne.s32.totalorder %s313, %s314
      %p325 = scmp.eq.s32.totalorder %s27, 0
      %p326 = por %p324, %p325
      %p327 = scmp.ne.s32.totalorder %s313, %s314
      %p328 = scmp.eq.s32.totalorder %s28, 1
      %p329 = por %p327, %p328
      %p331 = scmp.ne.s32.totalorder %s314, %s330
      %p332 = scmp.eq.s32.totalorder %s28, 0
      %p333 = por %p331, %p332
      %p334 = scmp.le.s32.totalorder 1, %s22
      %p335 = scmp.lt.s32.totalorder %s22, 3
      %p336 = pnand %p334, %p335
      %p337 = pneg %p336
      // Predicated region
      $region9: #{tpu_custom_call.1} parent=5 // pred_check
        _
      $region10: #{tpu_custom_call.1} parent=5 // pred_check_branch
        %339 = sbr.rel (%p336) target = $region12
      $region11: #{tpu_custom_call.1} parent=5 // pred_region
        %s340 = ssub.s32 %s22, 1
        // Predicated region
        $region13: #{tpu_custom_call.1} parent=11 // pred_check
          %p341 = pneg %p69
        $region14: #{tpu_custom_call.1} parent=11 // pred_check_branch
          %343 = sbr.rel (%p341) target = $region16
        $region15: #{tpu_custom_call.1} parent=11 // pred_region
          _
        $region16: #{tpu_custom_call.1} parent=11 // pred_fallthru
          _
        // Predicated region
        $region17: #{tpu_custom_call.1} parent=11 // pred_check
          %p344 = pneg %p90
        $region18: #{tpu_custom_call.1} parent=11 // pred_check_branch
          %346 = sbr.rel (%p344) target = $region20
        $region19: #{tpu_custom_call.1} parent=11 // pred_region
          _
        $region20: #{tpu_custom_call.1} parent=11 // pred_fallthru
          _
        // Predicated region
        $region21: #{tpu_custom_call.1} parent=11 // pred_check
          %p347 = pneg %p111
        $region22: #{tpu_custom_call.1} parent=11 // pred_check_branch
          %349 = sbr.rel (%p347) target = $region24
        $region23: #{tpu_custom_call.1} parent=11 // pred_region
          _
        $region24: #{tpu_custom_call.1} parent=11 // pred_fallthru
          _
        // Predicated region
        $region25: #{tpu_custom_call.1} parent=11 // pred_check
          %p350 = pneg %p132
        $region26: #{tpu_custom_call.1} parent=11 // pred_check_branch
          %352 = sbr.rel (%p350) target = $region28
        $region27: #{tpu_custom_call.1} parent=11 // pred_region
          _
        $region28: #{tpu_custom_call.1} parent=11 // pred_fallthru
          _
        // Predicated region
        $region29: #{tpu_custom_call.1} parent=11 // pred_check
          %p353 = pneg %p153
        $region30: #{tpu_custom_call.1} parent=11 // pred_check_branch
          %355 = sbr.rel (%p353) target = $region32
        $region31: #{tpu_custom_call.1} parent=11 // pred_region
          _
        $region32: #{tpu_custom_call.1} parent=11 // pred_fallthru
          _
        // Predicated region
        $region33: #{tpu_custom_call.1} parent=11 // pred_check
          %p356 = pneg %p174
        $region34: #{tpu_custom_call.1} parent=11 // pred_check_branch
          %358 = sbr.rel (%p356) target = $region36
        $region35: #{tpu_custom_call.1} parent=11 // pred_region
          _
        $region36: #{tpu_custom_call.1} parent=11 // pred_fallthru
          _
        // Predicated region
        $region37: #{tpu_custom_call.1} parent=11 // pred_check
          %p359 = pneg %p195
        $region38: #{tpu_custom_call.1} parent=11 // pred_check_branch
          %361 = sbr.rel (%p359) target = $region40
        $region39: #{tpu_custom_call.1} parent=11 // pred_region
          _
        $region40: #{tpu_custom_call.1} parent=11 // pred_fallthru
          _
        // Predicated region
        $region41: #{tpu_custom_call.1} parent=11 // pred_check
          %p362 = pneg %p216
        $region42: #{tpu_custom_call.1} parent=11 // pred_check_branch
          %364 = sbr.rel (%p362) target = $region44
        $region43: #{tpu_custom_call.1} parent=11 // pred_region
          _
        $region44: #{tpu_custom_call.1} parent=11 // pred_fallthru
          _
        // Predicated region
        $region45: #{tpu_custom_call.1} parent=11 // pred_check
          %p365 = pneg %p237
        $region46: #{tpu_custom_call.1} parent=11 // pred_check_branch
          %367 = sbr.rel (%p365) target = $region48
        $region47: #{tpu_custom_call.1} parent=11 // pred_region
          _
        $region48: #{tpu_custom_call.1} parent=11 // pred_fallthru
          _
        // Predicated region
        $region49: #{tpu_custom_call.1} parent=11 // pred_check
          %p368 = pneg %p258
        $region50: #{tpu_custom_call.1} parent=11 // pred_check_branch
          %370 = sbr.rel (%p368) target = $region52
        $region51: #{tpu_custom_call.1} parent=11 // pred_region
          _
        $region52: #{tpu_custom_call.1} parent=11 // pred_fallthru
          _
        // Predicated region
        $region53: #{tpu_custom_call.1} parent=11 // pred_check
          %p371 = pneg %p279
        $region54: #{tpu_custom_call.1} parent=11 // pred_check_branch
          %373 = sbr.rel (%p371) target = $region56
        $region55: #{tpu_custom_call.1} parent=11 // pred_region
          _
        $region56: #{tpu_custom_call.1} parent=11 // pred_fallthru
          _
        // Predicated region
        $region57: #{tpu_custom_call.1} parent=11 // pred_check
          %p374 = pneg %p300
        $region58: #{tpu_custom_call.1} parent=11 // pred_check_branch
          %376 = sbr.rel (%p374) target = $region60
        $region59: #{tpu_custom_call.1} parent=11 // pred_region
          _
        $region60: #{tpu_custom_call.1} parent=11 // pred_fallthru
          _
      $region12: #{tpu_custom_call.1} parent=5 // pred_fallthru
        _
      %p377 = scmp.lt.s32.totalorder %s22, 2
      // Predicated region
      $region61: #{tpu_custom_call.1} parent=5 // pred_check
        %p378 = pneg %p377
      $region62: #{tpu_custom_call.1} parent=5 // pred_check_branch
        %380 = sbr.rel (%p378) target = $region64
      $region63: #{tpu_custom_call.1} parent=5 // pred_region
        // Predicated region
        $region65: #{tpu_custom_call.1} parent=63 // pred_check
          %p381 = pneg %p42
        $region66: #{tpu_custom_call.1} parent=63 // pred_check_branch
          %383 = sbr.rel (%p381) target = $region68
        $region67: #{tpu_custom_call.1} parent=63 // pred_region
          %p384 = scmp.lt.s32.totalorder %s22, 1
          %s385 = scalar_select %p384, %s22, 1
          %s386 = smul.addr %s385, 8
          %s387 = scalar_lea.vmem %s0, %s386
        $region68: #{tpu_custom_call.1} parent=63 // pred_fallthru
          _
      $region64: #{tpu_custom_call.1} parent=5 // pred_fallthru
        _
      %p388 = scmp.le.s32.totalorder 1, %s22
      %p389 = scmp.lt.s32.totalorder %s22, 3
      %p390 = pnand %p388, %p389
      %p391 = pneg %p390
      // Predicated region
      $region69: #{tpu_custom_call.1} parent=5 // pred_check
        _
      $region70: #{tpu_custom_call.1} parent=5 // pred_check_branch
        %393 = sbr.rel (%p390) target = $region72
      $region71: #{tpu_custom_call.1} parent=5 // pred_region
        %s394 = ssub.s32 %s22, 1
        %p395 = scmp.lt.s32.totalorder %s27, 1
        %s396 = scalar_select %p395, %s27, 1
        %s397 = smul.addr %s396, 8
        %s398 = scalar_lea.vmem %s0, %s397
        %p399 = pneg %p48
        %p400 = pneg %p45
        %p401 = pneg %p69
        %p402 = pneg %p66
        %p403 = pneg %p90
        %p404 = pneg %p87
        %p405 = pneg %p111
        %p406 = pneg %p108
        %p407 = pneg %p132
        %p408 = pneg %p129
        %p409 = pneg %p153
        %p410 = pneg %p150
        %p411 = pneg %p174
        %p412 = pneg %p171
        %p413 = pneg %p195
        %p414 = pneg %p192
        %p415 = pneg %p216
        %p416 = pneg %p213
        %p417 = pneg %p237
        %p418 = pneg %p234
        %p419 = pneg %p258
        %p420 = pneg %p255
        %p421 = pneg %p279
        %p422 = pneg %p276
        %p423 = pneg %p300
        %p424 = pneg %p297
        %p425 = pneg %p326
        %p426 = pneg %p323
        %s427 = sand.u32 %s313, 1
        %s428 = scalar_lea.sflag [#allocation4], %s427
        %s429 = sand.u32 %s313, 1
        %s430 = smul.addr %s429, 8
        %s431 = scalar_lea.vmem [#allocation3], %s430
        %p432 = scmp.lt.s32.totalorder %s27, 1
        %s433 = scalar_select %p432, %s27, 1
        %s434 = smul.addr %s433, 8
        %s435 = scalar_lea.vmem %s0, %s434
        %v436 = vld [vmem:[%s435] sm:$0xff]
        %vm437 = vcmask 261120
        %v438 = vsel %vm437, %v436, 0.0
        %439 = vadd.xlane.f32.xlu0 %v438
        %v440 = vpop.xlane.xlu0 %439
        %v441 = vrcp.pop 32.0
        %v442 = vmul.f32 32.0, %v441
        %v443 = vsub.f32 1.0, %v442
        %v444 = vmul.f32 %v441, %v443
        %v445 = vadd.f32 %v441, %v444
        %vm446 = vweird.f32 %v441
        %v447 = vsel %vm446, %v441, %v445
        %v448 = vmul.f32 %v440, %v447
        %v449 = vsub.f32 %v436, %v448
        %v450 = vmul.f32 %v449, %v449
        %v451 = vsel %vm437, %v450, 0.0
        %452 = vadd.xlane.f32.xlu0 %v451
        %v453 = vpop.xlane.xlu0 %452
        %v454 = vmul.f32 %v453, %v447
        %v455 = vadd.f32 %v454, 1e-05
        %v456 = vrsqrt.pop %v455
        %v457 = vmul.f32 %v456, %v455
        %v458 = vmul.f32 %v457, %v456
        %v459 = vmul.f32 0.5, %v458
        %v460 = vsub.f32 1.5, %v459
        %v461 = vmul.f32 %v456, %v460
        %vm462 = vweird.f32 %v455
        %vm463 = vweird.f32 %v456
        %vm464 = vmor %vm462, %vm463
        %v465 = vsel %vm464, %v456, %v461
        %v466 = vmul.f32 %v449, %v465
        %v467 = vld [vmem:[%s1] sm:$0x1]
        %v469 = vperm.slane %v467, 0
        %v471 = vmul.f32 %v466, %v469
        %v472 = vld [vmem:[%s2] sm:$0x1]
        %v474 = vperm.slane %v472, 0
        %v476 = vadd.f32 %v471, %v474
        %v477 = vld [vmem:[%s3] sm:$0xff]
        %v478 = vld [vmem:[%s3 + $0x8] sm:$0xff]
        %v479 = vld [vmem:[%s3 + $0x10] sm:$0xff]
        %v480 = vld [vmem:[%s3 + $0x18] sm:$0xff]
        %v481 = vld [vmem:[%s4] sm:$0x1]
        %v483 = vperm.slane %v481, 0
        %v486 = vsel %vm437, %v476, 0
        %488 = vmatpush.msra.mxu0 0.0
        %489 = vmatpush.msra.mxu0 0.0
        %490 = vmatpush.msra.mxu0 0.0
        %491 = vmatpush.msra.mxu0 0.0
        %492 = vmatpush.msra.mxu0 0.0
        %493 = vmatpush.msra.mxu0 0.0
        %494 = vmatpush.msra.mxu0 0.0
        %495 = vmatpush.msra.mxu0 0.0
        %496 = vmatpush.msra.mxu0 0.0
        %497 = vmatpush.msra.mxu0 0.0
        %498 = vmatpush.msra.mxu0 0.0
        %499 = vmatpush.msra.mxu0 0.0
        %v500 = vand.u32 %v480, 4294901760
        %501 = vmatpush.msra.mxu0 %v500
        %v502 = vand.u32 %v479, 4294901760
        %503 = vmatpush.msra.mxu0 %v502
        %v504 = vand.u32 %v478, 4294901760
        %505 = vmatpush.msra.mxu0 %v504
        %v506 = vand.u32 %v477, 4294901760
        %507 = vmatpush.msra.mxu0 %v506
        %v508 = vand.u32 %v486, 4294901760
        %v509 = vsub.f32 %v486, %v508
        %v510 = vand.u32 %v509, 4294901760
        %v511 = vsub.f32 %v509, %v510
        %v512 = vand.u32 %v511, 4294901760
        %513 = vmatmul.f32.gmra.mxu0 %v512
        %v514 = vpop.f32.mrf.mxu0
        %v515 = vadd.f32 %v483, %v514
        %516 = vdwg.mxu0
        %517 = vmatpush.msra.mxu0 0.0
        %518 = vmatpush.msra.mxu0 0.0
        %519 = vmatpush.msra.mxu0 0.0
        %520 = vmatpush.msra.mxu0 0.0
        %521 = vmatpush.msra.mxu0 0.0
        %522 = vmatpush.msra.mxu0 0.0
        %523 = vmatpush.msra.mxu0 0.0
        %524 = vmatpush.msra.mxu0 0.0
        %525 = vmatpush.msra.mxu0 0.0
        %526 = vmatpush.msra.mxu0 0.0
        %527 = vmatpush.msra.mxu0 0.0
        %528 = vmatpush.msra.mxu0 0.0
        %v529 = vand.u32 %v480, 4294901760
        %v530 = vsub.f32 %v480, %v529
        %v531 = vand.u32 %v530, 4294901760
        %v532 = vsub.f32 %v530, %v531
        %v533 = vand.u32 %v532, 4294901760
        %534 = vmatpush.msra.mxu0 %v533
        %v535 = vand.u32 %v479, 4294901760
        %v536 = vsub.f32 %v479, %v535
        %v537 = vand.u32 %v536, 4294901760
        %v538 = vsub.f32 %v536, %v537
        %v539 = vand.u32 %v538, 4294901760
        %540 = vmatpush.msra.mxu0 %v539
        %v541 = vand.u32 %v478, 4294901760
        %v542 = vsub.f32 %v478, %v541
        %v543 = vand.u32 %v542, 4294901760
        %v544 = vsub.f32 %v542, %v543
        %v545 = vand.u32 %v544, 4294901760
        %546 = vmatpush.msra.mxu0 %v545
        %v547 = vand.u32 %v477, 4294901760
        %v548 = vsub.f32 %v477, %v547
        %v549 = vand.u32 %v548, 4294901760
        %v550 = vsub.f32 %v548, %v549
        %v551 = vand.u32 %v550, 4294901760
        %552 = vmatpush.msra.mxu0 %v551
        %v553 = vand.u32 %v486, 4294901760
        %554 = vmatmul.f32.gmra.mxu0 %v553
        %v555 = vpop.f32.mrf.mxu0
        %v556 = vadd.f32 %v515, %v555
        %557 = vdwg.mxu0
        %558 = vmatpush.msra.mxu0 0.0
        %559 = vmatpush.msra.mxu0 0.0
        %560 = vmatpush.msra.mxu0 0.0
        %561 = vmatpush.msra.mxu0 0.0
        %562 = vmatpush.msra.mxu0 0.0
        %563 = vmatpush.msra.mxu0 0.0
        %564 = vmatpush.msra.mxu0 0.0
        %565 = vmatpush.msra.mxu0 0.0
        %566 = vmatpush.msra.mxu0 0.0
        %567 = vmatpush.msra.mxu0 0.0
        %568 = vmatpush.msra.mxu0 0.0
        %569 = vmatpush.msra.mxu0 0.0
        %v570 = vand.u32 %v480, 4294901760
        %v571 = vsub.f32 %v480, %v570
        %572 = vmatpush.msra.mxu0 %v571
        %v573 = vand.u32 %v479, 4294901760
        %v574 = vsub.f32 %v479, %v573
        %575 = vmatpush.msra.mxu0 %v574
        %v576 = vand.u32 %v478, 4294901760
        %v577 = vsub.f32 %v478, %v576
        %578 = vmatpush.msra.mxu0 %v577
        %v579 = vand.u32 %v477, 4294901760
        %v580 = vsub.f32 %v477, %v579
        %581 = vmatpush.msra.mxu0 %v580
        %v582 = vand.u32 %v486, 4294901760
        %v583 = vsub.f32 %v486, %v582
        %584 = vmatmul.f32.gmra.mxu0 %v583
        %v585 = vpop.f32.mrf.mxu0
        %v586 = vadd.f32 %v556, %v585
        %587 = vdwg.mxu0
        %588 = vmatpush.msra.mxu0 0.0
        %589 = vmatpush.msra.mxu0 0.0
        %590 = vmatpush.msra.mxu0 0.0
        %591 = vmatpush.msra.mxu0 0.0
        %592 = vmatpush.msra.mxu0 0.0
        %593 = vmatpush.msra.mxu0 0.0
        %594 = vmatpush.msra.mxu0 0.0
        %595 = vmatpush.msra.mxu0 0.0
        %596 = vmatpush.msra.mxu0 0.0
        %597 = vmatpush.msra.mxu0 0.0
        %598 = vmatpush.msra.mxu0 0.0
        %599 = vmatpush.msra.mxu0 0.0
        %v600 = vand.u32 %v480, 4294901760
        %601 = vmatpush.msra.mxu0 %v600
        %v602 = vand.u32 %v479, 4294901760
        %603 = vmatpush.msra.mxu0 %v602
        %v604 = vand.u32 %v478, 4294901760
        %605 = vmatpush.msra.mxu0 %v604
        %v606 = vand.u32 %v477, 4294901760
        %607 = vmatpush.msra.mxu0 %v606
        %v608 = vand.u32 %v486, 4294901760
        %v609 = vsub.f32 %v486, %v608
        %v610 = vand.u32 %v609, 4294901760
        %611 = vmatmul.f32.gmra.mxu0 %v610
        %v612 = vpop.f32.mrf.mxu0
        %v613 = vadd.f32 %v586, %v612
        %614 = vdwg.mxu0
        %615 = vmatpush.msra.mxu0 0.0
        %616 = vmatpush.msra.mxu0 0.0
        %617 = vmatpush.msra.mxu0 0.0
        %618 = vmatpush.msra.mxu0 0.0
        %619 = vmatpush.msra.mxu0 0.0
        %620 = vmatpush.msra.mxu0 0.0
        %621 = vmatpush.msra.mxu0 0.0
        %622 = vmatpush.msra.mxu0 0.0
        %623 = vmatpush.msra.mxu0 0.0
        %624 = vmatpush.msra.mxu0 0.0
        %625 = vmatpush.msra.mxu0 0.0
        %626 = vmatpush.msra.mxu0 0.0
        %v627 = vand.u32 %v480, 4294901760
        %v628 = vsub.f32 %v480, %v627
        %v629 = vand.u32 %v628, 4294901760
        %630 = vmatpush.msra.mxu0 %v629
        %v631 = vand.u32 %v479, 4294901760
        %v632 = vsub.f32 %v479, %v631
        %v633 = vand.u32 %v632, 4294901760
        %634 = vmatpush.msra.mxu0 %v633
        %v635 = vand.u32 %v478, 4294901760
        %v636 = vsub.f32 %v478, %v635
        %v637 = vand.u32 %v636, 4294901760
        %638 = vmatpush.msra.mxu0 %v637
        %v639 = vand.u32 %v477, 4294901760
        %v640 = vsub.f32 %v477, %v639
        %v641 = vand.u32 %v640, 4294901760
        %642 = vmatpush.msra.mxu0 %v641
        %v643 = vand.u32 %v486, 4294901760
        %644 = vmatmul.f32.gmra.mxu0 %v643
        %v645 = vpop.f32.mrf.mxu0
        %v646 = vadd.f32 %v613, %v645
        %647 = vdwg.mxu0
        %648 = vmatpush.msra.mxu0 0.0
        %649 = vmatpush.msra.mxu0 0.0
        %650 = vmatpush.msra.mxu0 0.0
        %651 = vmatpush.msra.mxu0 0.0
        %652 = vmatpush.msra.mxu0 0.0
        %653 = vmatpush.msra.mxu0 0.0
        %654 = vmatpush.msra.mxu0 0.0
        %655 = vmatpush.msra.mxu0 0.0
        %656 = vmatpush.msra.mxu0 0.0
        %657 = vmatpush.msra.mxu0 0.0
        %658 = vmatpush.msra.mxu0 0.0
        %659 = vmatpush.msra.mxu0 0.0
        %v660 = vand.u32 %v480, 4294901760
        %661 = vmatpush.msra.mxu0 %v660
        %v662 = vand.u32 %v479, 4294901760
        %663 = vmatpush.msra.mxu0 %v662
        %v664 = vand.u32 %v478, 4294901760
        %665 = vmatpush.msra.mxu0 %v664
        %v666 = vand.u32 %v477, 4294901760
        %667 = vmatpush.msra.mxu0 %v666
        %v668 = vand.u32 %v486, 4294901760
        %669 = vmatmul.f32.gmra.mxu0 %v668
        %v670 = vpop.f32.mrf.mxu0
        %v671 = vadd.f32 %v646, %v670
        %672 = vdwg.mxu0
        %v673 = vlaneseq
        %v674 = vshrl.u32 %v673, 7
        %v675 = vlaneseq
        %v676 = vand.u32 %v675, 127
        %vm677 = vcmp.le.s32.totalorder %v676, %v674
        %679 = vrot.lane.b32.xlu0 %v671, 96
        %v680 = vpop.permute.xlu0 %679
        %vm681 = vcmask 64512
        %v682 = vsel %vm681, %v671, 0
        %v684 = vsel %vm681, %v680, 0
        %686 = vmatpush.xpose.msra.mxu0 0.0
        %687 = vmatpush.xpose.msra.mxu0 0.0
        %688 = vmatpush.xpose.msra.mxu0 0.0
        %689 = vmatpush.xpose.msra.mxu0 0.0
        %690 = vmatpush.xpose.msra.mxu0 0.0
        %691 = vmatpush.xpose.msra.mxu0 0.0
        %692 = vmatpush.xpose.msra.mxu0 0.0
        %693 = vmatpush.xpose.msra.mxu0 0.0
        %694 = vmatpush.xpose.msra.mxu0 0.0
        %695 = vmatpush.xpose.msra.mxu0 0.0
        %696 = vmatpush.xpose.msra.mxu0 0.0
        %697 = vmatpush.xpose.msra.mxu0 0.0
        %698 = vmatpush.xpose.msra.mxu0 0.0
        %699 = vmatpush.xpose.msra.mxu0 0.0
        %700 = vmatpush.xpose.msra.mxu0 0.0
        %v701 = vand.u32 %v684, 4294901760
        %702 = vmatpush.xpose.msra.mxu0 %v701
        %v703 = vand.u32 %v682, 4294901760
        %v704 = vsub.f32 %v682, %v703
        %v705 = vand.u32 %v704, 4294901760
        %v706 = vsub.f32 %v704, %v705
        %v707 = vand.u32 %v706, 4294901760
        %708 = vmatmul.f32.gmra.mxu0 %v707
        %v709 = vpop.f32.mrf.mxu0
        %v710 = vadd.f32 0.0, %v709
        %711 = vdwg.mxu0
        %712 = vmatpush.xpose.msra.mxu0 0.0
        %713 = vmatpush.xpose.msra.mxu0 0.0
        %714 = vmatpush.xpose.msra.mxu0 0.0
        %715 = vmatpush.xpose.msra.mxu0 0.0
        %716 = vmatpush.xpose.msra.mxu0 0.0
        %717 = vmatpush.xpose.msra.mxu0 0.0
        %718 = vmatpush.xpose.msra.mxu0 0.0
        %719 = vmatpush.xpose.msra.mxu0 0.0
        %720 = vmatpush.xpose.msra.mxu0 0.0
        %721 = vmatpush.xpose.msra.mxu0 0.0
        %722 = vmatpush.xpose.msra.mxu0 0.0
        %723 = vmatpush.xpose.msra.mxu0 0.0
        %724 = vmatpush.xpose.msra.mxu0 0.0
        %725 = vmatpush.xpose.msra.mxu0 0.0
        %726 = vmatpush.xpose.msra.mxu0 0.0
        %v727 = vand.u32 %v684, 4294901760
        %v728 = vsub.f32 %v684, %v727
        %v729 = vand.u32 %v728, 4294901760
        %v730 = vsub.f32 %v728, %v729
        %v731 = vand.u32 %v730, 4294901760
        %732 = vmatpush.xpose.msra.mxu0 %v731
        %v733 = vand.u32 %v682, 4294901760
        %734 = vmatmul.f32.gmra.mxu0 %v733
        %v735 = vpop.f32.mrf.mxu0
        %v736 = vadd.f32 %v710, %v735
        %737 = vdwg.mxu0
        %738 = vmatpush.xpose.msra.mxu0 0.0
        %739 = vmatpush.xpose.msra.mxu0 0.0
        %740 = vmatpush.xpose.msra.mxu0 0.0
        %741 = vmatpush.xpose.msra.mxu0 0.0
        %742 = vmatpush.xpose.msra.mxu0 0.0
        %743 = vmatpush.xpose.msra.mxu0 0.0
        %744 = vmatpush.xpose.msra.mxu0 0.0
        %745 = vmatpush.xpose.msra.mxu0 0.0
        %746 = vmatpush.xpose.msra.mxu0 0.0
        %747 = vmatpush.xpose.msra.mxu0 0.0
        %748 = vmatpush.xpose.msra.mxu0 0.0
        %749 = vmatpush.xpose.msra.mxu0 0.0
        %750 = vmatpush.xpose.msra.mxu0 0.0
        %751 = vmatpush.xpose.msra.mxu0 0.0
        %752 = vmatpush.xpose.msra.mxu0 0.0
        %v753 = vand.u32 %v684, 4294901760
        %v754 = vsub.f32 %v684, %v753
        %755 = vmatpush.xpose.msra.mxu0 %v754
        %v756 = vand.u32 %v682, 4294901760
        %v757 = vsub.f32 %v682, %v756
        %758 = vmatmul.f32.gmra.mxu0 %v757
        %v759 = vpop.f32.mrf.mxu0
        %v760 = vadd.f32 %v736, %v759
        %761 = vdwg.mxu0
        %762 = vmatpush.xpose.msra.mxu0 0.0
        %763 = vmatpush.xpose.msra.mxu0 0.0
        %764 = vmatpush.xpose.msra.mxu0 0.0
        %765 = vmatpush.xpose.msra.mxu0 0.0
        %766 = vmatpush.xpose.msra.mxu0 0.0
        %767 = vmatpush.xpose.msra.mxu0 0.0
        %768 = vmatpush.xpose.msra.mxu0 0.0
        %769 = vmatpush.xpose.msra.mxu0 0.0
        %770 = vmatpush.xpose.msra.mxu0 0.0
        %771 = vmatpush.xpose.msra.mxu0 0.0
        %772 = vmatpush.xpose.msra.mxu0 0.0
        %773 = vmatpush.xpose.msra.mxu0 0.0
        %774 = vmatpush.xpose.msra.mxu0 0.0
        %775 = vmatpush.xpose.msra.mxu0 0.0
        %776 = vmatpush.xpose.msra.mxu0 0.0
        %v777 = vand.u32 %v684, 4294901760
        %778 = vmatpush.xpose.msra.mxu0 %v777
        %v779 = vand.u32 %v682, 4294901760
        %v780 = vsub.f32 %v682, %v779
        %v781 = vand.u32 %v780, 4294901760
        %782 = vmatmul.f32.gmra.mxu0 %v781
        %v783 = vpop.f32.mrf.mxu0
        %v784 = vadd.f32 %v760, %v783
        %785 = vdwg.mxu0
        %786 = vmatpush.xpose.msra.mxu0 0.0
        %787 = vmatpush.xpose.msra.mxu0 0.0
        %788 = vmatpush.xpose.msra.mxu0 0.0
        %789 = vmatpush.xpose.msra.mxu0 0.0
        %790 = vmatpush.xpose.msra.mxu0 0.0
        %791 = vmatpush.xpose.msra.mxu0 0.0
        %792 = vmatpush.xpose.msra.mxu0 0.0
        %793 = vmatpush.xpose.msra.mxu0 0.0
        %794 = vmatpush.xpose.msra.mxu0 0.0
        %795 = vmatpush.xpose.msra.mxu0 0.0
        %796 = vmatpush.xpose.msra.mxu0 0.0
        %797 = vmatpush.xpose.msra.mxu0 0.0
        %798 = vmatpush.xpose.msra.mxu0 0.0
        %799 = vmatpush.xpose.msra.mxu0 0.0
        %800 = vmatpush.xpose.msra.mxu0 0.0
        %v801 = vand.u32 %v684, 4294901760
        %v802 = vsub.f32 %v684, %v801
        %v803 = vand.u32 %v802, 4294901760
        %804 = vmatpush.xpose.msra.mxu0 %v803
        %v805 = vand.u32 %v682, 4294901760
        %806 = vmatmul.f32.gmra.mxu0 %v805
        %v807 = vpop.f32.mrf.mxu0
        %v808 = vadd.f32 %v784, %v807
        %809 = vdwg.mxu0
        %810 = vmatpush.xpose.msra.mxu0 0.0
        %811 = vmatpush.xpose.msra.mxu0 0.0
        %812 = vmatpush.xpose.msra.mxu0 0.0
        %813 = vmatpush.xpose.msra.mxu0 0.0
        %814 = vmatpush.xpose.msra.mxu0 0.0
        %815 = vmatpush.xpose.msra.mxu0 0.0
        %816 = vmatpush.xpose.msra.mxu0 0.0
        %817 = vmatpush.xpose.msra.mxu0 0.0
        %818 = vmatpush.xpose.msra.mxu0 0.0
        %819 = vmatpush.xpose.msra.mxu0 0.0
        %820 = vmatpush.xpose.msra.mxu0 0.0
        %821 = vmatpush.xpose.msra.mxu0 0.0
        %822 = vmatpush.xpose.msra.mxu0 0.0
        %823 = vmatpush.xpose.msra.mxu0 0.0
        %824 = vmatpush.xpose.msra.mxu0 0.0
        %v825 = vand.u32 %v684, 4294901760
        %826 = vmatpush.xpose.msra.mxu0 %v825
        %v827 = vand.u32 %v682, 4294901760
        %828 = vmatmul.f32.gmra.mxu0 %v827
        %v829 = vpop.f32.mrf.mxu0
        %v830 = vadd.f32 %v808, %v829
        %831 = vdwg.mxu0
        %v832 = vmul.f32 %v830, 0.35355338
        %v833 = vsel %vm677, %v832, -1e+30
        %v834 = vsel %vm681, %v833, -inf
        %835 = vmax.xlane.f32.xlu0 %v834
        %v836 = vpop.xlane.xlu0 %835
        %v837 = vsub.f32 %v833, %v836
        %v838 = vmul.f32 %v837, 1.442695
        %v839 = vpow.pop %v838
        %v840 = vsel %vm681, %v839, 0.0
        %841 = vadd.xlane.f32.xlu0 %v840
        %v842 = vpop.xlane.xlu0 %841
        %v843 = vrcp.pop %v842
        %v844 = vmul.f32 %v842, %v843
        %v845 = vsub.f32 1.0, %v844
        %v846 = vmul.f32 %v843, %v845
        %v847 = vadd.f32 %v843, %v846
        %vm848 = vweird.f32 %v842
        %vm849 = vweird.f32 %v843
        %vm850 = vmor %vm848, %vm849
        %v851 = vsel %vm850, %v843, %v847
        %v852 = vand.u32 2147483647, %v842
        %vm853 = vcmp.eq.f32.partialorder %v852, 8.507059e+37
        %v854 = vand.u32 %v842, 2147483648
        %v855 = vor.u32 1.1754944e-38, %v854
        %v856 = vsel %vm853, %v855, %v851
        %v857 = vmul.f32 %v839, %v856
        %858 = vrot.lane.b32.xlu0 %v671, 64
        %v859 = vpop.permute.xlu0 %858
        %v862 = vsel %vm681, %v857, 0
        %864 = vmatpush.msra.mxu0 0.0
        %865 = vmatpush.msra.mxu0 0.0
        %866 = vmatpush.msra.mxu0 0.0
        %867 = vmatpush.msra.mxu0 0.0
        %868 = vmatpush.msra.mxu0 0.0
        %869 = vmatpush.msra.mxu0 0.0
        %870 = vmatpush.msra.mxu0 0.0
        %871 = vmatpush.msra.mxu0 0.0
        %872 = vmatpush.msra.mxu0 0.0
        %873 = vmatpush.msra.mxu0 0.0
        %874 = vmatpush.msra.mxu0 0.0
        %875 = vmatpush.msra.mxu0 0.0
        %876 = vmatpush.msra.mxu0 0.0
        %877 = vmatpush.msra.mxu0 0.0
        %878 = vmatpush.msra.mxu0 0.0
        %v879 = vand.u32 %v859, 4294901760
        %880 = vmatpush.msra.mxu0 %v879
        %v881 = vand.u32 %v862, 4294901760
        %v882 = vsub.f32 %v862, %v881
        %v883 = vand.u32 %v882, 4294901760
        %v884 = vsub.f32 %v882, %v883
        %v885 = vand.u32 %v884, 4294901760
        %886 = vmatmul.f32.gmra.mxu0 %v885
        %v887 = vpop.f32.mrf.mxu0
        %v888 = vadd.f32 0.0, %v887
        %889 = vdwg.mxu0
        %890 = vmatpush.msra.mxu0 0.0
        %891 = vmatpush.msra.mxu0 0.0
        %892 = vmatpush.msra.mxu0 0.0
        %893 = vmatpush.msra.mxu0 0.0
        %894 = vmatpush.msra.mxu0 0.0
        %895 = vmatpush.msra.mxu0 0.0
        %896 = vmatpush.msra.mxu0 0.0
        %897 = vmatpush.msra.mxu0 0.0
        %898 = vmatpush.msra.mxu0 0.0
        %899 = vmatpush.msra.mxu0 0.0
        %900 = vmatpush.msra.mxu0 0.0
        %901 = vmatpush.msra.mxu0 0.0
        %902 = vmatpush.msra.mxu0 0.0
        %903 = vmatpush.msra.mxu0 0.0
        %904 = vmatpush.msra.mxu0 0.0
        %v905 = vand.u32 %v859, 4294901760
        %v906 = vsub.f32 %v859, %v905
        %v907 = vand.u32 %v906, 4294901760
        %v908 = vsub.f32 %v906, %v907
        %v909 = vand.u32 %v908, 4294901760
        %910 = vmatpush.msra.mxu0 %v909
        %v911 = vand.u32 %v862, 4294901760
        %912 = vmatmul.f32.gmra.mxu0 %v911
        %v913 = vpop.f32.mrf.mxu0
        %v914 = vadd.f32 %v888, %v913
        %915 = vdwg.mxu0
        %916 = vmatpush.msra.mxu0 0.0
        %917 = vmatpush.msra.mxu0 0.0
        %918 = vmatpush.msra.mxu0 0.0
        %919 = vmatpush.msra.mxu0 0.0
        %920 = vmatpush.msra.mxu0 0.0
        %921 = vmatpush.msra.mxu0 0.0
        %922 = vmatpush.msra.mxu0 0.0
        %923 = vmatpush.msra.mxu0 0.0
        %924 = vmatpush.msra.mxu0 0.0
        %925 = vmatpush.msra.mxu0 0.0
        %926 = vmatpush.msra.mxu0 0.0
        %927 = vmatpush.msra.mxu0 0.0
        %928 = vmatpush.msra.mxu0 0.0
        %929 = vmatpush.msra.mxu0 0.0
        %930 = vmatpush.msra.mxu0 0.0
        %v931 = vand.u32 %v859, 4294901760
        %v932 = vsub.f32 %v859, %v931
        %933 = vmatpush.msra.mxu0 %v932
        %v934 = vand.u32 %v862, 4294901760
        %v935 = vsub.f32 %v862, %v934
        %936 = vmatmul.f32.gmra.mxu0 %v935
        %v937 = vpop.f32.mrf.mxu0
        %v938 = vadd.f32 %v914, %v937
        %939 = vdwg.mxu0
        %940 = vmatpush.msra.mxu0 0.0
        %941 = vmatpush.msra.mxu0 0.0
        %942 = vmatpush.msra.mxu0 0.0
        %943 = vmatpush.msra.mxu0 0.0
        %944 = vmatpush.msra.mxu0 0.0
        %945 = vmatpush.msra.mxu0 0.0
        %946 = vmatpush.msra.mxu0 0.0
        %947 = vmatpush.msra.mxu0 0.0
        %948 = vmatpush.msra.mxu0 0.0
        %949 = vmatpush.msra.mxu0 0.0
        %950 = vmatpush.msra.mxu0 0.0
        %951 = vmatpush.msra.mxu0 0.0
        %952 = vmatpush.msra.mxu0 0.0
        %953 = vmatpush.msra.mxu0 0.0
        %954 = vmatpush.msra.mxu0 0.0
        %v955 = vand.u32 %v859, 4294901760
        %956 = vmatpush.msra.mxu0 %v955
        %v957 = vand.u32 %v862, 4294901760
        %v958 = vsub.f32 %v862, %v957
        %v959 = vand.u32 %v958, 4294901760
        %960 = vmatmul.f32.gmra.mxu0 %v959
        %v961 = vpop.f32.mrf.mxu0
        %v962 = vadd.f32 %v938, %v961
        %963 = vdwg.mxu0
        %964 = vmatpush.msra.mxu0 0.0
        %965 = vmatpush.msra.mxu0 0.0
        %966 = vmatpush.msra.mxu0 0.0
        %967 = vmatpush.msra.mxu0 0.0
        %968 = vmatpush.msra.mxu0 0.0
        %969 = vmatpush.msra.mxu0 0.0
        %970 = vmatpush.msra.mxu0 0.0
        %971 = vmatpush.msra.mxu0 0.0
        %972 = vmatpush.msra.mxu0 0.0
        %973 = vmatpush.msra.mxu0 0.0
        %974 = vmatpush.msra.mxu0 0.0
        %975 = vmatpush.msra.mxu0 0.0
        %976 = vmatpush.msra.mxu0 0.0
        %977 = vmatpush.msra.mxu0 0.0
        %978 = vmatpush.msra.mxu0 0.0
        %v979 = vand.u32 %v859, 4294901760
        %v980 = vsub.f32 %v859, %v979
        %v981 = vand.u32 %v980, 4294901760
        %982 = vmatpush.msra.mxu0 %v981
        %v983 = vand.u32 %v862, 4294901760
        %984 = vmatmul.f32.gmra.mxu0 %v983
        %v985 = vpop.f32.mrf.mxu0
        %v986 = vadd.f32 %v962, %v985
        %987 = vdwg.mxu0
        %988 = vmatpush.msra.mxu0 0.0
        %989 = vmatpush.msra.mxu0 0.0
        %990 = vmatpush.msra.mxu0 0.0
        %991 = vmatpush.msra.mxu0 0.0
        %992 = vmatpush.msra.mxu0 0.0
        %993 = vmatpush.msra.mxu0 0.0
        %994 = vmatpush.msra.mxu0 0.0
        %995 = vmatpush.msra.mxu0 0.0
        %996 = vmatpush.msra.mxu0 0.0
        %997 = vmatpush.msra.mxu0 0.0
        %998 = vmatpush.msra.mxu0 0.0
        %999 = vmatpush.msra.mxu0 0.0
        %1000 = vmatpush.msra.mxu0 0.0
        %1001 = vmatpush.msra.mxu0 0.0
        %1002 = vmatpush.msra.mxu0 0.0
        %v1003 = vand.u32 %v859, 4294901760
        %1004 = vmatpush.msra.mxu0 %v1003
        %v1005 = vand.u32 %v862, 4294901760
        %1006 = vmatmul.f32.gmra.mxu0 %v1005
        %v1007 = vpop.f32.mrf.mxu0
        %v1008 = vadd.f32 %v986, %v1007
        %1009 = vdwg.mxu0
        %1010 = vst.msk [vmem:[#allocation2] sm:$0xff] %vm681, %v1008
        %1011 = vrot.lane.b32.xlu0 %v671, 120
        %v1012 = vpop.permute.xlu0 %1011
        %1013 = vrot.lane.b32.xlu0 %v671, 88
        %v1014 = vpop.permute.xlu0 %1013
        %v1015 = vsel %vm681, %v1012, 0
        %v1017 = vsel %vm681, %v1014, 0
        %1019 = vmatpush.xpose.msra.mxu0 0.0
        %1020 = vmatpush.xpose.msra.mxu0 0.0
        %1021 = vmatpush.xpose.msra.mxu0 0.0
        %1022 = vmatpush.xpose.msra.mxu0 0.0
        %1023 = vmatpush.xpose.msra.mxu0 0.0
        %1024 = vmatpush.xpose.msra.mxu0 0.0
        %1025 = vmatpush.xpose.msra.mxu0 0.0
        %1026 = vmatpush.xpose.msra.mxu0 0.0
        %1027 = vmatpush.xpose.msra.mxu0 0.0
        %1028 = vmatpush.xpose.msra.mxu0 0.0
        %1029 = vmatpush.xpose.msra.mxu0 0.0
        %1030 = vmatpush.xpose.msra.mxu0 0.0
        %1031 = vmatpush.xpose.msra.mxu0 0.0
        %1032 = vmatpush.xpose.msra.mxu0 0.0
        %1033 = vmatpush.xpose.msra.mxu0 0.0
        %v1034 = vand.u32 %v1017, 4294901760
        %1035 = vmatpush.xpose.msra.mxu0 %v1034
        %v1036 = vand.u32 %v1015, 4294901760
        %v1037 = vsub.f32 %v1015, %v1036
        %v1038 = vand.u32 %v1037, 4294901760
        %v1039 = vsub.f32 %v1037, %v1038
        %v1040 = vand.u32 %v1039, 4294901760
        %1041 = vmatmul.f32.gmra.mxu0 %v1040
        %v1042 = vpop.f32.mrf.mxu0
        %v1043 = vadd.f32 0.0, %v1042
        %1044 = vdwg.mxu0
        %1045 = vmatpush.xpose.msra.mxu0 0.0
        %1046 = vmatpush.xpose.msra.mxu0 0.0
        %1047 = vmatpush.xpose.msra.mxu0 0.0
        %1048 = vmatpush.xpose.msra.mxu0 0.0
        %1049 = vmatpush.xpose.msra.mxu0 0.0
        %1050 = vmatpush.xpose.msra.mxu0 0.0
        %1051 = vmatpush.xpose.msra.mxu0 0.0
        %1052 = vmatpush.xpose.msra.mxu0 0.0
        %1053 = vmatpush.xpose.msra.mxu0 0.0
        %1054 = vmatpush.xpose.msra.mxu0 0.0
        %1055 = vmatpush.xpose.msra.mxu0 0.0
        %1056 = vmatpush.xpose.msra.mxu0 0.0
        %1057 = vmatpush.xpose.msra.mxu0 0.0
        %1058 = vmatpush.xpose.msra.mxu0 0.0
        %1059 = vmatpush.xpose.msra.mxu0 0.0
        %v1060 = vand.u32 %v1017, 4294901760
        %v1061 = vsub.f32 %v1017, %v1060
        %v1062 = vand.u32 %v1061, 4294901760
        %v1063 = vsub.f32 %v1061, %v1062
        %v1064 = vand.u32 %v1063, 4294901760
        %1065 = vmatpush.xpose.msra.mxu0 %v1064
        %v1066 = vand.u32 %v1015, 4294901760
        %1067 = vmatmul.f32.gmra.mxu0 %v1066
        %v1068 = vpop.f32.mrf.mxu0
        %v1069 = vadd.f32 %v1043, %v1068
        %1070 = vdwg.mxu0
        %1071 = vmatpush.xpose.msra.mxu0 0.0
        %1072 = vmatpush.xpose.msra.mxu0 0.0
        %1073 = vmatpush.xpose.msra.mxu0 0.0
        %1074 = vmatpush.xpose.msra.mxu0 0.0
        %1075 = vmatpush.xpose.msra.mxu0 0.0
        %1076 = vmatpush.xpose.msra.mxu0 0.0
        %1077 = vmatpush.xpose.msra.mxu0 0.0
        %1078 = vmatpush.xpose.msra.mxu0 0.0
        %1079 = vmatpush.xpose.msra.mxu0 0.0
        %1080 = vmatpush.xpose.msra.mxu0 0.0
        %1081 = vmatpush.xpose.msra.mxu0 0.0
        %1082 = vmatpush.xpose.msra.mxu0 0.0
        %1083 = vmatpush.xpose.msra.mxu0 0.0
        %1084 = vmatpush.xpose.msra.mxu0 0.0
        %1085 = vmatpush.xpose.msra.mxu0 0.0
        %v1086 = vand.u32 %v1017, 4294901760
        %v1087 = vsub.f32 %v1017, %v1086
        %1088 = vmatpush.xpose.msra.mxu0 %v1087
        %v1089 = vand.u32 %v1015, 4294901760
        %v1090 = vsub.f32 %v1015, %v1089
        %1091 = vmatmul.f32.gmra.mxu0 %v1090
        %v1092 = vpop.f32.mrf.mxu0
        %v1093 = vadd.f32 %v1069, %v1092
        %1094 = vdwg.mxu0
        %1095 = vmatpush.xpose.msra.mxu0 0.0
        %1096 = vmatpush.xpose.msra.mxu0 0.0
        %1097 = vmatpush.xpose.msra.mxu0 0.0
        %1098 = vmatpush.xpose.msra.mxu0 0.0
        %1099 = vmatpush.xpose.msra.mxu0 0.0
        %1100 = vmatpush.xpose.msra.mxu0 0.0
        %1101 = vmatpush.xpose.msra.mxu0 0.0
        %1102 = vmatpush.xpose.msra.mxu0 0.0
        %1103 = vmatpush.xpose.msra.mxu0 0.0
        %1104 = vmatpush.xpose.msra.mxu0 0.0
        %1105 = vmatpush.xpose.msra.mxu0 0.0
        %1106 = vmatpush.xpose.msra.mxu0 0.0
        %1107 = vmatpush.xpose.msra.mxu0 0.0
        %1108 = vmatpush.xpose.msra.mxu0 0.0
        %1109 = vmatpush.xpose.msra.mxu0 0.0
        %v1110 = vand.u32 %v1017, 4294901760
        %1111 = vmatpush.xpose.msra.mxu0 %v1110
        %v1112 = vand.u32 %v1015, 4294901760
        %v1113 = vsub.f32 %v1015, %v1112
        %v1114 = vand.u32 %v1113, 4294901760
        %1115 = vmatmul.f32.gmra.mxu0 %v1114
        %v1116 = vpop.f32.mrf.mxu0
        %v1117 = vadd.f32 %v1093, %v1116
        %1118 = vdwg.mxu0
        %1119 = vmatpush.xpose.msra.mxu0 0.0
        %1120 = vmatpush.xpose.msra.mxu0 0.0
        %1121 = vmatpush.xpose.msra.mxu0 0.0
        %1122 = vmatpush.xpose.msra.mxu0 0.0
        %1123 = vmatpush.xpose.msra.mxu0 0.0
        %1124 = vmatpush.xpose.msra.mxu0 0.0
        %1125 = vmatpush.xpose.msra.mxu0 0.0
        %1126 = vmatpush.xpose.msra.mxu0 0.0
        %1127 = vmatpush.xpose.msra.mxu0 0.0
        %1128 = vmatpush.xpose.msra.mxu0 0.0
        %1129 = vmatpush.xpose.msra.mxu0 0.0
        %1130 = vmatpush.xpose.msra.mxu0 0.0
        %1131 = vmatpush.xpose.msra.mxu0 0.0
        %1132 = vmatpush.xpose.msra.mxu0 0.0
        %1133 = vmatpush.xpose.msra.mxu0 0.0
        %v1134 = vand.u32 %v1017, 4294901760
        %v1135 = vsub.f32 %v1017, %v1134
        %v1136 = vand.u32 %v1135, 4294901760
        %1137 = vmatpush.xpose.msra.mxu0 %v1136
        %v1138 = vand.u32 %v1015, 4294901760
        %1139 = vmatmul.f32.gmra.mxu0 %v1138
        %v1140 = vpop.f32.mrf.mxu0
        %v1141 = vadd.f32 %v1117, %v1140
        %1142 = vdwg.mxu0
        %1143 = vmatpush.xpose.msra.mxu0 0.0
        %1144 = vmatpush.xpose.msra.mxu0 0.0
        %1145 = vmatpush.xpose.msra.mxu0 0.0
        %1146 = vmatpush.xpose.msra.mxu0 0.0
        %1147 = vmatpush.xpose.msra.mxu0 0.0
        %1148 = vmatpush.xpose.msra.mxu0 0.0
        %1149 = vmatpush.xpose.msra.mxu0 0.0
        %1150 = vmatpush.xpose.msra.mxu0 0.0
        %1151 = vmatpush.xpose.msra.mxu0 0.0
        %1152 = vmatpush.xpose.msra.mxu0 0.0
        %1153 = vmatpush.xpose.msra.mxu0 0.0
        %1154 = vmatpush.xpose.msra.mxu0 0.0
        %1155 = vmatpush.xpose.msra.mxu0 0.0
        %1156 = vmatpush.xpose.msra.mxu0 0.0
        %1157 = vmatpush.xpose.msra.mxu0 0.0
        %v1158 = vand.u32 %v1017, 4294901760
        %1159 = vmatpush.xpose.msra.mxu0 %v1158
        %v1160 = vand.u32 %v1015, 4294901760
        %1161 = vmatmul.f32.gmra.mxu0 %v1160
        %v1162 = vpop.f32.mrf.mxu0
        %v1163 = vadd.f32 %v1141, %v1162
        %1164 = vdwg.mxu0
        %v1165 = vmul.f32 %v1163, 0.35355338
        %v1166 = vsel %vm677, %v1165, -1e+30
        %v1167 = vsel %vm681, %v1166, -inf
        %1168 = vmax.xlane.f32.xlu0 %v1167
        %v1169 = vpop.xlane.xlu0 %1168
        %v1170 = vsub.f32 %v1166, %v1169
        %v1171 = vmul.f32 %v1170, 1.442695
        %v1172 = vpow.pop %v1171
        %v1173 = vsel %vm681, %v1172, 0.0
        %1174 = vadd.xlane.f32.xlu0 %v1173
        %v1175 = vpop.xlane.xlu0 %1174
        %v1176 = vrcp.pop %v1175
        %v1177 = vmul.f32 %v1175, %v1176
        %v1178 = vsub.f32 1.0, %v1177
        %v1179 = vmul.f32 %v1176, %v1178
        %v1180 = vadd.f32 %v1176, %v1179
        %vm1181 = vweird.f32 %v1175
        %vm1182 = vweird.f32 %v1176
        %vm1183 = vmor %vm1181, %vm1182
        %v1184 = vsel %vm1183, %v1176, %v1180
        %v1185 = vand.u32 2147483647, %v1175
        %vm1186 = vcmp.eq.f32.partialorder %v1185, 8.507059e+37
        %v1187 = vand.u32 %v1175, 2147483648
        %v1188 = vor.u32 1.1754944e-38, %v1187
        %v1189 = vsel %vm1186, %v1188, %v1184
        %v1190 = vmul.f32 %v1172, %v1189
        %1191 = vrot.lane.b32.xlu0 %v671, 56
        %v1192 = vpop.permute.xlu0 %1191
        %v1195 = vsel %vm681, %v1190, 0
        %1197 = vmatpush.msra.mxu0 0.0
        %1198 = vmatpush.msra.mxu0 0.0
        %1199 = vmatpush.msra.mxu0 0.0
        %1200 = vmatpush.msra.mxu0 0.0
        %1201 = vmatpush.msra.mxu0 0.0
        %1202 = vmatpush.msra.mxu0 0.0
        %1203 = vmatpush.msra.mxu0 0.0
        %1204 = vmatpush.msra.mxu0 0.0
        %1205 = vmatpush.msra.mxu0 0.0
        %1206 = vmatpush.msra.mxu0 0.0
        %1207 = vmatpush.msra.mxu0 0.0
        %1208 = vmatpush.msra.mxu0 0.0
        %1209 = vmatpush.msra.mxu0 0.0
        %1210 = vmatpush.msra.mxu0 0.0
        %1211 = vmatpush.msra.mxu0 0.0
        %v1212 = vand.u32 %v1192, 4294901760
        %1213 = vmatpush.msra.mxu0 %v1212
        %v1214 = vand.u32 %v1195, 4294901760
        %v1215 = vsub.f32 %v1195, %v1214
        %v1216 = vand.u32 %v1215, 4294901760
        %v1217 = vsub.f32 %v1215, %v1216
        %v1218 = vand.u32 %v1217, 4294901760
        %1219 = vmatmul.f32.gmra.mxu0 %v1218
        %v1220 = vpop.f32.mrf.mxu0
        %v1221 = vadd.f32 0.0, %v1220
        %1222 = vdwg.mxu0
        %1223 = vmatpush.msra.mxu0 0.0
        %1224 = vmatpush.msra.mxu0 0.0
        %1225 = vmatpush.msra.mxu0 0.0
        %1226 = vmatpush.msra.mxu0 0.0
        %1227 = vmatpush.msra.mxu0 0.0
        %1228 = vmatpush.msra.mxu0 0.0
        %1229 = vmatpush.msra.mxu0 0.0
        %1230 = vmatpush.msra.mxu0 0.0
        %1231 = vmatpush.msra.mxu0 0.0
        %1232 = vmatpush.msra.mxu0 0.0
        %1233 = vmatpush.msra.mxu0 0.0
        %1234 = vmatpush.msra.mxu0 0.0
        %1235 = vmatpush.msra.mxu0 0.0
        %1236 = vmatpush.msra.mxu0 0.0
        %1237 = vmatpush.msra.mxu0 0.0
        %v1238 = vand.u32 %v1192, 4294901760
        %v1239 = vsub.f32 %v1192, %v1238
        %v1240 = vand.u32 %v1239, 4294901760
        %v1241 = vsub.f32 %v1239, %v1240
        %v1242 = vand.u32 %v1241, 4294901760
        %1243 = vmatpush.msra.mxu0 %v1242
        %v1244 = vand.u32 %v1195, 4294901760
        %1245 = vmatmul.f32.gmra.mxu0 %v1244
        %v1246 = vpop.f32.mrf.mxu0
        %v1247 = vadd.f32 %v1221, %v1246
        %1248 = vdwg.mxu0
        %1249 = vmatpush.msra.mxu0 0.0
        %1250 = vmatpush.msra.mxu0 0.0
        %1251 = vmatpush.msra.mxu0 0.0
        %1252 = vmatpush.msra.mxu0 0.0
        %1253 = vmatpush.msra.mxu0 0.0
        %1254 = vmatpush.msra.mxu0 0.0
        %1255 = vmatpush.msra.mxu0 0.0
        %1256 = vmatpush.msra.mxu0 0.0
        %1257 = vmatpush.msra.mxu0 0.0
        %1258 = vmatpush.msra.mxu0 0.0
        %1259 = vmatpush.msra.mxu0 0.0
        %1260 = vmatpush.msra.mxu0 0.0
        %1261 = vmatpush.msra.mxu0 0.0
        %1262 = vmatpush.msra.mxu0 0.0
        %1263 = vmatpush.msra.mxu0 0.0
        %v1264 = vand.u32 %v1192, 4294901760
        %v1265 = vsub.f32 %v1192, %v1264
        %1266 = vmatpush.msra.mxu0 %v1265
        %v1267 = vand.u32 %v1195, 4294901760
        %v1268 = vsub.f32 %v1195, %v1267
        %1269 = vmatmul.f32.gmra.mxu0 %v1268
        %v1270 = vpop.f32.mrf.mxu0
        %v1271 = vadd.f32 %v1247, %v1270
        %1272 = vdwg.mxu0
        %1273 = vmatpush.msra.mxu0 0.0
        %1274 = vmatpush.msra.mxu0 0.0
        %1275 = vmatpush.msra.mxu0 0.0
        %1276 = vmatpush.msra.mxu0 0.0
        %1277 = vmatpush.msra.mxu0 0.0
        %1278 = vmatpush.msra.mxu0 0.0
        %1279 = vmatpush.msra.mxu0 0.0
        %1280 = vmatpush.msra.mxu0 0.0
        %1281 = vmatpush.msra.mxu0 0.0
        %1282 = vmatpush.msra.mxu0 0.0
        %1283 = vmatpush.msra.mxu0 0.0
        %1284 = vmatpush.msra.mxu0 0.0
        %1285 = vmatpush.msra.mxu0 0.0
        %1286 = vmatpush.msra.mxu0 0.0
        %1287 = vmatpush.msra.mxu0 0.0
        %v1288 = vand.u32 %v1192, 4294901760
        %1289 = vmatpush.msra.mxu0 %v1288
        %v1290 = vand.u32 %v1195, 4294901760
        %v1291 = vsub.f32 %v1195, %v1290
        %v1292 = vand.u32 %v1291, 4294901760
        %1293 = vmatmul.f32.gmra.mxu0 %v1292
        %v1294 = vpop.f32.mrf.mxu0
        %v1295 = vadd.f32 %v1271, %v1294
        %1296 = vdwg.mxu0
        %1297 = vmatpush.msra.mxu0 0.0
        %1298 = vmatpush.msra.mxu0 0.0
        %1299 = vmatpush.msra.mxu0 0.0
        %1300 = vmatpush.msra.mxu0 0.0
        %1301 = vmatpush.msra.mxu0 0.0
        %1302 = vmatpush.msra.mxu0 0.0
        %1303 = vmatpush.msra.mxu0 0.0
        %1304 = vmatpush.msra.mxu0 0.0
        %1305 = vmatpush.msra.mxu0 0.0
        %1306 = vmatpush.msra.mxu0 0.0
        %1307 = vmatpush.msra.mxu0 0.0
        %1308 = vmatpush.msra.mxu0 0.0
        %1309 = vmatpush.msra.mxu0 0.0
        %1310 = vmatpush.msra.mxu0 0.0
        %1311 = vmatpush.msra.mxu0 0.0
        %v1312 = vand.u32 %v1192, 4294901760
        %v1313 = vsub.f32 %v1192, %v1312
        %v1314 = vand.u32 %v1313, 4294901760
        %1315 = vmatpush.msra.mxu0 %v1314
        %v1316 = vand.u32 %v1195, 4294901760
        %1317 = vmatmul.f32.gmra.mxu0 %v1316
        %v1318 = vpop.f32.mrf.mxu0
        %v1319 = vadd.f32 %v1295, %v1318
        %1320 = vdwg.mxu0
        %1321 = vmatpush.msra.mxu0 0.0
        %1322 = vmatpush.msra.mxu0 0.0
        %1323 = vmatpush.msra.mxu0 0.0
        %1324 = vmatpush.msra.mxu0 0.0
        %1325 = vmatpush.msra.mxu0 0.0
        %1326 = vmatpush.msra.mxu0 0.0
        %1327 = vmatpush.msra.mxu0 0.0
        %1328 = vmatpush.msra.mxu0 0.0
        %1329 = vmatpush.msra.mxu0 0.0
        %1330 = vmatpush.msra.mxu0 0.0
        %1331 = vmatpush.msra.mxu0 0.0
        %1332 = vmatpush.msra.mxu0 0.0
        %1333 = vmatpush.msra.mxu0 0.0
        %1334 = vmatpush.msra.mxu0 0.0
        %1335 = vmatpush.msra.mxu0 0.0
        %v1336 = vand.u32 %v1192, 4294901760
        %1337 = vmatpush.msra.mxu0 %v1336
        %v1338 = vand.u32 %v1195, 4294901760
        %1339 = vmatmul.f32.gmra.mxu0 %v1338
        %v1340 = vpop.f32.mrf.mxu0
        %v1341 = vadd.f32 %v1319, %v1340
        %1342 = vdwg.mxu0
        %1344 = vrot.lane.b32.xlu0 %v1341, 8
        %v1345 = vpop.permute.xlu0 %1344
        %vm1347 = vcmask 130112
        %1348 = vst.msk [vmem:[#allocation2] sm:$0xff] %vm1347, %v1345
        %1349 = vrot.lane.b32.xlu0 %v671, 112
        %v1350 = vpop.permute.xlu0 %1349
        %1351 = vrot.lane.b32.xlu0 %v671, 80
        %v1352 = vpop.permute.xlu0 %1351
        %v1353 = vsel %vm681, %v1350, 0
        %v1355 = vsel %vm681, %v1352, 0
        %1357 = vmatpush.xpose.msra.mxu0 0.0
        %1358 = vmatpush.xpose.msra.mxu0 0.0
        %1359 = vmatpush.xpose.msra.mxu0 0.0
        %1360 = vmatpush.xpose.msra.mxu0 0.0
        %1361 = vmatpush.xpose.msra.mxu0 0.0
        %1362 = vmatpush.xpose.msra.mxu0 0.0
        %1363 = vmatpush.xpose.msra.mxu0 0.0
        %1364 = vmatpush.xpose.msra.mxu0 0.0
        %1365 = vmatpush.xpose.msra.mxu0 0.0
        %1366 = vmatpush.xpose.msra.mxu0 0.0
        %1367 = vmatpush.xpose.msra.mxu0 0.0
        %1368 = vmatpush.xpose.msra.mxu0 0.0
        %1369 = vmatpush.xpose.msra.mxu0 0.0
        %1370 = vmatpush.xpose.msra.mxu0 0.0
        %1371 = vmatpush.xpose.msra.mxu0 0.0
        %v1372 = vand.u32 %v1355, 4294901760
        %1373 = vmatpush.xpose.msra.mxu0 %v1372
        %v1374 = vand.u32 %v1353, 4294901760
        %v1375 = vsub.f32 %v1353, %v1374
        %v1376 = vand.u32 %v1375, 4294901760
        %v1377 = vsub.f32 %v1375, %v1376
        %v1378 = vand.u32 %v1377, 4294901760
        %1379 = vmatmul.f32.gmra.mxu0 %v1378
        %v1380 = vpop.f32.mrf.mxu0
        %v1381 = vadd.f32 0.0, %v1380
        %1382 = vdwg.mxu0
        %1383 = vmatpush.xpose.msra.mxu0 0.0
        %1384 = vmatpush.xpose.msra.mxu0 0.0
        %1385 = vmatpush.xpose.msra.mxu0 0.0
        %1386 = vmatpush.xpose.msra.mxu0 0.0
        %1387 = vmatpush.xpose.msra.mxu0 0.0
        %1388 = vmatpush.xpose.msra.mxu0 0.0
        %1389 = vmatpush.xpose.msra.mxu0 0.0
        %1390 = vmatpush.xpose.msra.mxu0 0.0
        %1391 = vmatpush.xpose.msra.mxu0 0.0
        %1392 = vmatpush.xpose.msra.mxu0 0.0
        %1393 = vmatpush.xpose.msra.mxu0 0.0
        %1394 = vmatpush.xpose.msra.mxu0 0.0
        %1395 = vmatpush.xpose.msra.mxu0 0.0
        %1396 = vmatpush.xpose.msra.mxu0 0.0
        %1397 = vmatpush.xpose.msra.mxu0 0.0
        %v1398 = vand.u32 %v1355, 4294901760
        %v1399 = vsub.f32 %v1355, %v1398
        %v1400 = vand.u32 %v1399, 4294901760
        %v1401 = vsub.f32 %v1399, %v1400
        %v1402 = vand.u32 %v1401, 4294901760
        %1403 = vmatpush.xpose.msra.mxu0 %v1402
        %v1404 = vand.u32 %v1353, 4294901760
        %1405 = vmatmul.f32.gmra.mxu0 %v1404
        %v1406 = vpop.f32.mrf.mxu0
        %v1407 = vadd.f32 %v1381, %v1406
        %1408 = vdwg.mxu0
        %1409 = vmatpush.xpose.msra.mxu0 0.0
        %1410 = vmatpush.xpose.msra.mxu0 0.0
        %1411 = vmatpush.xpose.msra.mxu0 0.0
        %1412 = vmatpush.xpose.msra.mxu0 0.0
        %1413 = vmatpush.xpose.msra.mxu0 0.0
        %1414 = vmatpush.xpose.msra.mxu0 0.0
        %1415 = vmatpush.xpose.msra.mxu0 0.0
        %1416 = vmatpush.xpose.msra.mxu0 0.0
        %1417 = vmatpush.xpose.msra.mxu0 0.0
        %1418 = vmatpush.xpose.msra.mxu0 0.0
        %1419 = vmatpush.xpose.msra.mxu0 0.0
        %1420 = vmatpush.xpose.msra.mxu0 0.0
        %1421 = vmatpush.xpose.msra.mxu0 0.0
        %1422 = vmatpush.xpose.msra.mxu0 0.0
        %1423 = vmatpush.xpose.msra.mxu0 0.0
        %v1424 = vand.u32 %v1355, 4294901760
        %v1425 = vsub.f32 %v1355, %v1424
        %1426 = vmatpush.xpose.msra.mxu0 %v1425
        %v1427 = vand.u32 %v1353, 4294901760
        %v1428 = vsub.f32 %v1353, %v1427
        %1429 = vmatmul.f32.gmra.mxu0 %v1428
        %v1430 = vpop.f32.mrf.mxu0
        %v1431 = vadd.f32 %v1407, %v1430
        %1432 = vdwg.mxu0
        %1433 = vmatpush.xpose.msra.mxu0 0.0
        %1434 = vmatpush.xpose.msra.mxu0 0.0
        %1435 = vmatpush.xpose.msra.mxu0 0.0
        %1436 = vmatpush.xpose.msra.mxu0 0.0
        %1437 = vmatpush.xpose.msra.mxu0 0.0
        %1438 = vmatpush.xpose.msra.mxu0 0.0
        %1439 = vmatpush.xpose.msra.mxu0 0.0
        %1440 = vmatpush.xpose.msra.mxu0 0.0
        %1441 = vmatpush.xpose.msra.mxu0 0.0
        %1442 = vmatpush.xpose.msra.mxu0 0.0
        %1443 = vmatpush.xpose.msra.mxu0 0.0
        %1444 = vmatpush.xpose.msra.mxu0 0.0
        %1445 = vmatpush.xpose.msra.mxu0 0.0
        %1446 = vmatpush.xpose.msra.mxu0 0.0
        %1447 = vmatpush.xpose.msra.mxu0 0.0
        %v1448 = vand.u32 %v1355, 4294901760
        %1449 = vmatpush.xpose.msra.mxu0 %v1448
        %v1450 = vand.u32 %v1353, 4294901760
        %v1451 = vsub.f32 %v1353, %v1450
        %v1452 = vand.u32 %v1451, 4294901760
        %1453 = vmatmul.f32.gmra.mxu0 %v1452
        %v1454 = vpop.f32.mrf.mxu0
        %v1455 = vadd.f32 %v1431, %v1454
        %1456 = vdwg.mxu0
        %1457 = vmatpush.xpose.msra.mxu0 0.0
        %1458 = vmatpush.xpose.msra.mxu0 0.0
        %1459 = vmatpush.xpose.msra.mxu0 0.0
        %1460 = vmatpush.xpose.msra.mxu0 0.0
        %1461 = vmatpush.xpose.msra.mxu0 0.0
        %1462 = vmatpush.xpose.msra.mxu0 0.0
        %1463 = vmatpush.xpose.msra.mxu0 0.0
        %1464 = vmatpush.xpose.msra.mxu0 0.0
        %1465 = vmatpush.xpose.msra.mxu0 0.0
        %1466 = vmatpush.xpose.msra.mxu0 0.0
        %1467 = vmatpush.xpose.msra.mxu0 0.0
        %1468 = vmatpush.xpose.msra.mxu0 0.0
        %1469 = vmatpush.xpose.msra.mxu0 0.0
        %1470 = vmatpush.xpose.msra.mxu0 0.0
        %1471 = vmatpush.xpose.msra.mxu0 0.0
        %v1472 = vand.u32 %v1355, 4294901760
        %v1473 = vsub.f32 %v1355, %v1472
        %v1474 = vand.u32 %v1473, 4294901760
        %1475 = vmatpush.xpose.msra.mxu0 %v1474
        %v1476 = vand.u32 %v1353, 4294901760
        %1477 = vmatmul.f32.gmra.mxu0 %v1476
        %v1478 = vpop.f32.mrf.mxu0
        %v1479 = vadd.f32 %v1455, %v1478
        %1480 = vdwg.mxu0
        %1481 = vmatpush.xpose.msra.mxu0 0.0
        %1482 = vmatpush.xpose.msra.mxu0 0.0
        %1483 = vmatpush.xpose.msra.mxu0 0.0
        %1484 = vmatpush.xpose.msra.mxu0 0.0
        %1485 = vmatpush.xpose.msra.mxu0 0.0
        %1486 = vmatpush.xpose.msra.mxu0 0.0
        %1487 = vmatpush.xpose.msra.mxu0 0.0
        %1488 = vmatpush.xpose.msra.mxu0 0.0
        %1489 = vmatpush.xpose.msra.mxu0 0.0
        %1490 = vmatpush.xpose.msra.mxu0 0.0
        %1491 = vmatpush.xpose.msra.mxu0 0.0
        %1492 = vmatpush.xpose.msra.mxu0 0.0
        %1493 = vmatpush.xpose.msra.mxu0 0.0
        %1494 = vmatpush.xpose.msra.mxu0 0.0
        %1495 = vmatpush.xpose.msra.mxu0 0.0
        %v1496 = vand.u32 %v1355, 4294901760
        %1497 = vmatpush.xpose.msra.mxu0 %v1496
        %v1498 = vand.u32 %v1353, 4294901760
        %1499 = vmatmul.f32.gmra.mxu0 %v1498
        %v1500 = vpop.f32.mrf.mxu0
        %v1501 = vadd.f32 %v1479, %v1500
        %1502 = vdwg.mxu0
        %v1503 = vmul.f32 %v1501, 0.35355338
        %v1504 = vsel %vm677, %v1503, -1e+30
        %v1505 = vsel %vm681, %v1504, -inf
        %1506 = vmax.xlane.f32.xlu0 %v1505
        %v1507 = vpop.xlane.xlu0 %1506
        %v1508 = vsub.f32 %v1504, %v1507
        %v1509 = vmul.f32 %v1508, 1.442695
        %v1510 = vpow.pop %v1509
        %v1511 = vsel %vm681, %v1510, 0.0
        %1512 = vadd.xlane.f32.xlu0 %v1511
        %v1513 = vpop.xlane.xlu0 %1512
        %v1514 = vrcp.pop %v1513
        %v1515 = vmul.f32 %v1513, %v1514
        %v1516 = vsub.f32 1.0, %v1515
        %v1517 = vmul.f32 %v1514, %v1516
        %v1518 = vadd.f32 %v1514, %v1517
        %vm1519 = vweird.f32 %v1513
        %vm1520 = vweird.f32 %v1514
        %vm1521 = vmor %vm1519, %vm1520
        %v1522 = vsel %vm1521, %v1514, %v1518
        %v1523 = vand.u32 2147483647, %v1513
        %vm1524 = vcmp.eq.f32.partialorder %v1523, 8.507059e+37
        %v1525 = vand.u32 %v1513, 2147483648
        %v1526 = vor.u32 1.1754944e-38, %v1525
        %v1527 = vsel %vm1524, %v1526, %v1522
        %v1528 = vmul.f32 %v1510, %v1527
        %1529 = vrot.lane.b32.xlu0 %v671, 48
        %v1530 = vpop.permute.xlu0 %1529
        %v1533 = vsel %vm681, %v1528, 0
        %1535 = vmatpush.msra.mxu0 0.0
        %1536 = vmatpush.msra.mxu0 0.0
        %1537 = vmatpush.msra.mxu0 0.0
        %1538 = vmatpush.msra.mxu0 0.0
        %1539 = vmatpush.msra.mxu0 0.0
        %1540 = vmatpush.msra.mxu0 0.0
        %1541 = vmatpush.msra.mxu0 0.0
        %1542 = vmatpush.msra.mxu0 0.0
        %1543 = vmatpush.msra.mxu0 0.0
        %1544 = vmatpush.msra.mxu0 0.0
        %1545 = vmatpush.msra.mxu0 0.0
        %1546 = vmatpush.msra.mxu0 0.0
        %1547 = vmatpush.msra.mxu0 0.0
        %1548 = vmatpush.msra.mxu0 0.0
        %1549 = vmatpush.msra.mxu0 0.0
        %v1550 = vand.u32 %v1530, 4294901760
        %1551 = vmatpush.msra.mxu0 %v1550
        %v1552 = vand.u32 %v1533, 4294901760
        %v1553 = vsub.f32 %v1533, %v1552
        %v1554 = vand.u32 %v1553, 4294901760
        %v1555 = vsub.f32 %v1553, %v1554
        %v1556 = vand.u32 %v1555, 4294901760
        %1557 = vmatmul.f32.gmra.mxu0 %v1556
        %v1558 = vpop.f32.mrf.mxu0
        %v1559 = vadd.f32 0.0, %v1558
        %1560 = vdwg.mxu0
        %1561 = vmatpush.msra.mxu0 0.0
        %1562 = vmatpush.msra.mxu0 0.0
        %1563 = vmatpush.msra.mxu0 0.0
        %1564 = vmatpush.msra.mxu0 0.0
        %1565 = vmatpush.msra.mxu0 0.0
        %1566 = vmatpush.msra.mxu0 0.0
        %1567 = vmatpush.msra.mxu0 0.0
        %1568 = vmatpush.msra.mxu0 0.0
        %1569 = vmatpush.msra.mxu0 0.0
        %1570 = vmatpush.msra.mxu0 0.0
        %1571 = vmatpush.msra.mxu0 0.0
        %1572 = vmatpush.msra.mxu0 0.0
        %1573 = vmatpush.msra.mxu0 0.0
        %1574 = vmatpush.msra.mxu0 0.0
        %1575 = vmatpush.msra.mxu0 0.0
        %v1576 = vand.u32 %v1530, 4294901760
        %v1577 = vsub.f32 %v1530, %v1576
        %v1578 = vand.u32 %v1577, 4294901760
        %v1579 = vsub.f32 %v1577, %v1578
        %v1580 = vand.u32 %v1579, 4294901760
        %1581 = vmatpush.msra.mxu0 %v1580
        %v1582 = vand.u32 %v1533, 4294901760
        %1583 = vmatmul.f32.gmra.mxu0 %v1582
        %v1584 = vpop.f32.mrf.mxu0
        %v1585 = vadd.f32 %v1559, %v1584
        %1586 = vdwg.mxu0
        %1587 = vmatpush.msra.mxu0 0.0
        %1588 = vmatpush.msra.mxu0 0.0
        %1589 = vmatpush.msra.mxu0 0.0
        %1590 = vmatpush.msra.mxu0 0.0
        %1591 = vmatpush.msra.mxu0 0.0
        %1592 = vmatpush.msra.mxu0 0.0
        %1593 = vmatpush.msra.mxu0 0.0
        %1594 = vmatpush.msra.mxu0 0.0
        %1595 = vmatpush.msra.mxu0 0.0
        %1596 = vmatpush.msra.mxu0 0.0
        %1597 = vmatpush.msra.mxu0 0.0
        %1598 = vmatpush.msra.mxu0 0.0
        %1599 = vmatpush.msra.mxu0 0.0
        %1600 = vmatpush.msra.mxu0 0.0
        %1601 = vmatpush.msra.mxu0 0.0
        %v1602 = vand.u32 %v1530, 4294901760
        %v1603 = vsub.f32 %v1530, %v1602
        %1604 = vmatpush.msra.mxu0 %v1603
        %v1605 = vand.u32 %v1533, 4294901760
        %v1606 = vsub.f32 %v1533, %v1605
        %1607 = vmatmul.f32.gmra.mxu0 %v1606
        %v1608 = vpop.f32.mrf.mxu0
        %v1609 = vadd.f32 %v1585, %v1608
        %1610 = vdwg.mxu0
        %1611 = vmatpush.msra.mxu0 0.0
        %1612 = vmatpush.msra.mxu0 0.0
        %1613 = vmatpush.msra.mxu0 0.0
        %1614 = vmatpush.msra.mxu0 0.0
        %1615 = vmatpush.msra.mxu0 0.0
        %1616 = vmatpush.msra.mxu0 0.0
        %1617 = vmatpush.msra.mxu0 0.0
        %1618 = vmatpush.msra.mxu0 0.0
        %1619 = vmatpush.msra.mxu0 0.0
        %1620 = vmatpush.msra.mxu0 0.0
        %1621 = vmatpush.msra.mxu0 0.0
        %1622 = vmatpush.msra.mxu0 0.0
        %1623 = vmatpush.msra.mxu0 0.0
        %1624 = vmatpush.msra.mxu0 0.0
        %1625 = vmatpush.msra.mxu0 0.0
        %v1626 = vand.u32 %v1530, 4294901760
        %1627 = vmatpush.msra.mxu0 %v1626
        %v1628 = vand.u32 %v1533, 4294901760
        %v1629 = vsub.f32 %v1533, %v1628
        %v1630 = vand.u32 %v1629, 4294901760
        %1631 = vmatmul.f32.gmra.mxu0 %v1630
        %v1632 = vpop.f32.mrf.mxu0
        %v1633 = vadd.f32 %v1609, %v1632
        %1634 = vdwg.mxu0
        %1635 = vmatpush.msra.mxu0 0.0
        %1636 = vmatpush.msra.mxu0 0.0
        %1637 = vmatpush.msra.mxu0 0.0
        %1638 = vmatpush.msra.mxu0 0.0
        %1639 = vmatpush.msra.mxu0 0.0
        %1640 = vmatpush.msra.mxu0 0.0
        %1641 = vmatpush.msra.mxu0 0.0
        %1642 = vmatpush.msra.mxu0 0.0
        %1643 = vmatpush.msra.mxu0 0.0
        %1644 = vmatpush.msra.mxu0 0.0
        %1645 = vmatpush.msra.mxu0 0.0
        %1646 = vmatpush.msra.mxu0 0.0
        %1647 = vmatpush.msra.mxu0 0.0
        %1648 = vmatpush.msra.mxu0 0.0
        %1649 = vmatpush.msra.mxu0 0.0
        %v1650 = vand.u32 %v1530, 4294901760
        %v1651 = vsub.f32 %v1530, %v1650
        %v1652 = vand.u32 %v1651, 4294901760
        %1653 = vmatpush.msra.mxu0 %v1652
        %v1654 = vand.u32 %v1533, 4294901760
        %1655 = vmatmul.f32.gmra.mxu0 %v1654
        %v1656 = vpop.f32.mrf.mxu0
        %v1657 = vadd.f32 %v1633, %v1656
        %1658 = vdwg.mxu0
        %1659 = vmatpush.msra.mxu0 0.0
        %1660 = vmatpush.msra.mxu0 0.0
        %1661 = vmatpush.msra.mxu0 0.0
        %1662 = vmatpush.msra.mxu0 0.0
        %1663 = vmatpush.msra.mxu0 0.0
        %1664 = vmatpush.msra.mxu0 0.0
        %1665 = vmatpush.msra.mxu0 0.0
        %1666 = vmatpush.msra.mxu0 0.0
        %1667 = vmatpush.msra.mxu0 0.0
        %1668 = vmatpush.msra.mxu0 0.0
        %1669 = vmatpush.msra.mxu0 0.0
        %1670 = vmatpush.msra.mxu0 0.0
        %1671 = vmatpush.msra.mxu0 0.0
        %1672 = vmatpush.msra.mxu0 0.0
        %1673 = vmatpush.msra.mxu0 0.0
        %v1674 = vand.u32 %v1530, 4294901760
        %1675 = vmatpush.msra.mxu0 %v1674
        %v1676 = vand.u32 %v1533, 4294901760
        %1677 = vmatmul.f32.gmra.mxu0 %v1676
        %v1678 = vpop.f32.mrf.mxu0
        %v1679 = vadd.f32 %v1657, %v1678
        %1680 = vdwg.mxu0
        %1682 = vrot.lane.b32.xlu0 %v1679, 16
        %v1683 = vpop.permute.xlu0 %1682
        %vm1685 = vcmask 195712
        %1686 = vst.msk [vmem:[#allocation2] sm:$0xff] %vm1685, %v1683
        %1687 = vrot.lane.b32.xlu0 %v671, 104
        %v1688 = vpop.permute.xlu0 %1687
        %1689 = vrot.lane.b32.xlu0 %v671, 72
        %v1690 = vpop.permute.xlu0 %1689
        %v1691 = vsel %vm681, %v1688, 0
        %v1693 = vsel %vm681, %v1690, 0
        %1695 = vmatpush.xpose.msra.mxu0 0.0
        %1696 = vmatpush.xpose.msra.mxu0 0.0
        %1697 = vmatpush.xpose.msra.mxu0 0.0
        %1698 = vmatpush.xpose.msra.mxu0 0.0
        %1699 = vmatpush.xpose.msra.mxu0 0.0
        %1700 = vmatpush.xpose.msra.mxu0 0.0
        %1701 = vmatpush.xpose.msra.mxu0 0.0
        %1702 = vmatpush.xpose.msra.mxu0 0.0
        %1703 = vmatpush.xpose.msra.mxu0 0.0
        %1704 = vmatpush.xpose.msra.mxu0 0.0
        %1705 = vmatpush.xpose.msra.mxu0 0.0
        %1706 = vmatpush.xpose.msra.mxu0 0.0
        %1707 = vmatpush.xpose.msra.mxu0 0.0
        %1708 = vmatpush.xpose.msra.mxu0 0.0
        %1709 = vmatpush.xpose.msra.mxu0 0.0
        %v1710 = vand.u32 %v1693, 4294901760
        %1711 = vmatpush.xpose.msra.mxu0 %v1710
        %v1712 = vand.u32 %v1691, 4294901760
        %v1713 = vsub.f32 %v1691, %v1712
        %v1714 = vand.u32 %v1713, 4294901760
        %v1715 = vsub.f32 %v1713, %v1714
        %v1716 = vand.u32 %v1715, 4294901760
        %1717 = vmatmul.f32.gmra.mxu0 %v1716
        %v1718 = vpop.f32.mrf.mxu0
        %v1719 = vadd.f32 0.0, %v1718
        %1720 = vdwg.mxu0
        %1721 = vmatpush.xpose.msra.mxu0 0.0
        %1722 = vmatpush.xpose.msra.mxu0 0.0
        %1723 = vmatpush.xpose.msra.mxu0 0.0
        %1724 = vmatpush.xpose.msra.mxu0 0.0
        %1725 = vmatpush.xpose.msra.mxu0 0.0
        %1726 = vmatpush.xpose.msra.mxu0 0.0
        %1727 = vmatpush.xpose.msra.mxu0 0.0
        %1728 = vmatpush.xpose.msra.mxu0 0.0
        %1729 = vmatpush.xpose.msra.mxu0 0.0
        %1730 = vmatpush.xpose.msra.mxu0 0.0
        %1731 = vmatpush.xpose.msra.mxu0 0.0
        %1732 = vmatpush.xpose.msra.mxu0 0.0
        %1733 = vmatpush.xpose.msra.mxu0 0.0
        %1734 = vmatpush.xpose.msra.mxu0 0.0
        %1735 = vmatpush.xpose.msra.mxu0 0.0
        %v1736 = vand.u32 %v1693, 4294901760
        %v1737 = vsub.f32 %v1693, %v1736
        %v1738 = vand.u32 %v1737, 4294901760
        %v1739 = vsub.f32 %v1737, %v1738
        %v1740 = vand.u32 %v1739, 4294901760
        %1741 = vmatpush.xpose.msra.mxu0 %v1740
        %v1742 = vand.u32 %v1691, 4294901760
        %1743 = vmatmul.f32.gmra.mxu0 %v1742
        %v1744 = vpop.f32.mrf.mxu0
        %v1745 = vadd.f32 %v1719, %v1744
        %1746 = vdwg.mxu0
        %1747 = vmatpush.xpose.msra.mxu0 0.0
        %1748 = vmatpush.xpose.msra.mxu0 0.0
        %1749 = vmatpush.xpose.msra.mxu0 0.0
        %1750 = vmatpush.xpose.msra.mxu0 0.0
        %1751 = vmatpush.xpose.msra.mxu0 0.0
        %1752 = vmatpush.xpose.msra.mxu0 0.0
        %1753 = vmatpush.xpose.msra.mxu0 0.0
        %1754 = vmatpush.xpose.msra.mxu0 0.0
        %1755 = vmatpush.xpose.msra.mxu0 0.0
        %1756 = vmatpush.xpose.msra.mxu0 0.0
        %1757 = vmatpush.xpose.msra.mxu0 0.0
        %1758 = vmatpush.xpose.msra.mxu0 0.0
        %1759 = vmatpush.xpose.msra.mxu0 0.0
        %1760 = vmatpush.xpose.msra.mxu0 0.0
        %1761 = vmatpush.xpose.msra.mxu0 0.0
        %v1762 = vand.u32 %v1693, 4294901760
        %v1763 = vsub.f32 %v1693, %v1762
        %1764 = vmatpush.xpose.msra.mxu0 %v1763
        %v1765 = vand.u32 %v1691, 4294901760
        %v1766 = vsub.f32 %v1691, %v1765
        %1767 = vmatmul.f32.gmra.mxu0 %v1766
        %v1768 = vpop.f32.mrf.mxu0
        %v1769 = vadd.f32 %v1745, %v1768
        %1770 = vdwg.mxu0
        %1771 = vmatpush.xpose.msra.mxu0 0.0
        %1772 = vmatpush.xpose.msra.mxu0 0.0
        %1773 = vmatpush.xpose.msra.mxu0 0.0
        %1774 = vmatpush.xpose.msra.mxu0 0.0
        %1775 = vmatpush.xpose.msra.mxu0 0.0
        %1776 = vmatpush.xpose.msra.mxu0 0.0
        %1777 = vmatpush.xpose.msra.mxu0 0.0
        %1778 = vmatpush.xpose.msra.mxu0 0.0
        %1779 = vmatpush.xpose.msra.mxu0 0.0
        %1780 = vmatpush.xpose.msra.mxu0 0.0
        %1781 = vmatpush.xpose.msra.mxu0 0.0
        %1782 = vmatpush.xpose.msra.mxu0 0.0
        %1783 = vmatpush.xpose.msra.mxu0 0.0
        %1784 = vmatpush.xpose.msra.mxu0 0.0
        %1785 = vmatpush.xpose.msra.mxu0 0.0
        %v1786 = vand.u32 %v1693, 4294901760
        %1787 = vmatpush.xpose.msra.mxu0 %v1786
        %v1788 = vand.u32 %v1691, 4294901760
        %v1789 = vsub.f32 %v1691, %v1788
        %v1790 = vand.u32 %v1789, 4294901760
        %1791 = vmatmul.f32.gmra.mxu0 %v1790
        %v1792 = vpop.f32.mrf.mxu0
        %v1793 = vadd.f32 %v1769, %v1792
        %1794 = vdwg.mxu0
        %1795 = vmatpush.xpose.msra.mxu0 0.0
        %1796 = vmatpush.xpose.msra.mxu0 0.0
        %1797 = vmatpush.xpose.msra.mxu0 0.0
        %1798 = vmatpush.xpose.msra.mxu0 0.0
        %1799 = vmatpush.xpose.msra.mxu0 0.0
        %1800 = vmatpush.xpose.msra.mxu0 0.0
        %1801 = vmatpush.xpose.msra.mxu0 0.0
        %1802 = vmatpush.xpose.msra.mxu0 0.0
        %1803 = vmatpush.xpose.msra.mxu0 0.0
        %1804 = vmatpush.xpose.msra.mxu0 0.0
        %1805 = vmatpush.xpose.msra.mxu0 0.0
        %1806 = vmatpush.xpose.msra.mxu0 0.0
        %1807 = vmatpush.xpose.msra.mxu0 0.0
        %1808 = vmatpush.xpose.msra.mxu0 0.0
        %1809 = vmatpush.xpose.msra.mxu0 0.0
        %v1810 = vand.u32 %v1693, 4294901760
        %v1811 = vsub.f32 %v1693, %v1810
        %v1812 = vand.u32 %v1811, 4294901760
        %1813 = vmatpush.xpose.msra.mxu0 %v1812
        %v1814 = vand.u32 %v1691, 4294901760
        %1815 = vmatmul.f32.gmra.mxu0 %v1814
        %v1816 = vpop.f32.mrf.mxu0
        %v1817 = vadd.f32 %v1793, %v1816
        %1818 = vdwg.mxu0
        %1819 = vmatpush.xpose.msra.mxu0 0.0
        %1820 = vmatpush.xpose.msra.mxu0 0.0
        %1821 = vmatpush.xpose.msra.mxu0 0.0
        %1822 = vmatpush.xpose.msra.mxu0 0.0
        %1823 = vmatpush.xpose.msra.mxu0 0.0
        %1824 = vmatpush.xpose.msra.mxu0 0.0
        %1825 = vmatpush.xpose.msra.mxu0 0.0
        %1826 = vmatpush.xpose.msra.mxu0 0.0
        %1827 = vmatpush.xpose.msra.mxu0 0.0
        %1828 = vmatpush.xpose.msra.mxu0 0.0
        %1829 = vmatpush.xpose.msra.mxu0 0.0
        %1830 = vmatpush.xpose.msra.mxu0 0.0
        %1831 = vmatpush.xpose.msra.mxu0 0.0
        %1832 = vmatpush.xpose.msra.mxu0 0.0
        %1833 = vmatpush.xpose.msra.mxu0 0.0
        %v1834 = vand.u32 %v1693, 4294901760
        %1835 = vmatpush.xpose.msra.mxu0 %v1834
        %v1836 = vand.u32 %v1691, 4294901760
        %1837 = vmatmul.f32.gmra.mxu0 %v1836
        %v1838 = vpop.f32.mrf.mxu0
        %v1839 = vadd.f32 %v1817, %v1838
        %1840 = vdwg.mxu0
        %v1841 = vmul.f32 %v1839, 0.35355338
        %v1842 = vsel %vm677, %v1841, -1e+30
        %v1843 = vsel %vm681, %v1842, -inf
        %1844 = vmax.xlane.f32.xlu0 %v1843
        %v1845 = vpop.xlane.xlu0 %1844
        %v1846 = vsub.f32 %v1842, %v1845
        %v1847 = vmul.f32 %v1846, 1.442695
        %v1848 = vpow.pop %v1847
        %v1849 = vsel %vm681, %v1848, 0.0
        %1850 = vadd.xlane.f32.xlu0 %v1849
        %v1851 = vpop.xlane.xlu0 %1850
        %v1852 = vrcp.pop %v1851
        %v1853 = vmul.f32 %v1851, %v1852
        %v1854 = vsub.f32 1.0, %v1853
        %v1855 = vmul.f32 %v1852, %v1854
        %v1856 = vadd.f32 %v1852, %v1855
        %vm1857 = vweird.f32 %v1851
        %vm1858 = vweird.f32 %v1852
        %vm1859 = vmor %vm1857, %vm1858
        %v1860 = vsel %vm1859, %v1852, %v1856
        %v1861 = vand.u32 2147483647, %v1851
        %vm1862 = vcmp.eq.f32.partialorder %v1861, 8.507059e+37
        %v1863 = vand.u32 %v1851, 2147483648
        %v1864 = vor.u32 1.1754944e-38, %v1863
        %v1865 = vsel %vm1862, %v1864, %v1860
        %v1866 = vmul.f32 %v1848, %v1865
        %1867 = vrot.lane.b32.xlu0 %v671, 40
        %v1868 = vpop.permute.xlu0 %1867
        %v1871 = vsel %vm681, %v1866, 0
        %1873 = vmatpush.msra.mxu0 0.0
        %1874 = vmatpush.msra.mxu0 0.0
        %1875 = vmatpush.msra.mxu0 0.0
        %1876 = vmatpush.msra.mxu0 0.0
        %1877 = vmatpush.msra.mxu0 0.0
        %1878 = vmatpush.msra.mxu0 0.0
        %1879 = vmatpush.msra.mxu0 0.0
        %1880 = vmatpush.msra.mxu0 0.0
        %1881 = vmatpush.msra.mxu0 0.0
        %1882 = vmatpush.msra.mxu0 0.0
        %1883 = vmatpush.msra.mxu0 0.0
        %1884 = vmatpush.msra.mxu0 0.0
        %1885 = vmatpush.msra.mxu0 0.0
        %1886 = vmatpush.msra.mxu0 0.0
        %1887 = vmatpush.msra.mxu0 0.0
        %v1888 = vand.u32 %v1868, 4294901760
        %1889 = vmatpush.msra.mxu0 %v1888
        %v1890 = vand.u32 %v1871, 4294901760
        %v1891 = vsub.f32 %v1871, %v1890
        %v1892 = vand.u32 %v1891, 4294901760
        %v1893 = vsub.f32 %v1891, %v1892
        %v1894 = vand.u32 %v1893, 4294901760
        %1895 = vmatmul.f32.gmra.mxu0 %v1894
        %v1896 = vpop.f32.mrf.mxu0
        %v1897 = vadd.f32 0.0, %v1896
        %1898 = vdwg.mxu0
        %1899 = vmatpush.msra.mxu0 0.0
        %1900 = vmatpush.msra.mxu0 0.0
        %1901 = vmatpush.msra.mxu0 0.0
        %1902 = vmatpush.msra.mxu0 0.0
        %1903 = vmatpush.msra.mxu0 0.0
        %1904 = vmatpush.msra.mxu0 0.0
        %1905 = vmatpush.msra.mxu0 0.0
        %1906 = vmatpush.msra.mxu0 0.0
        %1907 = vmatpush.msra.mxu0 0.0
        %1908 = vmatpush.msra.mxu0 0.0
        %1909 = vmatpush.msra.mxu0 0.0
        %1910 = vmatpush.msra.mxu0 0.0
        %1911 = vmatpush.msra.mxu0 0.0
        %1912 = vmatpush.msra.mxu0 0.0
        %1913 = vmatpush.msra.mxu0 0.0
        %v1914 = vand.u32 %v1868, 4294901760
        %v1915 = vsub.f32 %v1868, %v1914
        %v1916 = vand.u32 %v1915, 4294901760
        %v1917 = vsub.f32 %v1915, %v1916
        %v1918 = vand.u32 %v1917, 4294901760
        %1919 = vmatpush.msra.mxu0 %v1918
        %v1920 = vand.u32 %v1871, 4294901760
        %1921 = vmatmul.f32.gmra.mxu0 %v1920
        %v1922 = vpop.f32.mrf.mxu0
        %v1923 = vadd.f32 %v1897, %v1922
        %1924 = vdwg.mxu0
        %1925 = vmatpush.msra.mxu0 0.0
        %1926 = vmatpush.msra.mxu0 0.0
        %1927 = vmatpush.msra.mxu0 0.0
        %1928 = vmatpush.msra.mxu0 0.0
        %1929 = vmatpush.msra.mxu0 0.0
        %1930 = vmatpush.msra.mxu0 0.0
        %1931 = vmatpush.msra.mxu0 0.0
        %1932 = vmatpush.msra.mxu0 0.0
        %1933 = vmatpush.msra.mxu0 0.0
        %1934 = vmatpush.msra.mxu0 0.0
        %1935 = vmatpush.msra.mxu0 0.0
        %1936 = vmatpush.msra.mxu0 0.0
        %1937 = vmatpush.msra.mxu0 0.0
        %1938 = vmatpush.msra.mxu0 0.0
        %1939 = vmatpush.msra.mxu0 0.0
        %v1940 = vand.u32 %v1868, 4294901760
        %v1941 = vsub.f32 %v1868, %v1940
        %1942 = vmatpush.msra.mxu0 %v1941
        %v1943 = vand.u32 %v1871, 4294901760
        %v1944 = vsub.f32 %v1871, %v1943
        %1945 = vmatmul.f32.gmra.mxu0 %v1944
        %v1946 = vpop.f32.mrf.mxu0
        %v1947 = vadd.f32 %v1923, %v1946
        %1948 = vdwg.mxu0
        %1949 = vmatpush.msra.mxu0 0.0
        %1950 = vmatpush.msra.mxu0 0.0
        %1951 = vmatpush.msra.mxu0 0.0
        %1952 = vmatpush.msra.mxu0 0.0
        %1953 = vmatpush.msra.mxu0 0.0
        %1954 = vmatpush.msra.mxu0 0.0
        %1955 = vmatpush.msra.mxu0 0.0
        %1956 = vmatpush.msra.mxu0 0.0
        %1957 = vmatpush.msra.mxu0 0.0
        %1958 = vmatpush.msra.mxu0 0.0
        %1959 = vmatpush.msra.mxu0 0.0
        %1960 = vmatpush.msra.mxu0 0.0
        %1961 = vmatpush.msra.mxu0 0.0
        %1962 = vmatpush.msra.mxu0 0.0
        %1963 = vmatpush.msra.mxu0 0.0
        %v1964 = vand.u32 %v1868, 4294901760
        %1965 = vmatpush.msra.mxu0 %v1964
        %v1966 = vand.u32 %v1871, 4294901760
        %v1967 = vsub.f32 %v1871, %v1966
        %v1968 = vand.u32 %v1967, 4294901760
        %1969 = vmatmul.f32.gmra.mxu0 %v1968
        %v1970 = vpop.f32.mrf.mxu0
        %v1971 = vadd.f32 %v1947, %v1970
        %1972 = vdwg.mxu0
        %1973 = vmatpush.msra.mxu0 0.0
        %1974 = vmatpush.msra.mxu0 0.0
        %1975 = vmatpush.msra.mxu0 0.0
        %1976 = vmatpush.msra.mxu0 0.0
        %1977 = vmatpush.msra.mxu0 0.0
        %1978 = vmatpush.msra.mxu0 0.0
        %1979 = vmatpush.msra.mxu0 0.0
        %1980 = vmatpush.msra.mxu0 0.0
        %1981 = vmatpush.msra.mxu0 0.0
        %1982 = vmatpush.msra.mxu0 0.0
        %1983 = vmatpush.msra.mxu0 0.0
        %1984 = vmatpush.msra.mxu0 0.0
        %1985 = vmatpush.msra.mxu0 0.0
        %1986 = vmatpush.msra.mxu0 0.0
        %1987 = vmatpush.msra.mxu0 0.0
        %v1988 = vand.u32 %v1868, 4294901760
        %v1989 = vsub.f32 %v1868, %v1988
        %v1990 = vand.u32 %v1989, 4294901760
        %1991 = vmatpush.msra.mxu0 %v1990
        %v1992 = vand.u32 %v1871, 4294901760
        %1993 = vmatmul.f32.gmra.mxu0 %v1992
        %v1994 = vpop.f32.mrf.mxu0
        %v1995 = vadd.f32 %v1971, %v1994
        %1996 = vdwg.mxu0
        %1997 = vmatpush.msra.mxu0 0.0
        %1998 = vmatpush.msra.mxu0 0.0
        %1999 = vmatpush.msra.mxu0 0.0
        %2000 = vmatpush.msra.mxu0 0.0
        %2001 = vmatpush.msra.mxu0 0.0
        %2002 = vmatpush.msra.mxu0 0.0
        %2003 = vmatpush.msra.mxu0 0.0
        %2004 = vmatpush.msra.mxu0 0.0
        %2005 = vmatpush.msra.mxu0 0.0
        %2006 = vmatpush.msra.mxu0 0.0
        %2007 = vmatpush.msra.mxu0 0.0
        %2008 = vmatpush.msra.mxu0 0.0
        %2009 = vmatpush.msra.mxu0 0.0
        %2010 = vmatpush.msra.mxu0 0.0
        %2011 = vmatpush.msra.mxu0 0.0
        %v2012 = vand.u32 %v1868, 4294901760
        %2013 = vmatpush.msra.mxu0 %v2012
        %v2014 = vand.u32 %v1871, 4294901760
        %2015 = vmatmul.f32.gmra.mxu0 %v2014
        %v2016 = vpop.f32.mrf.mxu0
        %v2017 = vadd.f32 %v1995, %v2016
        %2018 = vdwg.mxu0
        %2020 = vrot.lane.b32.xlu0 %v2017, 24
        %v2021 = vpop.permute.xlu0 %2020
        %vm2023 = vcmask 261312
        %2024 = vst.msk [vmem:[#allocation2] sm:$0xff] %vm2023, %v2021
        %v2025 = vld [vmem:[#allocation2] sm:$0xff]
        %v2026 = vld [vmem:[%s5] sm:$0xff]
        %v2027 = vld [vmem:[%s5 + $0x8] sm:$0xff]
        %v2028 = vld [vmem:[%s5 + $0x10] sm:$0xff]
        %v2029 = vld [vmem:[%s5 + $0x18] sm:$0xff]
        %v2030 = vld [vmem:[%s6] sm:$0x1]
        %v2032 = vperm.slane %v2030, 0
        %v2035 = vsel %vm437, %v2025, 0
        %2037 = vmatpush.msra.mxu0 0.0
        %2038 = vmatpush.msra.mxu0 0.0
        %2039 = vmatpush.msra.mxu0 0.0
        %2040 = vmatpush.msra.mxu0 0.0
        %2041 = vmatpush.msra.mxu0 0.0
        %2042 = vmatpush.msra.mxu0 0.0
        %2043 = vmatpush.msra.mxu0 0.0
        %2044 = vmatpush.msra.mxu0 0.0
        %2045 = vmatpush.msra.mxu0 0.0
        %2046 = vmatpush.msra.mxu0 0.0
        %2047 = vmatpush.msra.mxu0 0.0
        %2048 = vmatpush.msra.mxu0 0.0
        %v2049 = vand.u32 %v2029, 4294901760
        %2050 = vmatpush.msra.mxu0 %v2049
        %v2051 = vand.u32 %v2028, 4294901760
        %2052 = vmatpush.msra.mxu0 %v2051
        %v2053 = vand.u32 %v2027, 4294901760
        %2054 = vmatpush.msra.mxu0 %v2053
        %v2055 = vand.u32 %v2026, 4294901760
        %2056 = vmatpush.msra.mxu0 %v2055
        %v2057 = vand.u32 %v2035, 4294901760
        %v2058 = vsub.f32 %v2035, %v2057
        %v2059 = vand.u32 %v2058, 4294901760
        %v2060 = vsub.f32 %v2058, %v2059
        %v2061 = vand.u32 %v2060, 4294901760
        %2062 = vmatmul.f32.gmra.mxu0 %v2061
        %v2063 = vpop.f32.mrf.mxu0
        %v2064 = vadd.f32 %v2032, %v2063
        %2065 = vdwg.mxu0
        %2066 = vmatpush.msra.mxu0 0.0
        %2067 = vmatpush.msra.mxu0 0.0
        %2068 = vmatpush.msra.mxu0 0.0
        %2069 = vmatpush.msra.mxu0 0.0
        %2070 = vmatpush.msra.mxu0 0.0
        %2071 = vmatpush.msra.mxu0 0.0
        %2072 = vmatpush.msra.mxu0 0.0
        %2073 = vmatpush.msra.mxu0 0.0
        %2074 = vmatpush.msra.mxu0 0.0
        %2075 = vmatpush.msra.mxu0 0.0
        %2076 = vmatpush.msra.mxu0 0.0
        %2077 = vmatpush.msra.mxu0 0.0
        %v2078 = vand.u32 %v2029, 4294901760
        %v2079 = vsub.f32 %v2029, %v2078
        %v2080 = vand.u32 %v2079, 4294901760
        %v2081 = vsub.f32 %v2079, %v2080
        %v2082 = vand.u32 %v2081, 4294901760
        %2083 = vmatpush.msra.mxu0 %v2082
        %v2084 = vand.u32 %v2028, 4294901760
        %v2085 = vsub.f32 %v2028, %v2084
        %v2086 = vand.u32 %v2085, 4294901760
        %v2087 = vsub.f32 %v2085, %v2086
        %v2088 = vand.u32 %v2087, 4294901760
        %2089 = vmatpush.msra.mxu0 %v2088
        %v2090 = vand.u32 %v2027, 4294901760
        %v2091 = vsub.f32 %v2027, %v2090
        %v2092 = vand.u32 %v2091, 4294901760
        %v2093 = vsub.f32 %v2091, %v2092
        %v2094 = vand.u32 %v2093, 4294901760
        %2095 = vmatpush.msra.mxu0 %v2094
        %v2096 = vand.u32 %v2026, 4294901760
        %v2097 = vsub.f32 %v2026, %v2096
        %v2098 = vand.u32 %v2097, 4294901760
        %v2099 = vsub.f32 %v2097, %v2098
        %v2100 = vand.u32 %v2099, 4294901760
        %2101 = vmatpush.msra.mxu0 %v2100
        %v2102 = vand.u32 %v2035, 4294901760
        %2103 = vmatmul.f32.gmra.mxu0 %v2102
        %v2104 = vpop.f32.mrf.mxu0
        %v2105 = vadd.f32 %v2064, %v2104
        %2106 = vdwg.mxu0
        %2107 = vmatpush.msra.mxu0 0.0
        %2108 = vmatpush.msra.mxu0 0.0
        %2109 = vmatpush.msra.mxu0 0.0
        %2110 = vmatpush.msra.mxu0 0.0
        %2111 = vmatpush.msra.mxu0 0.0
        %2112 = vmatpush.msra.mxu0 0.0
        %2113 = vmatpush.msra.mxu0 0.0
        %2114 = vmatpush.msra.mxu0 0.0
        %2115 = vmatpush.msra.mxu0 0.0
        %2116 = vmatpush.msra.mxu0 0.0
        %2117 = vmatpush.msra.mxu0 0.0
        %2118 = vmatpush.msra.mxu0 0.0
        %v2119 = vand.u32 %v2029, 4294901760
        %v2120 = vsub.f32 %v2029, %v2119
        %2121 = vmatpush.msra.mxu0 %v2120
        %v2122 = vand.u32 %v2028, 4294901760
        %v2123 = vsub.f32 %v2028, %v2122
        %2124 = vmatpush.msra.mxu0 %v2123
        %v2125 = vand.u32 %v2027, 4294901760
        %v2126 = vsub.f32 %v2027, %v2125
        %2127 = vmatpush.msra.mxu0 %v2126
        %v2128 = vand.u32 %v2026, 4294901760
        %v2129 = vsub.f32 %v2026, %v2128
        %2130 = vmatpush.msra.mxu0 %v2129
        %v2131 = vand.u32 %v2035, 4294901760
        %v2132 = vsub.f32 %v2035, %v2131
        %2133 = vmatmul.f32.gmra.mxu0 %v2132
        %v2134 = vpop.f32.mrf.mxu0
        %v2135 = vadd.f32 %v2105, %v2134
        %2136 = vdwg.mxu0
        %2137 = vmatpush.msra.mxu0 0.0
        %2138 = vmatpush.msra.mxu0 0.0
        %2139 = vmatpush.msra.mxu0 0.0
        %2140 = vmatpush.msra.mxu0 0.0
        %2141 = vmatpush.msra.mxu0 0.0
        %2142 = vmatpush.msra.mxu0 0.0
        %2143 = vmatpush.msra.mxu0 0.0
        %2144 = vmatpush.msra.mxu0 0.0
        %2145 = vmatpush.msra.mxu0 0.0
        %2146 = vmatpush.msra.mxu0 0.0
        %2147 = vmatpush.msra.mxu0 0.0
        %2148 = vmatpush.msra.mxu0 0.0
        %v2149 = vand.u32 %v2029, 4294901760
        %2150 = vmatpush.msra.mxu0 %v2149
        %v2151 = vand.u32 %v2028, 4294901760
        %2152 = vmatpush.msra.mxu0 %v2151
        %v2153 = vand.u32 %v2027, 4294901760
        %2154 = vmatpush.msra.mxu0 %v2153
        %v2155 = vand.u32 %v2026, 4294901760
        %2156 = vmatpush.msra.mxu0 %v2155
        %v2157 = vand.u32 %v2035, 4294901760
        %v2158 = vsub.f32 %v2035, %v2157
        %v2159 = vand.u32 %v2158, 4294901760
        %2160 = vmatmul.f32.gmra.mxu0 %v2159
        %v2161 = vpop.f32.mrf.mxu0
        %v2162 = vadd.f32 %v2135, %v2161
        %2163 = vdwg.mxu0
        %2164 = vmatpush.msra.mxu0 0.0
        %2165 = vmatpush.msra.mxu0 0.0
        %2166 = vmatpush.msra.mxu0 0.0
        %2167 = vmatpush.msra.mxu0 0.0
        %2168 = vmatpush.msra.mxu0 0.0
        %2169 = vmatpush.msra.mxu0 0.0
        %2170 = vmatpush.msra.mxu0 0.0
        %2171 = vmatpush.msra.mxu0 0.0
        %2172 = vmatpush.msra.mxu0 0.0
        %2173 = vmatpush.msra.mxu0 0.0
        %2174 = vmatpush.msra.mxu0 0.0
        %2175 = vmatpush.msra.mxu0 0.0
        %v2176 = vand.u32 %v2029, 4294901760
        %v2177 = vsub.f32 %v2029, %v2176
        %v2178 = vand.u32 %v2177, 4294901760
        %2179 = vmatpush.msra.mxu0 %v2178
        %v2180 = vand.u32 %v2028, 4294901760
        %v2181 = vsub.f32 %v2028, %v2180
        %v2182 = vand.u32 %v2181, 4294901760
        %2183 = vmatpush.msra.mxu0 %v2182
        %v2184 = vand.u32 %v2027, 4294901760
        %v2185 = vsub.f32 %v2027, %v2184
        %v2186 = vand.u32 %v2185, 4294901760
        %2187 = vmatpush.msra.mxu0 %v2186
        %v2188 = vand.u32 %v2026, 4294901760
        %v2189 = vsub.f32 %v2026, %v2188
        %v2190 = vand.u32 %v2189, 4294901760
        %2191 = vmatpush.msra.mxu0 %v2190
        %v2192 = vand.u32 %v2035, 4294901760
        %2193 = vmatmul.f32.gmra.mxu0 %v2192
        %v2194 = vpop.f32.mrf.mxu0
        %v2195 = vadd.f32 %v2162, %v2194
        %2196 = vdwg.mxu0
        %2197 = vmatpush.msra.mxu0 0.0
        %2198 = vmatpush.msra.mxu0 0.0
        %2199 = vmatpush.msra.mxu0 0.0
        %2200 = vmatpush.msra.mxu0 0.0
        %2201 = vmatpush.msra.mxu0 0.0
        %2202 = vmatpush.msra.mxu0 0.0
        %2203 = vmatpush.msra.mxu0 0.0
        %2204 = vmatpush.msra.mxu0 0.0
        %2205 = vmatpush.msra.mxu0 0.0
        %2206 = vmatpush.msra.mxu0 0.0
        %2207 = vmatpush.msra.mxu0 0.0
        %2208 = vmatpush.msra.mxu0 0.0
        %v2209 = vand.u32 %v2029, 4294901760
        %2210 = vmatpush.msra.mxu0 %v2209
        %v2211 = vand.u32 %v2028, 4294901760
        %2212 = vmatpush.msra.mxu0 %v2211
        %v2213 = vand.u32 %v2027, 4294901760
        %2214 = vmatpush.msra.mxu0 %v2213
        %v2215 = vand.u32 %v2026, 4294901760
        %2216 = vmatpush.msra.mxu0 %v2215
        %v2217 = vand.u32 %v2035, 4294901760
        %2218 = vmatmul.f32.gmra.mxu0 %v2217
        %v2219 = vpop.f32.mrf.mxu0
        %v2220 = vadd.f32 %v2195, %v2219
        %2221 = vdwg.mxu0
        %v2222 = vadd.f32 %v436, %v2220
        %v2223 = vsel %vm437, %v2222, 0.0
        %2224 = vadd.xlane.f32.xlu0 %v2223
        %v2225 = vpop.xlane.xlu0 %2224
        %v2226 = vmul.f32 %v2225, %v447
        %v2227 = vsub.f32 %v2222, %v2226
        %v2228 = vmul.f32 %v2227, %v2227
        %v2229 = vsel %vm437, %v2228, 0.0
        %2230 = vadd.xlane.f32.xlu0 %v2229
        %v2231 = vpop.xlane.xlu0 %2230
        %v2232 = vmul.f32 %v2231, %v447
        %v2233 = vadd.f32 %v2232, 1e-05
        %v2234 = vrsqrt.pop %v2233
        %v2235 = vmul.f32 %v2234, %v2233
        %v2236 = vmul.f32 %v2235, %v2234
        %v2237 = vmul.f32 0.5, %v2236
        %v2238 = vsub.f32 1.5, %v2237
        %v2239 = vmul.f32 %v2234, %v2238
        %vm2240 = vweird.f32 %v2233
        %vm2241 = vweird.f32 %v2234
        %vm2242 = vmor %vm2240, %vm2241
        %v2243 = vsel %vm2242, %v2234, %v2239
        %v2244 = vmul.f32 %v2227, %v2243
        %v2245 = vld [vmem:[%s7] sm:$0x1]
        %v2247 = vperm.slane %v2245, 0
        %v2249 = vmul.f32 %v2244, %v2247
        %v2250 = vld [vmem:[%s8] sm:$0x1]
        %v2252 = vperm.slane %v2250, 0
        %v2254 = vadd.f32 %v2249, %v2252
        %v2255 = vld [vmem:[%s9] sm:$0xff]
        %v2256 = vld [vmem:[%s9 + $0x8] sm:$0xff]
        %v2257 = vld [vmem:[%s9 + $0x10] sm:$0xff]
        %v2258 = vld [vmem:[%s9 + $0x18] sm:$0xff]
        %v2259 = vld [vmem:[%s10] sm:$0x1]
        %v2261 = vperm.slane %v2259, 0
        %v2264 = vsel %vm437, %v2254, 0
        %2266 = vmatpush.msra.mxu0 0.0
        %2267 = vmatpush.msra.mxu0 0.0
        %2268 = vmatpush.msra.mxu0 0.0
        %2269 = vmatpush.msra.mxu0 0.0
        %2270 = vmatpush.msra.mxu0 0.0
        %2271 = vmatpush.msra.mxu0 0.0
        %2272 = vmatpush.msra.mxu0 0.0
        %2273 = vmatpush.msra.mxu0 0.0
        %2274 = vmatpush.msra.mxu0 0.0
        %2275 = vmatpush.msra.mxu0 0.0
        %2276 = vmatpush.msra.mxu0 0.0
        %2277 = vmatpush.msra.mxu0 0.0
        %v2278 = vand.u32 %v2258, 4294901760
        %2279 = vmatpush.msra.mxu0 %v2278
        %v2280 = vand.u32 %v2257, 4294901760
        %2281 = vmatpush.msra.mxu0 %v2280
        %v2282 = vand.u32 %v2256, 4294901760
        %2283 = vmatpush.msra.mxu0 %v2282
        %v2284 = vand.u32 %v2255, 4294901760
        %2285 = vmatpush.msra.mxu0 %v2284
        %v2286 = vand.u32 %v2264, 4294901760
        %v2287 = vsub.f32 %v2264, %v2286
        %v2288 = vand.u32 %v2287, 4294901760
        %v2289 = vsub.f32 %v2287, %v2288
        %v2290 = vand.u32 %v2289, 4294901760
        %2291 = vmatmul.f32.gmra.mxu0 %v2290
        %v2292 = vpop.f32.mrf.mxu0
        %v2293 = vadd.f32 %v2261, %v2292
        %2294 = vdwg.mxu0
        %2295 = vmatpush.msra.mxu0 0.0
        %2296 = vmatpush.msra.mxu0 0.0
        %2297 = vmatpush.msra.mxu0 0.0
        %2298 = vmatpush.msra.mxu0 0.0
        %2299 = vmatpush.msra.mxu0 0.0
        %2300 = vmatpush.msra.mxu0 0.0
        %2301 = vmatpush.msra.mxu0 0.0
        %2302 = vmatpush.msra.mxu0 0.0
        %2303 = vmatpush.msra.mxu0 0.0
        %2304 = vmatpush.msra.mxu0 0.0
        %2305 = vmatpush.msra.mxu0 0.0
        %2306 = vmatpush.msra.mxu0 0.0
        %v2307 = vand.u32 %v2258, 4294901760
        %v2308 = vsub.f32 %v2258, %v2307
        %v2309 = vand.u32 %v2308, 4294901760
        %v2310 = vsub.f32 %v2308, %v2309
        %v2311 = vand.u32 %v2310, 4294901760
        %2312 = vmatpush.msra.mxu0 %v2311
        %v2313 = vand.u32 %v2257, 4294901760
        %v2314 = vsub.f32 %v2257, %v2313
        %v2315 = vand.u32 %v2314, 4294901760
        %v2316 = vsub.f32 %v2314, %v2315
        %v2317 = vand.u32 %v2316, 4294901760
        %2318 = vmatpush.msra.mxu0 %v2317
        %v2319 = vand.u32 %v2256, 4294901760
        %v2320 = vsub.f32 %v2256, %v2319
        %v2321 = vand.u32 %v2320, 4294901760
        %v2322 = vsub.f32 %v2320, %v2321
        %v2323 = vand.u32 %v2322, 4294901760
        %2324 = vmatpush.msra.mxu0 %v2323
        %v2325 = vand.u32 %v2255, 4294901760
        %v2326 = vsub.f32 %v2255, %v2325
        %v2327 = vand.u32 %v2326, 4294901760
        %v2328 = vsub.f32 %v2326, %v2327
        %v2329 = vand.u32 %v2328, 4294901760
        %2330 = vmatpush.msra.mxu0 %v2329
        %v2331 = vand.u32 %v2264, 4294901760
        %2332 = vmatmul.f32.gmra.mxu0 %v2331
        %v2333 = vpop.f32.mrf.mxu0
        %v2334 = vadd.f32 %v2293, %v2333
        %2335 = vdwg.mxu0
        %2336 = vmatpush.msra.mxu0 0.0
        %2337 = vmatpush.msra.mxu0 0.0
        %2338 = vmatpush.msra.mxu0 0.0
        %2339 = vmatpush.msra.mxu0 0.0
        %2340 = vmatpush.msra.mxu0 0.0
        %2341 = vmatpush.msra.mxu0 0.0
        %2342 = vmatpush.msra.mxu0 0.0
        %2343 = vmatpush.msra.mxu0 0.0
        %2344 = vmatpush.msra.mxu0 0.0
        %2345 = vmatpush.msra.mxu0 0.0
        %2346 = vmatpush.msra.mxu0 0.0
        %2347 = vmatpush.msra.mxu0 0.0
        %v2348 = vand.u32 %v2258, 4294901760
        %v2349 = vsub.f32 %v2258, %v2348
        %2350 = vmatpush.msra.mxu0 %v2349
        %v2351 = vand.u32 %v2257, 4294901760
        %v2352 = vsub.f32 %v2257, %v2351
        %2353 = vmatpush.msra.mxu0 %v2352
        %v2354 = vand.u32 %v2256, 4294901760
        %v2355 = vsub.f32 %v2256, %v2354
        %2356 = vmatpush.msra.mxu0 %v2355
        %v2357 = vand.u32 %v2255, 4294901760
        %v2358 = vsub.f32 %v2255, %v2357
        %2359 = vmatpush.msra.mxu0 %v2358
        %v2360 = vand.u32 %v2264, 4294901760
        %v2361 = vsub.f32 %v2264, %v2360
        %2362 = vmatmul.f32.gmra.mxu0 %v2361
        %v2363 = vpop.f32.mrf.mxu0
        %v2364 = vadd.f32 %v2334, %v2363
        %2365 = vdwg.mxu0
        %2366 = vmatpush.msra.mxu0 0.0
        %2367 = vmatpush.msra.mxu0 0.0
        %2368 = vmatpush.msra.mxu0 0.0
        %2369 = vmatpush.msra.mxu0 0.0
        %2370 = vmatpush.msra.mxu0 0.0
        %2371 = vmatpush.msra.mxu0 0.0
        %2372 = vmatpush.msra.mxu0 0.0
        %2373 = vmatpush.msra.mxu0 0.0
        %2374 = vmatpush.msra.mxu0 0.0
        %2375 = vmatpush.msra.mxu0 0.0
        %2376 = vmatpush.msra.mxu0 0.0
        %2377 = vmatpush.msra.mxu0 0.0
        %v2378 = vand.u32 %v2258, 4294901760
        %2379 = vmatpush.msra.mxu0 %v2378
        %v2380 = vand.u32 %v2257, 4294901760
        %2381 = vmatpush.msra.mxu0 %v2380
        %v2382 = vand.u32 %v2256, 4294901760
        %2383 = vmatpush.msra.mxu0 %v2382
        %v2384 = vand.u32 %v2255, 4294901760
        %2385 = vmatpush.msra.mxu0 %v2384
        %v2386 = vand.u32 %v2264, 4294901760
        %v2387 = vsub.f32 %v2264, %v2386
        %v2388 = vand.u32 %v2387, 4294901760
        %2389 = vmatmul.f32.gmra.mxu0 %v2388
        %v2390 = vpop.f32.mrf.mxu0
        %v2391 = vadd.f32 %v2364, %v2390
        %2392 = vdwg.mxu0
        %2393 = vmatpush.msra.mxu0 0.0
        %2394 = vmatpush.msra.mxu0 0.0
        %2395 = vmatpush.msra.mxu0 0.0
        %2396 = vmatpush.msra.mxu0 0.0
        %2397 = vmatpush.msra.mxu0 0.0
        %2398 = vmatpush.msra.mxu0 0.0
        %2399 = vmatpush.msra.mxu0 0.0
        %2400 = vmatpush.msra.mxu0 0.0
        %2401 = vmatpush.msra.mxu0 0.0
        %2402 = vmatpush.msra.mxu0 0.0
        %2403 = vmatpush.msra.mxu0 0.0
        %2404 = vmatpush.msra.mxu0 0.0
        %v2405 = vand.u32 %v2258, 4294901760
        %v2406 = vsub.f32 %v2258, %v2405
        %v2407 = vand.u32 %v2406, 4294901760
        %2408 = vmatpush.msra.mxu0 %v2407
        %v2409 = vand.u32 %v2257, 4294901760
        %v2410 = vsub.f32 %v2257, %v2409
        %v2411 = vand.u32 %v2410, 4294901760
        %2412 = vmatpush.msra.mxu0 %v2411
        %v2413 = vand.u32 %v2256, 4294901760
        %v2414 = vsub.f32 %v2256, %v2413
        %v2415 = vand.u32 %v2414, 4294901760
        %2416 = vmatpush.msra.mxu0 %v2415
        %v2417 = vand.u32 %v2255, 4294901760
        %v2418 = vsub.f32 %v2255, %v2417
        %v2419 = vand.u32 %v2418, 4294901760
        %2420 = vmatpush.msra.mxu0 %v2419
        %v2421 = vand.u32 %v2264, 4294901760
        %2422 = vmatmul.f32.gmra.mxu0 %v2421
        %v2423 = vpop.f32.mrf.mxu0
        %v2424 = vadd.f32 %v2391, %v2423
        %2425 = vdwg.mxu0
        %2426 = vmatpush.msra.mxu0 0.0
        %2427 = vmatpush.msra.mxu0 0.0
        %2428 = vmatpush.msra.mxu0 0.0
        %2429 = vmatpush.msra.mxu0 0.0
        %2430 = vmatpush.msra.mxu0 0.0
        %2431 = vmatpush.msra.mxu0 0.0
        %2432 = vmatpush.msra.mxu0 0.0
        %2433 = vmatpush.msra.mxu0 0.0
        %2434 = vmatpush.msra.mxu0 0.0
        %2435 = vmatpush.msra.mxu0 0.0
        %2436 = vmatpush.msra.mxu0 0.0
        %2437 = vmatpush.msra.mxu0 0.0
        %v2438 = vand.u32 %v2258, 4294901760
        %2439 = vmatpush.msra.mxu0 %v2438
        %v2440 = vand.u32 %v2257, 4294901760
        %2441 = vmatpush.msra.mxu0 %v2440
        %v2442 = vand.u32 %v2256, 4294901760
        %2443 = vmatpush.msra.mxu0 %v2442
        %v2444 = vand.u32 %v2255, 4294901760
        %2445 = vmatpush.msra.mxu0 %v2444
        %v2446 = vand.u32 %v2264, 4294901760
        %2447 = vmatmul.f32.gmra.mxu0 %v2446
        %v2448 = vpop.f32.mrf.mxu0
        %v2449 = vadd.f32 %v2424, %v2448
        %2450 = vdwg.mxu0
        %v2451 = vmul.f32 %v2449, -1.702
        %v2452 = vmul.f32 %v2451, 1.442695
        %v2453 = vpow.pop %v2452
        %v2454 = vadd.f32 %v2453, 1.0
        %v2455 = vrcp.pop %v2454
        %v2456 = vmul.f32 %v2454, %v2455
        %v2457 = vsub.f32 1.0, %v2456
        %v2458 = vmul.f32 %v2455, %v2457
        %v2459 = vadd.f32 %v2455, %v2458
        %vm2460 = vweird.f32 %v2454
        %vm2461 = vweird.f32 %v2455
        %vm2462 = vmor %vm2460, %vm2461
        %v2463 = vsel %vm2462, %v2455, %v2459
        %v2464 = vand.u32 2147483647, %v2454
        %vm2465 = vcmp.eq.f32.partialorder %v2464, 8.507059e+37
        %v2466 = vand.u32 %v2454, 2147483648
        %v2467 = vor.u32 1.1754944e-38, %v2466
        %v2468 = vsel %vm2465, %v2467, %v2463
        %v2469 = vmul.f32 %v2449, %v2468
        %v2470 = vld [vmem:[%s11] sm:$0xff]
        %v2471 = vld [vmem:[%s11 + $0x8] sm:$0xff]
        %v2472 = vld [vmem:[%s11 + $0x10] sm:$0xff]
        %v2473 = vld [vmem:[%s11 + $0x18] sm:$0xff]
        %v2474 = vld [vmem:[%s11 + $0x20] sm:$0xff]
        %v2475 = vld [vmem:[%s11 + $0x28] sm:$0xff]
        %v2476 = vld [vmem:[%s11 + $0x30] sm:$0xff]
        %v2477 = vld [vmem:[%s11 + $0x38] sm:$0xff]
        %v2478 = vld [vmem:[%s11 + $0x40] sm:$0xff]
        %v2479 = vld [vmem:[%s11 + $0x48] sm:$0xff]
        %v2480 = vld [vmem:[%s11 + $0x50] sm:$0xff]
        %v2481 = vld [vmem:[%s11 + $0x58] sm:$0xff]
        %v2482 = vld [vmem:[%s11 + $0x60] sm:$0xff]
        %v2483 = vld [vmem:[%s11 + $0x68] sm:$0xff]
        %v2484 = vld [vmem:[%s11 + $0x70] sm:$0xff]
        %v2485 = vld [vmem:[%s11 + $0x78] sm:$0xff]
        %v2486 = vld [vmem:[%s12] sm:$0x1]
        %v2488 = vperm.slane %v2486, 0
        %v2490 = vand.u32 %v2485, 4294901760
        %2491 = vmatpush.msra.mxu0 %v2490
        %v2492 = vand.u32 %v2484, 4294901760
        %2493 = vmatpush.msra.mxu0 %v2492
        %v2494 = vand.u32 %v2483, 4294901760
        %2495 = vmatpush.msra.mxu0 %v2494
        %v2496 = vand.u32 %v2482, 4294901760
        %2497 = vmatpush.msra.mxu0 %v2496
        %v2498 = vand.u32 %v2481, 4294901760
        %2499 = vmatpush.msra.mxu0 %v2498
        %v2500 = vand.u32 %v2480, 4294901760
        %2501 = vmatpush.msra.mxu0 %v2500
        %v2502 = vand.u32 %v2479, 4294901760
        %2503 = vmatpush.msra.mxu0 %v2502
        %v2504 = vand.u32 %v2478, 4294901760
        %2505 = vmatpush.msra.mxu0 %v2504
        %v2506 = vand.u32 %v2477, 4294901760
        %2507 = vmatpush.msra.mxu0 %v2506
        %v2508 = vand.u32 %v2476, 4294901760
        %2509 = vmatpush.msra.mxu0 %v2508
        %v2510 = vand.u32 %v2475, 4294901760
        %2511 = vmatpush.msra.mxu0 %v2510
        %v2512 = vand.u32 %v2474, 4294901760
        %2513 = vmatpush.msra.mxu0 %v2512
        %v2514 = vand.u32 %v2473, 4294901760
        %2515 = vmatpush.msra.mxu0 %v2514
        %v2516 = vand.u32 %v2472, 4294901760
        %2517 = vmatpush.msra.mxu0 %v2516
        %v2518 = vand.u32 %v2471, 4294901760
        %2519 = vmatpush.msra.mxu0 %v2518
        %v2520 = vand.u32 %v2470, 4294901760
        %2521 = vmatpush.msra.mxu0 %v2520
        %v2522 = vand.u32 %v2469, 4294901760
        %v2523 = vsub.f32 %v2469, %v2522
        %v2524 = vand.u32 %v2523, 4294901760
        %v2525 = vsub.f32 %v2523, %v2524
        %v2526 = vand.u32 %v2525, 4294901760
        %2527 = vmatmul.f32.gmra.mxu0 %v2526
        %v2528 = vpop.f32.mrf.mxu0
        %v2529 = vadd.f32 %v2488, %v2528
        %2530 = vdwg.mxu0
        %v2531 = vand.u32 %v2485, 4294901760
        %v2532 = vsub.f32 %v2485, %v2531
        %v2533 = vand.u32 %v2532, 4294901760
        %v2534 = vsub.f32 %v2532, %v2533
        %v2535 = vand.u32 %v2534, 4294901760
        %2536 = vmatpush.msra.mxu0 %v2535
        %v2537 = vand.u32 %v2484, 4294901760
        %v2538 = vsub.f32 %v2484, %v2537
        %v2539 = vand.u32 %v2538, 4294901760
        %v2540 = vsub.f32 %v2538, %v2539
        %v2541 = vand.u32 %v2540, 4294901760
        %2542 = vmatpush.msra.mxu0 %v2541
        %v2543 = vand.u32 %v2483, 4294901760
        %v2544 = vsub.f32 %v2483, %v2543
        %v2545 = vand.u32 %v2544, 4294901760
        %v2546 = vsub.f32 %v2544, %v2545
        %v2547 = vand.u32 %v2546, 4294901760
        %2548 = vmatpush.msra.mxu0 %v2547
        %v2549 = vand.u32 %v2482, 4294901760
        %v2550 = vsub.f32 %v2482, %v2549
        %v2551 = vand.u32 %v2550, 4294901760
        %v2552 = vsub.f32 %v2550, %v2551
        %v2553 = vand.u32 %v2552, 4294901760
        %2554 = vmatpush.msra.mxu0 %v2553
        %v2555 = vand.u32 %v2481, 4294901760
        %v2556 = vsub.f32 %v2481, %v2555
        %v2557 = vand.u32 %v2556, 4294901760
        %v2558 = vsub.f32 %v2556, %v2557
        %v2559 = vand.u32 %v2558, 4294901760
        %2560 = vmatpush.msra.mxu0 %v2559
        %v2561 = vand.u32 %v2480, 4294901760
        %v2562 = vsub.f32 %v2480, %v2561
        %v2563 = vand.u32 %v2562, 4294901760
        %v2564 = vsub.f32 %v2562, %v2563
        %v2565 = vand.u32 %v2564, 4294901760
        %2566 = vmatpush.msra.mxu0 %v2565
        %v2567 = vand.u32 %v2479, 4294901760
        %v2568 = vsub.f32 %v2479, %v2567
        %v2569 = vand.u32 %v2568, 4294901760
        %v2570 = vsub.f32 %v2568, %v2569
        %v2571 = vand.u32 %v2570, 4294901760
        %2572 = vmatpush.msra.mxu0 %v2571
        %v2573 = vand.u32 %v2478, 4294901760
        %v2574 = vsub.f32 %v2478, %v2573
        %v2575 = vand.u32 %v2574, 4294901760
        %v2576 = vsub.f32 %v2574, %v2575
        %v2577 = vand.u32 %v2576, 4294901760
        %2578 = vmatpush.msra.mxu0 %v2577
        %v2579 = vand.u32 %v2477, 4294901760
        %v2580 = vsub.f32 %v2477, %v2579
        %v2581 = vand.u32 %v2580, 4294901760
        %v2582 = vsub.f32 %v2580, %v2581
        %v2583 = vand.u32 %v2582, 4294901760
        %2584 = vmatpush.msra.mxu0 %v2583
        %v2585 = vand.u32 %v2476, 4294901760
        %v2586 = vsub.f32 %v2476, %v2585
        %v2587 = vand.u32 %v2586, 4294901760
        %v2588 = vsub.f32 %v2586, %v2587
        %v2589 = vand.u32 %v2588, 4294901760
        %2590 = vmatpush.msra.mxu0 %v2589
        %v2591 = vand.u32 %v2475, 4294901760
        %v2592 = vsub.f32 %v2475, %v2591
        %v2593 = vand.u32 %v2592, 4294901760
        %v2594 = vsub.f32 %v2592, %v2593
        %v2595 = vand.u32 %v2594, 4294901760
        %2596 = vmatpush.msra.mxu0 %v2595
        %v2597 = vand.u32 %v2474, 4294901760
        %v2598 = vsub.f32 %v2474, %v2597
        %v2599 = vand.u32 %v2598, 4294901760
        %v2600 = vsub.f32 %v2598, %v2599
        %v2601 = vand.u32 %v2600, 4294901760
        %2602 = vmatpush.msra.mxu0 %v2601
        %v2603 = vand.u32 %v2473, 4294901760
        %v2604 = vsub.f32 %v2473, %v2603
        %v2605 = vand.u32 %v2604, 4294901760
        %v2606 = vsub.f32 %v2604, %v2605
        %v2607 = vand.u32 %v2606, 4294901760
        %2608 = vmatpush.msra.mxu0 %v2607
        %v2609 = vand.u32 %v2472, 4294901760
        %v2610 = vsub.f32 %v2472, %v2609
        %v2611 = vand.u32 %v2610, 4294901760
        %v2612 = vsub.f32 %v2610, %v2611
        %v2613 = vand.u32 %v2612, 4294901760
        %2614 = vmatpush.msra.mxu0 %v2613
        %v2615 = vand.u32 %v2471, 4294901760
        %v2616 = vsub.f32 %v2471, %v2615
        %v2617 = vand.u32 %v2616, 4294901760
        %v2618 = vsub.f32 %v2616, %v2617
        %v2619 = vand.u32 %v2618, 4294901760
        %2620 = vmatpush.msra.mxu0 %v2619
        %v2621 = vand.u32 %v2470, 4294901760
        %v2622 = vsub.f32 %v2470, %v2621
        %v2623 = vand.u32 %v2622, 4294901760
        %v2624 = vsub.f32 %v2622, %v2623
        %v2625 = vand.u32 %v2624, 4294901760
        %2626 = vmatpush.msra.mxu0 %v2625
        %v2627 = vand.u32 %v2469, 4294901760
        %2628 = vmatmul.f32.gmra.mxu0 %v2627
        %v2629 = vpop.f32.mrf.mxu0
        %v2630 = vadd.f32 %v2529, %v2629
        %2631 = vdwg.mxu0
        %v2632 = vand.u32 %v2485, 4294901760
        %v2633 = vsub.f32 %v2485, %v2632
        %2634 = vmatpush.msra.mxu0 %v2633
        %v2635 = vand.u32 %v2484, 4294901760
        %v2636 = vsub.f32 %v2484, %v2635
        %2637 = vmatpush.msra.mxu0 %v2636
        %v2638 = vand.u32 %v2483, 4294901760
        %v2639 = vsub.f32 %v2483, %v2638
        %2640 = vmatpush.msra.mxu0 %v2639
        %v2641 = vand.u32 %v2482, 4294901760
        %v2642 = vsub.f32 %v2482, %v2641
        %2643 = vmatpush.msra.mxu0 %v2642
        %v2644 = vand.u32 %v2481, 4294901760
        %v2645 = vsub.f32 %v2481, %v2644
        %2646 = vmatpush.msra.mxu0 %v2645
        %v2647 = vand.u32 %v2480, 4294901760
        %v2648 = vsub.f32 %v2480, %v2647
        %2649 = vmatpush.msra.mxu0 %v2648
        %v2650 = vand.u32 %v2479, 4294901760
        %v2651 = vsub.f32 %v2479, %v2650
        %2652 = vmatpush.msra.mxu0 %v2651
        %v2653 = vand.u32 %v2478, 4294901760
        %v2654 = vsub.f32 %v2478, %v2653
        %2655 = vmatpush.msra.mxu0 %v2654
        %v2656 = vand.u32 %v2477, 4294901760
        %v2657 = vsub.f32 %v2477, %v2656
        %2658 = vmatpush.msra.mxu0 %v2657
        %v2659 = vand.u32 %v2476, 4294901760
        %v2660 = vsub.f32 %v2476, %v2659
        %2661 = vmatpush.msra.mxu0 %v2660
        %v2662 = vand.u32 %v2475, 4294901760
        %v2663 = vsub.f32 %v2475, %v2662
        %2664 = vmatpush.msra.mxu0 %v2663
        %v2665 = vand.u32 %v2474, 4294901760
        %v2666 = vsub.f32 %v2474, %v2665
        %2667 = vmatpush.msra.mxu0 %v2666
        %v2668 = vand.u32 %v2473, 4294901760
        %v2669 = vsub.f32 %v2473, %v2668
        %2670 = vmatpush.msra.mxu0 %v2669
        %v2671 = vand.u32 %v2472, 4294901760
        %v2672 = vsub.f32 %v2472, %v2671
        %2673 = vmatpush.msra.mxu0 %v2672
        %v2674 = vand.u32 %v2471, 4294901760
        %v2675 = vsub.f32 %v2471, %v2674
        %2676 = vmatpush.msra.mxu0 %v2675
        %v2677 = vand.u32 %v2470, 4294901760
        %v2678 = vsub.f32 %v2470, %v2677
        %2679 = vmatpush.msra.mxu0 %v2678
        %v2680 = vand.u32 %v2469, 4294901760
        %v2681 = vsub.f32 %v2469, %v2680
        %2682 = vmatmul.f32.gmra.mxu0 %v2681
        %v2683 = vpop.f32.mrf.mxu0
        %v2684 = vadd.f32 %v2630, %v2683
        %2685 = vdwg.mxu0
        %v2686 = vand.u32 %v2485, 4294901760
        %2687 = vmatpush.msra.mxu0 %v2686
        %v2688 = vand.u32 %v2484, 4294901760
        %2689 = vmatpush.msra.mxu0 %v2688
        %v2690 = vand.u32 %v2483, 4294901760
        %2691 = vmatpush.msra.mxu0 %v2690
        %v2692 = vand.u32 %v2482, 4294901760
        %2693 = vmatpush.msra.mxu0 %v2692
        %v2694 = vand.u32 %v2481, 4294901760
        %2695 = vmatpush.msra.mxu0 %v2694
        %v2696 = vand.u32 %v2480, 4294901760
        %2697 = vmatpush.msra.mxu0 %v2696
        %v2698 = vand.u32 %v2479, 4294901760
        %2699 = vmatpush.msra.mxu0 %v2698
        %v2700 = vand.u32 %v2478, 4294901760
        %2701 = vmatpush.msra.mxu0 %v2700
        %v2702 = vand.u32 %v2477, 4294901760
        %2703 = vmatpush.msra.mxu0 %v2702
        %v2704 = vand.u32 %v2476, 4294901760
        %2705 = vmatpush.msra.mxu0 %v2704
        %v2706 = vand.u32 %v2475, 4294901760
        %2707 = vmatpush.msra.mxu0 %v2706
        %v2708 = vand.u32 %v2474, 4294901760
        %2709 = vmatpush.msra.mxu0 %v2708
        %v2710 = vand.u32 %v2473, 4294901760
        %2711 = vmatpush.msra.mxu0 %v2710
        %v2712 = vand.u32 %v2472, 4294901760
        %2713 = vmatpush.msra.mxu0 %v2712
        %v2714 = vand.u32 %v2471, 4294901760
        %2715 = vmatpush.msra.mxu0 %v2714
        %v2716 = vand.u32 %v2470, 4294901760
        %2717 = vmatpush.msra.mxu0 %v2716
        %v2718 = vand.u32 %v2469, 4294901760
        %v2719 = vsub.f32 %v2469, %v2718
        %v2720 = vand.u32 %v2719, 4294901760
        %2721 = vmatmul.f32.gmra.mxu0 %v2720
        %v2722 = vpop.f32.mrf.mxu0
        %v2723 = vadd.f32 %v2684, %v2722
        %2724 = vdwg.mxu0
        %v2725 = vand.u32 %v2485, 4294901760
        %v2726 = vsub.f32 %v2485, %v2725
        %v2727 = vand.u32 %v2726, 4294901760
        %2728 = vmatpush.msra.mxu0 %v2727
        %v2729 = vand.u32 %v2484, 4294901760
        %v2730 = vsub.f32 %v2484, %v2729
        %v2731 = vand.u32 %v2730, 4294901760
        %2732 = vmatpush.msra.mxu0 %v2731
        %v2733 = vand.u32 %v2483, 4294901760
        %v2734 = vsub.f32 %v2483, %v2733
        %v2735 = vand.u32 %v2734, 4294901760
        %2736 = vmatpush.msra.mxu0 %v2735
        %v2737 = vand.u32 %v2482, 4294901760
        %v2738 = vsub.f32 %v2482, %v2737
        %v2739 = vand.u32 %v2738, 4294901760
        %2740 = vmatpush.msra.mxu0 %v2739
        %v2741 = vand.u32 %v2481, 4294901760
        %v2742 = vsub.f32 %v2481, %v2741
        %v2743 = vand.u32 %v2742, 4294901760
        %2744 = vmatpush.msra.mxu0 %v2743
        %v2745 = vand.u32 %v2480, 4294901760
        %v2746 = vsub.f32 %v2480, %v2745
        %v2747 = vand.u32 %v2746, 4294901760
        %2748 = vmatpush.msra.mxu0 %v2747
        %v2749 = vand.u32 %v2479, 4294901760
        %v2750 = vsub.f32 %v2479, %v2749
        %v2751 = vand.u32 %v2750, 4294901760
        %2752 = vmatpush.msra.mxu0 %v2751
        %v2753 = vand.u32 %v2478, 4294901760
        %v2754 = vsub.f32 %v2478, %v2753
        %v2755 = vand.u32 %v2754, 4294901760
        %2756 = vmatpush.msra.mxu0 %v2755
        %v2757 = vand.u32 %v2477, 4294901760
        %v2758 = vsub.f32 %v2477, %v2757
        %v2759 = vand.u32 %v2758, 4294901760
        %2760 = vmatpush.msra.mxu0 %v2759
        %v2761 = vand.u32 %v2476, 4294901760
        %v2762 = vsub.f32 %v2476, %v2761
        %v2763 = vand.u32 %v2762, 4294901760
        %2764 = vmatpush.msra.mxu0 %v2763
        %v2765 = vand.u32 %v2475, 4294901760
        %v2766 = vsub.f32 %v2475, %v2765
        %v2767 = vand.u32 %v2766, 4294901760
        %2768 = vmatpush.msra.mxu0 %v2767
        %v2769 = vand.u32 %v2474, 4294901760
        %v2770 = vsub.f32 %v2474, %v2769
        %v2771 = vand.u32 %v2770, 4294901760
        %2772 = vmatpush.msra.mxu0 %v2771
        %v2773 = vand.u32 %v2473, 4294901760
        %v2774 = vsub.f32 %v2473, %v2773
        %v2775 = vand.u32 %v2774, 4294901760
        %2776 = vmatpush.msra.mxu0 %v2775
        %v2777 = vand.u32 %v2472, 4294901760
        %v2778 = vsub.f32 %v2472, %v2777
        %v2779 = vand.u32 %v2778, 4294901760
        %2780 = vmatpush.msra.mxu0 %v2779
        %v2781 = vand.u32 %v2471, 4294901760
        %v2782 = vsub.f32 %v2471, %v2781
        %v2783 = vand.u32 %v2782, 4294901760
        %2784 = vmatpush.msra.mxu0 %v2783
        %v2785 = vand.u32 %v2470, 4294901760
        %v2786 = vsub.f32 %v2470, %v2785
        %v2787 = vand.u32 %v2786, 4294901760
        %2788 = vmatpush.msra.mxu0 %v2787
        %v2789 = vand.u32 %v2469, 4294901760
        %2790 = vmatmul.f32.gmra.mxu0 %v2789
        %v2791 = vpop.f32.mrf.mxu0
        %v2792 = vadd.f32 %v2723, %v2791
        %2793 = vdwg.mxu0
        %v2794 = vand.u32 %v2485, 4294901760
        %2795 = vmatpush.msra.mxu0 %v2794
        %v2796 = vand.u32 %v2484, 4294901760
        %2797 = vmatpush.msra.mxu0 %v2796
        %v2798 = vand.u32 %v2483, 4294901760
        %2799 = vmatpush.msra.mxu0 %v2798
        %v2800 = vand.u32 %v2482, 4294901760
        %2801 = vmatpush.msra.mxu0 %v2800
        %v2802 = vand.u32 %v2481, 4294901760
        %2803 = vmatpush.msra.mxu0 %v2802
        %v2804 = vand.u32 %v2480, 4294901760
        %2805 = vmatpush.msra.mxu0 %v2804
        %v2806 = vand.u32 %v2479, 4294901760
        %2807 = vmatpush.msra.mxu0 %v2806
        %v2808 = vand.u32 %v2478, 4294901760
        %2809 = vmatpush.msra.mxu0 %v2808
        %v2810 = vand.u32 %v2477, 4294901760
        %2811 = vmatpush.msra.mxu0 %v2810
        %v2812 = vand.u32 %v2476, 4294901760
        %2813 = vmatpush.msra.mxu0 %v2812
        %v2814 = vand.u32 %v2475, 4294901760
        %2815 = vmatpush.msra.mxu0 %v2814
        %v2816 = vand.u32 %v2474, 4294901760
        %2817 = vmatpush.msra.mxu0 %v2816
        %v2818 = vand.u32 %v2473, 4294901760
        %2819 = vmatpush.msra.mxu0 %v2818
        %v2820 = vand.u32 %v2472, 4294901760
        %2821 = vmatpush.msra.mxu0 %v2820
        %v2822 = vand.u32 %v2471, 4294901760
        %2823 = vmatpush.msra.mxu0 %v2822
        %v2824 = vand.u32 %v2470, 4294901760
        %2825 = vmatpush.msra.mxu0 %v2824
        %v2826 = vand.u32 %v2469, 4294901760
        %2827 = vmatmul.f32.gmra.mxu0 %v2826
        %v2828 = vpop.f32.mrf.mxu0
        %v2829 = vadd.f32 %v2792, %v2828
        %2830 = vdwg.mxu0
        %v2831 = vadd.f32 %v2222, %v2829
        %2832 = vst.msk [vmem:[%s431] sm:$0xff] %vm437, %v2831
        %s2833 = sand.u32 %s313, 1
        %s2834 = scalar_lea.sflag [#allocation4], %s2833
        %s2835 = sand.u32 %s313, 1
        %s2836 = smul.addr %s2835, 8
        %s2837 = scalar_lea.vmem [#allocation3], %s2836
        // Predicated region
        $region73: #{tpu_custom_call.1} parent=71 // pred_check
          %p2838 = pneg %p323
        $region74: #{tpu_custom_call.1} parent=71 // pred_check_branch
          %2840 = sbr.rel (%p2838) target = $region76
        $region75: #{tpu_custom_call.1} parent=71 // pred_region
          %2842 = vsyncadd %s2834, 0
          %s2843 = smul.addr %s27, 8
          %s2844 = scalar_lea.hbm %s13, %s2843
          %s2846 = sshll.u32 %s2837, 4
          %s2847 = int_to_ptr.vmem [resolvable:$true] %s2846
          %s2848 = sshll.u32 %s2844, 4
          %s2849 = int_to_ptr.hbm [resolvable:$true] %s2848
          %2851 = dma.vmem_to_hbm [thread:$0]  %s2847, 128, %s2849, %s2834
        $region76: #{tpu_custom_call.1} parent=71 // pred_fallthru
          _
      $region72: #{tpu_custom_call.1} parent=5 // pred_fallthru
        _
      %p2852 = scmp.le.s32.totalorder 2, %s22
      // Predicated region
      $region77: #{tpu_custom_call.1} parent=5 // pred_check
        %p2853 = pneg %p2852
      $region78: #{tpu_custom_call.1} parent=5 // pred_check_branch
        %2855 = sbr.rel (%p2853) target = $region80
      $region79: #{tpu_custom_call.1} parent=5 // pred_region
        %s2856 = ssub.s32 %s22, 2
        // Predicated region
        $region81: #{tpu_custom_call.1} parent=79 // pred_check
          %p2857 = pneg %p329
        $region82: #{tpu_custom_call.1} parent=79 // pred_check_branch
          %2859 = sbr.rel (%p2857) target = $region84
        $region83: #{tpu_custom_call.1} parent=79 // pred_region
          %s2860 = sand.u32 %s314, 1
          %s2861 = scalar_lea.sflag [#allocation4], %s2860
          %s2862 = sand.u32 %s314, 1
          %s2863 = smul.addr %s2862, 8
          %s2864 = scalar_lea.vmem [#allocation3], %s2863
          %2866 = dma.done %s2861, 128
        $region84: #{tpu_custom_call.1} parent=79 // pred_fallthru
          _
      $region80: #{tpu_custom_call.1} parent=5 // pred_fallthru
        _
    $region6: #{tpu_custom_call.1} parent=1 // loop_footer
      %s26 = sadd.s32 1, %s22
    $region7: #{tpu_custom_call.1} parent=1 // loop_footer_branch
      %21 = sbr.rel target = $region3
    $region8: #{tpu_custom_call.1} parent=1 // loop_exit
      _
    %2867 = vsyncpa [#allocation4], 1
    %s2868 = scalar_lea.sflag [#allocation4], 1
    %2869 = vsyncpa %s2868, 1

</llo_original>
